<compile_context>
chip_gen: v7x
topology: tpu7x:2x2x1
jax: 0.10.0
libtpu: 0.0.40
codegen_flags: <defaults>
</compile_context>

<pallas_src>
import jax
import jax.numpy as jnp
import numpy as np
from jax import lax
from jax.experimental import pallas as pl
from jax.experimental.pallas import tpu as pltpu


def _bilstm_kernel(x_ref, len_ref, w8_ref, b8_ref, whhf_ref, whhb_ref,
                   out_ref, final_ref, gxf_ref, gxb_ref, yf_ref, yb_ref):
    TB, _E = x_ref.shape
    H = whhf_ref.shape[0]
    B = len_ref.shape[0]
    T = TB // B
    lens = len_ref[...]                                   # [B, 1] int32

    # ---- single fused input projection on the MXU (bf16 operands, f32 accumulate) ----------
    gx = jnp.dot(x_ref[...], w8_ref[...],
                 preferred_element_type=jnp.float32) + b8_ref[...]     # [T*B, 8H], rows = (t, b)
    gxf_ref[...] = gx[:, : 4 * H]                         # forward-direction gates (i, f, g, o)
    gxb_ref[...] = gx[:, 4 * H:]                          # backward-direction gates

    def _sigmoid(v):                                      # single EUP push (tanh) per call
        return 0.5 * jnp.tanh(0.5 * v) + 0.5

    def _cell(g, c_prev):                                 # PyTorch gate order: i, f, g, o (f32 math)
        i = _sigmoid(g[:, 0:H])
        f = _sigmoid(g[:, H:2 * H])
        gg = jnp.tanh(g[:, 2 * H:3 * H])
        o = _sigmoid(g[:, 3 * H:4 * H])
        c_new = f * c_prev + i * gg
        return o * jnp.tanh(c_new), c_new

    def body(s, carry):
        h_f, c_f, h_b, c_b = carry
        t_f = s
        t_b = T - 1 - s

        # contiguous leading-axis slices of the time-major gate buffers
        g_f = gxf_ref[pl.ds(t_f * B, B), :] + jnp.dot(
            h_f.astype(jnp.bfloat16), whhf_ref[...], preferred_element_type=jnp.float32)
        g_b = gxb_ref[pl.ds(t_b * B, B), :] + jnp.dot(
            h_b.astype(jnp.bfloat16), whhb_ref[...], preferred_element_type=jnp.float32)

        hf_new, cf_new = _cell(g_f, c_f)
        hb_new, cb_new = _cell(g_b, c_b)

        vf = t_f < lens                                   # [B, 1] bool
        vb = t_b < lens

        yf = jnp.where(vf, hf_new, 0.0)                   # exact zeros at padded positions
        yb = jnp.where(vb, hb_new, 0.0)
        yf_ref[:, pl.ds(t_f, 1), :] = yf[:, None, :]
        yb_ref[:, pl.ds(t_b, 1), :] = yb[:, None, :]

        h_f = jnp.where(vf, hf_new, h_f)
        c_f = jnp.where(vf, cf_new, c_f)
        h_b = jnp.where(vb, hb_new, h_b)
        c_b = jnp.where(vb, cb_new, c_b)
        return (h_f, c_f, h_b, c_b)

    zeros = jnp.zeros((B, H), jnp.float32)
    h_f, _c_f, h_b, _c_b = lax.fori_loop(0, T, body, (zeros, zeros, zeros, zeros), unroll=True)

    # one lane-dense flush of the fused output (single HBM writeback); no wrapper-side concat
    out_ref[...] = jnp.concatenate([yf_ref[...], yb_ref[...]], axis=-1)
    final_ref[...] = jnp.concatenate([h_f, h_b], axis=-1)


def lstm_encoder_forward(x, mask, lengths, params):
    """Mirrors LSTMEncoder.forward(x, mask, lengths) -> (outputs, final)."""
    del mask  # accepted but unused, like the PyTorch module (lengths drive packing)
    B, T, E = x.shape
    H = params["whh_f"].shape[1]
    lens2d = lengths.reshape(B, 1).astype(jnp.int32)

    # Layout plumbing (one fused, tiny XLA copy): time-major rows for the single big matmul,
    # bf16 operands so the MXU runs in native precision (accumulation stays f32 in-kernel).
    x_tm = x.swapaxes(0, 1).reshape(T * B, E).astype(jnp.bfloat16)
    w8 = jnp.concatenate([params["wih_f"].T, params["wih_b"].T], axis=1).astype(jnp.bfloat16)
    b8 = jnp.concatenate([params["bih_f"] + params["bhh_f"],
                          params["bih_b"] + params["bhh_b"]])[None, :].astype(jnp.float32)
    whhf = params["whh_f"].T.astype(jnp.bfloat16)
    whhb = params["whh_b"].T.astype(jnp.bfloat16)

    vspec = pl.BlockSpec(memory_space=pltpu.MemorySpace.VMEM)
    out_shape = (jax.ShapeDtypeStruct((B, T, 2 * H), jnp.float32),   # outputs
                 jax.ShapeDtypeStruct((B, 2 * H), jnp.float32))      # final = cat(hx[-2], hx[-1])

    outputs, final = pl.pallas_call(
        _bilstm_kernel,
        out_shape=out_shape,
        in_specs=[vspec] * 6,
        out_specs=(vspec, vspec),
        scratch_shapes=[
            pltpu.VMEM((T * B, 4 * H), jnp.float32),   # gx, forward direction (time-major)
            pltpu.VMEM((T * B, 4 * H), jnp.float32),   # gx, backward direction (time-major)
            pltpu.VMEM((B, T, H), jnp.float32),        # per-step fwd hidden buffer
            pltpu.VMEM((B, T, H), jnp.float32),        # per-step bwd hidden buffer
        ],
        compiler_params=pltpu.CompilerParams(vmem_limit_bytes=32 * 1024 * 1024),
    )(x_tm, lens2d, w8, b8, whhf, whhb)
    return outputs, final


def init_params(key, in_features, hidden_size):
    """Deterministic synthetic parameters, PyTorch nn.LSTM shapes and init range."""
    H = hidden_size
    k = 1.0 / np.sqrt(H)
    keys = jax.random.split(key, 8)

    def u(kk, shape):
        return jax.random.uniform(kk, shape, jnp.float32, minval=-k, maxval=k)

    return dict(
        wih_f=u(keys[0], (4 * H, in_features)), whh_f=u(keys[1], (4 * H, H)),
        bih_f=u(keys[2], (4 * H,)),             bhh_f=u(keys[3], (4 * H,)),
        wih_b=u(keys[4], (4 * H, in_features)), whh_b=u(keys[5], (4 * H, H)),
        bih_b=u(keys[6], (4 * H,)),             bhh_b=u(keys[7], (4 * H,)),
    )


def reference_forward(x, lengths, params):
    """Pure-JAX f32 reference (masked bidirectional LSTM == packed-sequence semantics)."""
    B, T, E = x.shape
    H = params["whh_f"].shape[1]

    def run(wih, whh, bih, bhh, reverse):
        wih_t, whh_t, bias = wih.T, whh.T, (bih + bhh)[None, :]

        def cell(carry, t):
            h, c = carry
            xt = x[:, t, :]
            g = xt @ wih_t + h @ whh_t + bias
            i = jax.nn.sigmoid(g[:, :H]); f = jax.nn.sigmoid(g[:, H:2 * H])
            gg = jnp.tanh(g[:, 2 * H:3 * H]); o = jax.nn.sigmoid(g[:, 3 * H:])
            c_new = f * c + i * gg
            h_new = o * jnp.tanh(c_new)
            valid = (t < lengths)[:, None].astype(jnp.float32)
            h = valid * h_new + (1.0 - valid) * h
            c = valid * c_new + (1.0 - valid) * c
            return (h, c), valid * h_new

        ts = jnp.arange(T)
        if reverse:
            ts = ts[::-1]
        (h, _), outs = lax.scan(cell, (jnp.zeros((B, H)), jnp.zeros((B, H))), ts)
        outs = jnp.transpose(outs, (1, 0, 2))
        if reverse:
            outs = outs[:, ::-1, :]
        return outs, h

    of, hfin = run(params["wih_f"], params["whh_f"], params["bih_f"], params["bhh_f"], False)
    ob, hbin = run(params["wih_b"], params["whh_b"], params["bih_b"], params["bhh_b"], True)
    return jnp.concatenate([of, ob], axis=-1), jnp.concatenate([hfin, hbin], axis=-1)


if __name__ == "__main__":
    B, T, E, H = 2, 8, 16, 32
    key = jax.random.PRNGKey(0)
    kx, kp = jax.random.split(key)

    x = jax.random.normal(kx, (B, T, E), jnp.float32)
    lengths = jnp.array([T, 5], jnp.int32)  # max(lengths) == T, matching pad_packed_sequence width
    mask = (jnp.arange(T)[None, :] < lengths[:, None]).astype(jnp.int32)
    params = init_params(kp, E, H)

    outputs, final = lstm_encoder_forward(x, mask, lengths, params)
    outputs = jax.block_until_ready(outputs)
    final = jax.block_until_ready(final)

    assert outputs.shape == (B, T, 2 * H)
    assert final.shape == (B, 2 * H)

    ref_out, ref_final = reference_forward(x, lengths, params)
    np.testing.assert_allclose(np.asarray(outputs), np.asarray(ref_out), atol=2e-2, rtol=2e-2)
    np.testing.assert_allclose(np.asarray(final), np.asarray(ref_final), atol=2e-2, rtol=2e-2)
    # padded positions must be exactly zero (pad_packed_sequence semantics)
    assert float(jnp.abs(outputs[1, 5:, :]).max()) == 0.0

    print("KERNEL_OK")
</pallas_src>

<mosaic_0001>
module attributes {stable_mosaic.version = 11 : i64} {
  func.func @_bilstm_kernel(%arg0: memref<16x16xbf16, #tpu.memory_space<vmem>>, %arg1: memref<2x1xi32, #tpu.memory_space<vmem>>, %arg2: memref<16x256xbf16, #tpu.memory_space<vmem>>, %arg3: memref<1x256xf32, #tpu.memory_space<vmem>>, %arg4: memref<32x128xbf16, #tpu.memory_space<vmem>>, %arg5: memref<32x128xbf16, #tpu.memory_space<vmem>>, %arg6: memref<2x8x64xf32, #tpu.memory_space<vmem>>, %arg7: memref<2x64xf32, #tpu.memory_space<vmem>>, %arg8: memref<16x128xf32, #tpu.memory_space<vmem>>, %arg9: memref<16x128xf32, #tpu.memory_space<vmem>>, %arg10: memref<2x8x32xf32, #tpu.memory_space<vmem>>, %arg11: memref<2x8x32xf32, #tpu.memory_space<vmem>>) attributes {dimension_semantics = [], scalar_prefetch = 0 : i64, scratch_operands = 4 : i64, tpu.core_type = #tpu.core_type<tc>} {
    %c0 = arith.constant 0 : index
    %c0_0 = arith.constant 0 : index
    %0 = vector.load %arg1[%c0, %c0_0] : memref<2x1xi32, #tpu.memory_space<vmem>>, vector<2x1xi32>
    %c0_1 = arith.constant 0 : index
    %c0_2 = arith.constant 0 : index
    %1 = vector.load %arg0[%c0_1, %c0_2] : memref<16x16xbf16, #tpu.memory_space<vmem>>, vector<16x16xbf16>
    %c0_3 = arith.constant 0 : index
    %c0_4 = arith.constant 0 : index
    %2 = vector.load %arg2[%c0_3, %c0_4] : memref<16x256xbf16, #tpu.memory_space<vmem>>, vector<16x256xbf16>
    %cst = arith.constant dense<0.000000e+00> : vector<16x256xf32>
    %3 = tpu.matmul %1, %2, %cst {dimension_numbers = #tpu.dot_dimension_numbers<[1], [0], [0], [1], [0, 0, 1, 1], [], []>} : vector<16x16xbf16>, vector<16x256xbf16>, vector<16x256xf32> -> vector<16x256xf32>
    %c0_5 = arith.constant 0 : index
    %c0_6 = arith.constant 0 : index
    %4 = vector.load %arg3[%c0_5, %c0_6] : memref<1x256xf32, #tpu.memory_space<vmem>>, vector<1x256xf32>
    %5 = vector.broadcast %4 : vector<1x256xf32> to vector<16x256xf32>
    %6 = arith.addf %3, %5 : vector<16x256xf32>
    %7 = vector.extract_strided_slice %6 {offsets = [0, 0], sizes = [16, 128], strides = [1, 1]} : vector<16x256xf32> to vector<16x128xf32>
    %c0_7 = arith.constant 0 : index
    %c0_8 = arith.constant 0 : index
    %8 = vector.load %arg8[%c0_7, %c0_8] : memref<16x128xf32, #tpu.memory_space<vmem>>, vector<16x128xf32>
    tpu.vector_store %arg8[%c0_7, %c0_8], %7 {strides = array<i32>} : memref<16x128xf32, #tpu.memory_space<vmem>>, vector<16x128xf32>,
    %9 = vector.extract_strided_slice %6 {offsets = [0, 128], sizes = [16, 128], strides = [1, 1]} : vector<16x256xf32> to vector<16x128xf32>
    %c0_9 = arith.constant 0 : index
    %c0_10 = arith.constant 0 : index
    %10 = vector.load %arg9[%c0_9, %c0_10] : memref<16x128xf32, #tpu.memory_space<vmem>>, vector<16x128xf32>
    tpu.vector_store %arg9[%c0_9, %c0_10], %9 {strides = array<i32>} : memref<16x128xf32, #tpu.memory_space<vmem>>, vector<16x128xf32>,
    %cst_11 = arith.constant 0.000000e+00 : f32
    %11 = vector.broadcast %cst_11 : f32 to vector<2x32xf32>
    %c0_i32 = arith.constant 0 : i32
    %c7_i32 = arith.constant 7 : i32
    %12 = arith.subi %c7_i32, %c0_i32 : i32
    %c2_i32 = arith.constant 2 : i32
    %13 = arith.muli %c0_i32, %c2_i32 : i32
    %14 = arith.index_cast %13 : i32 to index
    %c0_12 = arith.constant 0 : index
    %15 = vector.load %arg8[%14, %c0_12] : memref<16x128xf32, #tpu.memory_space<vmem>>, vector<2x128xf32>
    %16 = arith.truncf %11 : vector<2x32xf32> to vector<2x32xbf16>
    %c0_13 = arith.constant 0 : index
    %c0_14 = arith.constant 0 : index
    %17 = vector.load %arg4[%c0_13, %c0_14] : memref<32x128xbf16, #tpu.memory_space<vmem>>, vector<32x128xbf16>
    %cst_15 = arith.constant dense<0.000000e+00> : vector<2x128xf32>
    %18 = tpu.matmul %16, %17, %cst_15 {dimension_numbers = #tpu.dot_dimension_numbers<[1], [0], [0], [1], [0, 0, 1, 1], [], []>} : vector<2x32xbf16>, vector<32x128xbf16>, vector<2x128xf32> -> vector<2x128xf32>
    %19 = arith.addf %15, %18 : vector<2x128xf32>
    %c2_i32_16 = arith.constant 2 : i32
    %20 = arith.muli %12, %c2_i32_16 : i32
    %21 = arith.index_cast %20 : i32 to index
    %c0_17 = arith.constant 0 : index
    %22 = vector.load %arg9[%21, %c0_17] : memref<16x128xf32, #tpu.memory_space<vmem>>, vector<2x128xf32>
    %23 = arith.truncf %11 : vector<2x32xf32> to vector<2x32xbf16>
    %c0_18 = arith.constant 0 : index
    %c0_19 = arith.constant 0 : index
    %24 = vector.load %arg5[%c0_18, %c0_19] : memref<32x128xbf16, #tpu.memory_space<vmem>>, vector<32x128xbf16>
    %cst_20 = arith.constant dense<0.000000e+00> : vector<2x128xf32>
    %25 = tpu.matmul %23, %24, %cst_20 {dimension_numbers = #tpu.dot_dimension_numbers<[1], [0], [0], [1], [0, 0, 1, 1], [], []>} : vector<2x32xbf16>, vector<32x128xbf16>, vector<2x128xf32> -> vector<2x128xf32>
    %26 = arith.addf %22, %25 : vector<2x128xf32>
    %27 = vector.extract_strided_slice %19 {offsets = [0, 0], sizes = [2, 32], strides = [1, 1]} : vector<2x128xf32> to vector<2x32xf32>
    %cst_21 = arith.constant 5.000000e-01 : f32
    %28 = vector.broadcast %cst_21 : f32 to vector<2x32xf32>
    %29 = arith.mulf %28, %27 : vector<2x32xf32>
    %30 = math.tanh %29 : vector<2x32xf32>
    %cst_22 = arith.constant 5.000000e-01 : f32
    %31 = vector.broadcast %cst_22 : f32 to vector<2x32xf32>
    %32 = arith.mulf %31, %30 : vector<2x32xf32>
    %cst_23 = arith.constant 5.000000e-01 : f32
    %33 = vector.broadcast %cst_23 : f32 to vector<2x32xf32>
    %34 = arith.addf %32, %33 : vector<2x32xf32>
    %35 = vector.extract_strided_slice %19 {offsets = [0, 32], sizes = [2, 32], strides = [1, 1]} : vector<2x128xf32> to vector<2x32xf32>
    %cst_24 = arith.constant 5.000000e-01 : f32
    %36 = vector.broadcast %cst_24 : f32 to vector<2x32xf32>
    %37 = arith.mulf %36, %35 : vector<2x32xf32>
    %38 = math.tanh %37 : vector<2x32xf32>
    %cst_25 = arith.constant 5.000000e-01 : f32
    %39 = vector.broadcast %cst_25 : f32 to vector<2x32xf32>
    %40 = arith.mulf %39, %38 : vector<2x32xf32>
    %cst_26 = arith.constant 5.000000e-01 : f32
    %41 = vector.broadcast %cst_26 : f32 to vector<2x32xf32>
    %42 = arith.addf %40, %41 : vector<2x32xf32>
    %43 = vector.extract_strided_slice %19 {offsets = [0, 64], sizes = [2, 32], strides = [1, 1]} : vector<2x128xf32> to vector<2x32xf32>
    %44 = math.tanh %43 : vector<2x32xf32>
    %45 = vector.extract_strided_slice %19 {offsets = [0, 96], sizes = [2, 32], strides = [1, 1]} : vector<2x128xf32> to vector<2x32xf32>
    %cst_27 = arith.constant 5.000000e-01 : f32
    %46 = vector.broadcast %cst_27 : f32 to vector<2x32xf32>
    %47 = arith.mulf %46, %45 : vector<2x32xf32>
    %48 = math.tanh %47 : vector<2x32xf32>
    %cst_28 = arith.constant 5.000000e-01 : f32
    %49 = vector.broadcast %cst_28 : f32 to vector<2x32xf32>
    %50 = arith.mulf %49, %48 : vector<2x32xf32>
    %cst_29 = arith.constant 5.000000e-01 : f32
    %51 = vector.broadcast %cst_29 : f32 to vector<2x32xf32>
    %52 = arith.addf %50, %51 : vector<2x32xf32>
    %53 = arith.mulf %42, %11 : vector<2x32xf32>
    %54 = arith.mulf %34, %44 : vector<2x32xf32>
    %55 = arith.addf %53, %54 : vector<2x32xf32>
    %56 = math.tanh %55 : vector<2x32xf32>
    %57 = arith.mulf %52, %56 : vector<2x32xf32>
    %58 = vector.extract_strided_slice %26 {offsets = [0, 0], sizes = [2, 32], strides = [1, 1]} : vector<2x128xf32> to vector<2x32xf32>
    %cst_30 = arith.constant 5.000000e-01 : f32
    %59 = vector.broadcast %cst_30 : f32 to vector<2x32xf32>
    %60 = arith.mulf %59, %58 : vector<2x32xf32>
    %61 = math.tanh %60 : vector<2x32xf32>
    %cst_31 = arith.constant 5.000000e-01 : f32
    %62 = vector.broadcast %cst_31 : f32 to vector<2x32xf32>
    %63 = arith.mulf %62, %61 : vector<2x32xf32>
    %cst_32 = arith.constant 5.000000e-01 : f32
    %64 = vector.broadcast %cst_32 : f32 to vector<2x32xf32>
    %65 = arith.addf %63, %64 : vector<2x32xf32>
    %66 = vector.extract_strided_slice %26 {offsets = [0, 32], sizes = [2, 32], strides = [1, 1]} : vector<2x128xf32> to vector<2x32xf32>
    %cst_33 = arith.constant 5.000000e-01 : f32
    %67 = vector.broadcast %cst_33 : f32 to vector<2x32xf32>
    %68 = arith.mulf %67, %66 : vector<2x32xf32>
    %69 = math.tanh %68 : vector<2x32xf32>
    %cst_34 = arith.constant 5.000000e-01 : f32
    %70 = vector.broadcast %cst_34 : f32 to vector<2x32xf32>
    %71 = arith.mulf %70, %69 : vector<2x32xf32>
    %cst_35 = arith.constant 5.000000e-01 : f32
    %72 = vector.broadcast %cst_35 : f32 to vector<2x32xf32>
    %73 = arith.addf %71, %72 : vector<2x32xf32>
    %74 = vector.extract_strided_slice %26 {offsets = [0, 64], sizes = [2, 32], strides = [1, 1]} : vector<2x128xf32> to vector<2x32xf32>
    %75 = math.tanh %74 : vector<2x32xf32>
    %76 = vector.extract_strided_slice %26 {offsets = [0, 96], sizes = [2, 32], strides = [1, 1]} : vector<2x128xf32> to vector<2x32xf32>
    %cst_36 = arith.constant 5.000000e-01 : f32
    %77 = vector.broadcast %cst_36 : f32 to vector<2x32xf32>
    %78 = arith.mulf %77, %76 : vector<2x32xf32>
    %79 = math.tanh %78 : vector<2x32xf32>
    %cst_37 = arith.constant 5.000000e-01 : f32
    %80 = vector.broadcast %cst_37 : f32 to vector<2x32xf32>
    %81 = arith.mulf %80, %79 : vector<2x32xf32>
    %cst_38 = arith.constant 5.000000e-01 : f32
    %82 = vector.broadcast %cst_38 : f32 to vector<2x32xf32>
    %83 = arith.addf %81, %82 : vector<2x32xf32>
    %84 = arith.mulf %73, %11 : vector<2x32xf32>
    %85 = arith.mulf %65, %75 : vector<2x32xf32>
    %86 = arith.addf %84, %85 : vector<2x32xf32>
    %87 = math.tanh %86 : vector<2x32xf32>
    %88 = arith.mulf %83, %87 : vector<2x32xf32>
    %89 = vector.broadcast %c0_i32 : i32 to vector<2x1xi32>
    %90 = arith.cmpi slt, %89, %0 : vector<2x1xi32>
    %91 = vector.broadcast %12 : i32 to vector<2x1xi32>
    %92 = arith.cmpi slt, %91, %0 : vector<2x1xi32>
    %cst_39 = arith.constant 0.000000e+00 : f32
    %93 = vector.shape_cast %90 : vector<2x1xi1> to vector<2x1xi1>
    %94 = vector.broadcast %93 : vector<2x1xi1> to vector<2x32xi1>
    %95 = vector.broadcast %cst_39 : f32 to vector<2x32xf32>
    %96 = arith.select %94, %57, %95 : vector<2x32xi1>, vector<2x32xf32>
    %cst_40 = arith.constant 0.000000e+00 : f32
    %97 = vector.shape_cast %92 : vector<2x1xi1> to vector<2x1xi1>
    %98 = vector.broadcast %97 : vector<2x1xi1> to vector<2x32xi1>
    %99 = vector.broadcast %cst_40 : f32 to vector<2x32xf32>
    %100 = arith.select %98, %88, %99 : vector<2x32xi1>, vector<2x32xf32>
    %101 = vector.shape_cast %96 : vector<2x32xf32> to vector<2x1x32xf32>
    %c0_41 = arith.constant 0 : index
    %102 = arith.index_cast %c0_i32 : i32 to index
    %c0_42 = arith.constant 0 : index
    %103 = vector.load %arg10[%c0_41, %102, %c0_42] : memref<2x8x32xf32, #tpu.memory_space<vmem>>, vector<2x1x32xf32>
    tpu.vector_store %arg10[%c0_41, %102, %c0_42], %101 {strides = array<i32>} : memref<2x8x32xf32, #tpu.memory_space<vmem>>, vector<2x1x32xf32>,
    %104 = vector.shape_cast %100 : vector<2x32xf32> to vector<2x1x32xf32>
    %c0_43 = arith.constant 0 : index
    %105 = arith.index_cast %12 : i32 to index
    %c0_44 = arith.constant 0 : index
    %106 = vector.load %arg11[%c0_43, %105, %c0_44] : memref<2x8x32xf32, #tpu.memory_space<vmem>>, vector<2x1x32xf32>
    tpu.vector_store %arg11[%c0_43, %105, %c0_44], %104 {strides = array<i32>} : memref<2x8x32xf32, #tpu.memory_space<vmem>>, vector<2x1x32xf32>,
    %107 = vector.shape_cast %90 : vector<2x1xi1> to vector<2x1xi1>
    %108 = vector.broadcast %107 : vector<2x1xi1> to vector<2x32xi1>
    %109 = arith.select %108, %57, %11 : vector<2x32xi1>, vector<2x32xf32>
    %110 = vector.shape_cast %90 : vector<2x1xi1> to vector<2x1xi1>
    %111 = vector.broadcast %110 : vector<2x1xi1> to vector<2x32xi1>
    %112 = arith.select %111, %55, %11 : vector<2x32xi1>, vector<2x32xf32>
    %113 = vector.shape_cast %92 : vector<2x1xi1> to vector<2x1xi1>
    %114 = vector.broadcast %113 : vector<2x1xi1> to vector<2x32xi1>
    %115 = arith.select %114, %88, %11 : vector<2x32xi1>, vector<2x32xf32>
    %116 = vector.shape_cast %92 : vector<2x1xi1> to vector<2x1xi1>
    %117 = vector.broadcast %116 : vector<2x1xi1> to vector<2x32xi1>
    %118 = arith.select %117, %86, %11 : vector<2x32xi1>, vector<2x32xf32>
    %c1_i32 = arith.constant 1 : i32
    %c7_i32_45 = arith.constant 7 : i32
    %119 = arith.subi %c7_i32_45, %c1_i32 : i32
    %c2_i32_46 = arith.constant 2 : i32
    %120 = arith.muli %c1_i32, %c2_i32_46 : i32
    %121 = arith.index_cast %120 : i32 to index
    %c0_47 = arith.constant 0 : index
    %122 = vector.load %arg8[%121, %c0_47] : memref<16x128xf32, #tpu.memory_space<vmem>>, vector<2x128xf32>
    %123 = arith.truncf %109 : vector<2x32xf32> to vector<2x32xbf16>
    %c0_48 = arith.constant 0 : index
    %c0_49 = arith.constant 0 : index
    %124 = vector.load %arg4[%c0_48, %c0_49] : memref<32x128xbf16, #tpu.memory_space<vmem>>, vector<32x128xbf16>
    %cst_50 = arith.constant dense<0.000000e+00> : vector<2x128xf32>
    %125 = tpu.matmul %123, %124, %cst_50 {dimension_numbers = #tpu.dot_dimension_numbers<[1], [0], [0], [1], [0, 0, 1, 1], [], []>} : vector<2x32xbf16>, vector<32x128xbf16>, vector<2x128xf32> -> vector<2x128xf32>
    %126 = arith.addf %122, %125 : vector<2x128xf32>
    %c2_i32_51 = arith.constant 2 : i32
    %127 = arith.muli %119, %c2_i32_51 : i32
    %128 = arith.index_cast %127 : i32 to index
    %c0_52 = arith.constant 0 : index
    %129 = vector.load %arg9[%128, %c0_52] : memref<16x128xf32, #tpu.memory_space<vmem>>, vector<2x128xf32>
    %130 = arith.truncf %115 : vector<2x32xf32> to vector<2x32xbf16>
    %c0_53 = arith.constant 0 : index
    %c0_54 = arith.constant 0 : index
    %131 = vector.load %arg5[%c0_53, %c0_54] : memref<32x128xbf16, #tpu.memory_space<vmem>>, vector<32x128xbf16>
    %cst_55 = arith.constant dense<0.000000e+00> : vector<2x128xf32>
    %132 = tpu.matmul %130, %131, %cst_55 {dimension_numbers = #tpu.dot_dimension_numbers<[1], [0], [0], [1], [0, 0, 1, 1], [], []>} : vector<2x32xbf16>, vector<32x128xbf16>, vector<2x128xf32> -> vector<2x128xf32>
    %133 = arith.addf %129, %132 : vector<2x128xf32>
    %134 = vector.extract_strided_slice %126 {offsets = [0, 0], sizes = [2, 32], strides = [1, 1]} : vector<2x128xf32> to vector<2x32xf32>
    %cst_56 = arith.constant 5.000000e-01 : f32
    %135 = vector.broadcast %cst_56 : f32 to vector<2x32xf32>
    %136 = arith.mulf %135, %134 : vector<2x32xf32>
    %137 = math.tanh %136 : vector<2x32xf32>
    %cst_57 = arith.constant 5.000000e-01 : f32
    %138 = vector.broadcast %cst_57 : f32 to vector<2x32xf32>
    %139 = arith.mulf %138, %137 : vector<2x32xf32>
    %cst_58 = arith.constant 5.000000e-01 : f32
    %140 = vector.broadcast %cst_58 : f32 to vector<2x32xf32>
    %141 = arith.addf %139, %140 : vector<2x32xf32>
    %142 = vector.extract_strided_slice %126 {offsets = [0, 32], sizes = [2, 32], strides = [1, 1]} : vector<2x128xf32> to vector<2x32xf32>
    %cst_59 = arith.constant 5.000000e-01 : f32
    %143 = vector.broadcast %cst_59 : f32 to vector<2x32xf32>
    %144 = arith.mulf %143, %142 : vector<2x32xf32>
    %145 = math.tanh %144 : vector<2x32xf32>
    %cst_60 = arith.constant 5.000000e-01 : f32
    %146 = vector.broadcast %cst_60 : f32 to vector<2x32xf32>
    %147 = arith.mulf %146, %145 : vector<2x32xf32>
    %cst_61 = arith.constant 5.000000e-01 : f32
    %148 = vector.broadcast %cst_61 : f32 to vector<2x32xf32>
    %149 = arith.addf %147, %148 : vector<2x32xf32>
    %150 = vector.extract_strided_slice %126 {offsets = [0, 64], sizes = [2, 32], strides = [1, 1]} : vector<2x128xf32> to vector<2x32xf32>
    %151 = math.tanh %150 : vector<2x32xf32>
    %152 = vector.extract_strided_slice %126 {offsets = [0, 96], sizes = [2, 32], strides = [1, 1]} : vector<2x128xf32> to vector<2x32xf32>
    %cst_62 = arith.constant 5.000000e-01 : f32
    %153 = vector.broadcast %cst_62 : f32 to vector<2x32xf32>
    %154 = arith.mulf %153, %152 : vector<2x32xf32>
    %155 = math.tanh %154 : vector<2x32xf32>
    %cst_63 = arith.constant 5.000000e-01 : f32
    %156 = vector.broadcast %cst_63 : f32 to vector<2x32xf32>
    %157 = arith.mulf %156, %155 : vector<2x32xf32>
    %cst_64 = arith.constant 5.000000e-01 : f32
    %158 = vector.broadcast %cst_64 : f32 to vector<2x32xf32>
    %159 = arith.addf %157, %158 : vector<2x32xf32>
    %160 = arith.mulf %149, %112 : vector<2x32xf32>
    %161 = arith.mulf %141, %151 : vector<2x32xf32>
    %162 = arith.addf %160, %161 : vector<2x32xf32>
    %163 = math.tanh %162 : vector<2x32xf32>
    %164 = arith.mulf %159, %163 : vector<2x32xf32>
    %165 = vector.extract_strided_slice %133 {offsets = [0, 0], sizes = [2, 32], strides = [1, 1]} : vector<2x128xf32> to vector<2x32xf32>
    %cst_65 = arith.constant 5.000000e-01 : f32
    %166 = vector.broadcast %cst_65 : f32 to vector<2x32xf32>
    %167 = arith.mulf %166, %165 : vector<2x32xf32>
    %168 = math.tanh %167 : vector<2x32xf32>
    %cst_66 = arith.constant 5.000000e-01 : f32
    %169 = vector.broadcast %cst_66 : f32 to vector<2x32xf32>
    %170 = arith.mulf %169, %168 : vector<2x32xf32>
    %cst_67 = arith.constant 5.000000e-01 : f32
    %171 = vector.broadcast %cst_67 : f32 to vector<2x32xf32>
    %172 = arith.addf %170, %171 : vector<2x32xf32>
    %173 = vector.extract_strided_slice %133 {offsets = [0, 32], sizes = [2, 32], strides = [1, 1]} : vector<2x128xf32> to vector<2x32xf32>
    %cst_68 = arith.constant 5.000000e-01 : f32
    %174 = vector.broadcast %cst_68 : f32 to vector<2x32xf32>
    %175 = arith.mulf %174, %173 : vector<2x32xf32>
    %176 = math.tanh %175 : vector<2x32xf32>
    %cst_69 = arith.constant 5.000000e-01 : f32
    %177 = vector.broadcast %cst_69 : f32 to vector<2x32xf32>
    %178 = arith.mulf %177, %176 : vector<2x32xf32>
    %cst_70 = arith.constant 5.000000e-01 : f32
    %179 = vector.broadcast %cst_70 : f32 to vector<2x32xf32>
    %180 = arith.addf %178, %179 : vector<2x32xf32>
    %181 = vector.extract_strided_slice %133 {offsets = [0, 64], sizes = [2, 32], strides = [1, 1]} : vector<2x128xf32> to vector<2x32xf32>
    %182 = math.tanh %181 : vector<2x32xf32>
    %183 = vector.extract_strided_slice %133 {offsets = [0, 96], sizes = [2, 32], strides = [1, 1]} : vector<2x128xf32> to vector<2x32xf32>
    %cst_71 = arith.constant 5.000000e-01 : f32
    %184 = vector.broadcast %cst_71 : f32 to vector<2x32xf32>
    %185 = arith.mulf %184, %183 : vector<2x32xf32>
    %186 = math.tanh %185 : vector<2x32xf32>
    %cst_72 = arith.constant 5.000000e-01 : f32
    %187 = vector.broadcast %cst_72 : f32 to vector<2x32xf32>
    %188 = arith.mulf %187, %186 : vector<2x32xf32>
    %cst_73 = arith.constant 5.000000e-01 : f32
    %189 = vector.broadcast %cst_73 : f32 to vector<2x32xf32>
    %190 = arith.addf %188, %189 : vector<2x32xf32>
    %191 = arith.mulf %180, %118 : vector<2x32xf32>
    %192 = arith.mulf %172, %182 : vector<2x32xf32>
    %193 = arith.addf %191, %192 : vector<2x32xf32>
    %194 = math.tanh %193 : vector<2x32xf32>
    %195 = arith.mulf %190, %194 : vector<2x32xf32>
    %196 = vector.broadcast %c1_i32 : i32 to vector<2x1xi32>
    %197 = arith.cmpi slt, %196, %0 : vector<2x1xi32>
    %198 = vector.broadcast %119 : i32 to vector<2x1xi32>
    %199 = arith.cmpi slt, %198, %0 : vector<2x1xi32>
    %cst_74 = arith.constant 0.000000e+00 : f32
    %200 = vector.shape_cast %197 : vector<2x1xi1> to vector<2x1xi1>
    %201 = vector.broadcast %200 : vector<2x1xi1> to vector<2x32xi1>
    %202 = vector.broadcast %cst_74 : f32 to vector<2x32xf32>
    %203 = arith.select %201, %164, %202 : vector<2x32xi1>, vector<2x32xf32>
    %cst_75 = arith.constant 0.000000e+00 : f32
    %204 = vector.shape_cast %199 : vector<2x1xi1> to vector<2x1xi1>
    %205 = vector.broadcast %204 : vector<2x1xi1> to vector<2x32xi1>
    %206 = vector.broadcast %cst_75 : f32 to vector<2x32xf32>
    %207 = arith.select %205, %195, %206 : vector<2x32xi1>, vector<2x32xf32>
    %208 = vector.shape_cast %203 : vector<2x32xf32> to vector<2x1x32xf32>
    %c0_76 = arith.constant 0 : index
    %209 = arith.index_cast %c1_i32 : i32 to index
    %c0_77 = arith.constant 0 : index
    %210 = vector.load %arg10[%c0_76, %209, %c0_77] : memref<2x8x32xf32, #tpu.memory_space<vmem>>, vector<2x1x32xf32>
    tpu.vector_store %arg10[%c0_76, %209, %c0_77], %208 {strides = array<i32>} : memref<2x8x32xf32, #tpu.memory_space<vmem>>, vector<2x1x32xf32>,
    %211 = vector.shape_cast %207 : vector<2x32xf32> to vector<2x1x32xf32>
    %c0_78 = arith.constant 0 : index
    %212 = arith.index_cast %119 : i32 to index
    %c0_79 = arith.constant 0 : index
    %213 = vector.load %arg11[%c0_78, %212, %c0_79] : memref<2x8x32xf32, #tpu.memory_space<vmem>>, vector<2x1x32xf32>
    tpu.vector_store %arg11[%c0_78, %212, %c0_79], %211 {strides = array<i32>} : memref<2x8x32xf32, #tpu.memory_space<vmem>>, vector<2x1x32xf32>,
    %214 = vector.shape_cast %197 : vector<2x1xi1> to vector<2x1xi1>
    %215 = vector.broadcast %214 : vector<2x1xi1> to vector<2x32xi1>
    %216 = arith.select %215, %164, %109 : vector<2x32xi1>, vector<2x32xf32>
    %217 = vector.shape_cast %197 : vector<2x1xi1> to vector<2x1xi1>
    %218 = vector.broadcast %217 : vector<2x1xi1> to vector<2x32xi1>
    %219 = arith.select %218, %162, %112 : vector<2x32xi1>, vector<2x32xf32>
    %220 = vector.shape_cast %199 : vector<2x1xi1> to vector<2x1xi1>
    %221 = vector.broadcast %220 : vector<2x1xi1> to vector<2x32xi1>
    %222 = arith.select %221, %195, %115 : vector<2x32xi1>, vector<2x32xf32>
    %223 = vector.shape_cast %199 : vector<2x1xi1> to vector<2x1xi1>
    %224 = vector.broadcast %223 : vector<2x1xi1> to vector<2x32xi1>
    %225 = arith.select %224, %193, %118 : vector<2x32xi1>, vector<2x32xf32>
    %c2_i32_80 = arith.constant 2 : i32
    %c7_i32_81 = arith.constant 7 : i32
    %226 = arith.subi %c7_i32_81, %c2_i32_80 : i32
    %c2_i32_82 = arith.constant 2 : i32
    %227 = arith.muli %c2_i32_80, %c2_i32_82 : i32
    %228 = arith.index_cast %227 : i32 to index
    %c0_83 = arith.constant 0 : index
    %229 = vector.load %arg8[%228, %c0_83] : memref<16x128xf32, #tpu.memory_space<vmem>>, vector<2x128xf32>
    %230 = arith.truncf %216 : vector<2x32xf32> to vector<2x32xbf16>
    %c0_84 = arith.constant 0 : index
    %c0_85 = arith.constant 0 : index
    %231 = vector.load %arg4[%c0_84, %c0_85] : memref<32x128xbf16, #tpu.memory_space<vmem>>, vector<32x128xbf16>
    %cst_86 = arith.constant dense<0.000000e+00> : vector<2x128xf32>
    %232 = tpu.matmul %230, %231, %cst_86 {dimension_numbers = #tpu.dot_dimension_numbers<[1], [0], [0], [1], [0, 0, 1, 1], [], []>} : vector<2x32xbf16>, vector<32x128xbf16>, vector<2x128xf32> -> vector<2x128xf32>
    %233 = arith.addf %229, %232 : vector<2x128xf32>
    %c2_i32_87 = arith.constant 2 : i32
    %234 = arith.muli %226, %c2_i32_87 : i32
    %235 = arith.index_cast %234 : i32 to index
    %c0_88 = arith.constant 0 : index
    %236 = vector.load %arg9[%235, %c0_88] : memref<16x128xf32, #tpu.memory_space<vmem>>, vector<2x128xf32>
    %237 = arith.truncf %222 : vector<2x32xf32> to vector<2x32xbf16>
    %c0_89 = arith.constant 0 : index
    %c0_90 = arith.constant 0 : index
    %238 = vector.load %arg5[%c0_89, %c0_90] : memref<32x128xbf16, #tpu.memory_space<vmem>>, vector<32x128xbf16>
    %cst_91 = arith.constant dense<0.000000e+00> : vector<2x128xf32>
    %239 = tpu.matmul %237, %238, %cst_91 {dimension_numbers = #tpu.dot_dimension_numbers<[1], [0], [0], [1], [0, 0, 1, 1], [], []>} : vector<2x32xbf16>, vector<32x128xbf16>, vector<2x128xf32> -> vector<2x128xf32>
    %240 = arith.addf %236, %239 : vector<2x128xf32>
    %241 = vector.extract_strided_slice %233 {offsets = [0, 0], sizes = [2, 32], strides = [1, 1]} : vector<2x128xf32> to vector<2x32xf32>
    %cst_92 = arith.constant 5.000000e-01 : f32
    %242 = vector.broadcast %cst_92 : f32 to vector<2x32xf32>
    %243 = arith.mulf %242, %241 : vector<2x32xf32>
    %244 = math.tanh %243 : vector<2x32xf32>
    %cst_93 = arith.constant 5.000000e-01 : f32
    %245 = vector.broadcast %cst_93 : f32 to vector<2x32xf32>
    %246 = arith.mulf %245, %244 : vector<2x32xf32>
    %cst_94 = arith.constant 5.000000e-01 : f32
    %247 = vector.broadcast %cst_94 : f32 to vector<2x32xf32>
    %248 = arith.addf %246, %247 : vector<2x32xf32>
    %249 = vector.extract_strided_slice %233 {offsets = [0, 32], sizes = [2, 32], strides = [1, 1]} : vector<2x128xf32> to vector<2x32xf32>
    %cst_95 = arith.constant 5.000000e-01 : f32
    %250 = vector.broadcast %cst_95 : f32 to vector<2x32xf32>
    %251 = arith.mulf %250, %249 : vector<2x32xf32>
    %252 = math.tanh %251 : vector<2x32xf32>
    %cst_96 = arith.constant 5.000000e-01 : f32
    %253 = vector.broadcast %cst_96 : f32 to vector<2x32xf32>
    %254 = arith.mulf %253, %252 : vector<2x32xf32>
    %cst_97 = arith.constant 5.000000e-01 : f32
    %255 = vector.broadcast %cst_97 : f32 to vector<2x32xf32>
    %256 = arith.addf %254, %255 : vector<2x32xf32>
    %257 = vector.extract_strided_slice %233 {offsets = [0, 64], sizes = [2, 32], strides = [1, 1]} : vector<2x128xf32> to vector<2x32xf32>
    %258 = math.tanh %257 : vector<2x32xf32>
    %259 = vector.extract_strided_slice %233 {offsets = [0, 96], sizes = [2, 32], strides = [1, 1]} : vector<2x128xf32> to vector<2x32xf32>
    %cst_98 = arith.constant 5.000000e-01 : f32
    %260 = vector.broadcast %cst_98 : f32 to vector<2x32xf32>
    %261 = arith.mulf %260, %259 : vector<2x32xf32>
    %262 = math.tanh %261 : vector<2x32xf32>
    %cst_99 = arith.constant 5.000000e-01 : f32
    %263 = vector.broadcast %cst_99 : f32 to vector<2x32xf32>
    %264 = arith.mulf %263, %262 : vector<2x32xf32>
    %cst_100 = arith.constant 5.000000e-01 : f32
    %265 = vector.broadcast %cst_100 : f32 to vector<2x32xf32>
    %266 = arith.addf %264, %265 : vector<2x32xf32>
    %267 = arith.mulf %256, %219 : vector<2x32xf32>
    %268 = arith.mulf %248, %258 : vector<2x32xf32>
    %269 = arith.addf %267, %268 : vector<2x32xf32>
    %270 = math.tanh %269 : vector<2x32xf32>
    %271 = arith.mulf %266, %270 : vector<2x32xf32>
    %272 = vector.extract_strided_slice %240 {offsets = [0, 0], sizes = [2, 32], strides = [1, 1]} : vector<2x128xf32> to vector<2x32xf32>
    %cst_101 = arith.constant 5.000000e-01 : f32
    %273 = vector.broadcast %cst_101 : f32 to vector<2x32xf32>
    %274 = arith.mulf %273, %272 : vector<2x32xf32>
    %275 = math.tanh %274 : vector<2x32xf32>
    %cst_102 = arith.constant 5.000000e-01 : f32
    %276 = vector.broadcast %cst_102 : f32 to vector<2x32xf32>
    %277 = arith.mulf %276, %275 : vector<2x32xf32>
    %cst_103 = arith.constant 5.000000e-01 : f32
    %278 = vector.broadcast %cst_103 : f32 to vector<2x32xf32>
    %279 = arith.addf %277, %278 : vector<2x32xf32>
    %280 = vector.extract_strided_slice %240 {offsets = [0, 32], sizes = [2, 32], strides = [1, 1]} : vector<2x128xf32> to vector<2x32xf32>
    %cst_104 = arith.constant 5.000000e-01 : f32
    %281 = vector.broadcast %cst_104 : f32 to vector<2x32xf32>
    %282 = arith.mulf %281, %280 : vector<2x32xf32>
    %283 = math.tanh %282 : vector<2x32xf32>
    %cst_105 = arith.constant 5.000000e-01 : f32
    %284 = vector.broadcast %cst_105 : f32 to vector<2x32xf32>
    %285 = arith.mulf %284, %283 : vector<2x32xf32>
    %cst_106 = arith.constant 5.000000e-01 : f32
    %286 = vector.broadcast %cst_106 : f32 to vector<2x32xf32>
    %287 = arith.addf %285, %286 : vector<2x32xf32>
    %288 = vector.extract_strided_slice %240 {offsets = [0, 64], sizes = [2, 32], strides = [1, 1]} : vector<2x128xf32> to vector<2x32xf32>
    %289 = math.tanh %288 : vector<2x32xf32>
    %290 = vector.extract_strided_slice %240 {offsets = [0, 96], sizes = [2, 32], strides = [1, 1]} : vector<2x128xf32> to vector<2x32xf32>
    %cst_107 = arith.constant 5.000000e-01 : f32
    %291 = vector.broadcast %cst_107 : f32 to vector<2x32xf32>
    %292 = arith.mulf %291, %290 : vector<2x32xf32>
    %293 = math.tanh %292 : vector<2x32xf32>
    %cst_108 = arith.constant 5.000000e-01 : f32
    %294 = vector.broadcast %cst_108 : f32 to vector<2x32xf32>
    %295 = arith.mulf %294, %293 : vector<2x32xf32>
    %cst_109 = arith.constant 5.000000e-01 : f32
    %296 = vector.broadcast %cst_109 : f32 to vector<2x32xf32>
    %297 = arith.addf %295, %296 : vector<2x32xf32>
    %298 = arith.mulf %287, %225 : vector<2x32xf32>
    %299 = arith.mulf %279, %289 : vector<2x32xf32>
    %300 = arith.addf %298, %299 : vector<2x32xf32>
    %301 = math.tanh %300 : vector<2x32xf32>
    %302 = arith.mulf %297, %301 : vector<2x32xf32>
    %303 = vector.broadcast %c2_i32_80 : i32 to vector<2x1xi32>
    %304 = arith.cmpi slt, %303, %0 : vector<2x1xi32>
    %305 = vector.broadcast %226 : i32 to vector<2x1xi32>
    %306 = arith.cmpi slt, %305, %0 : vector<2x1xi32>
    %cst_110 = arith.constant 0.000000e+00 : f32
    %307 = vector.shape_cast %304 : vector<2x1xi1> to vector<2x1xi1>
    %308 = vector.broadcast %307 : vector<2x1xi1> to vector<2x32xi1>
    %309 = vector.broadcast %cst_110 : f32 to vector<2x32xf32>
    %310 = arith.select %308, %271, %309 : vector<2x32xi1>, vector<2x32xf32>
    %cst_111 = arith.constant 0.000000e+00 : f32
    %311 = vector.shape_cast %306 : vector<2x1xi1> to vector<2x1xi1>
    %312 = vector.broadcast %311 : vector<2x1xi1> to vector<2x32xi1>
    %313 = vector.broadcast %cst_111 : f32 to vector<2x32xf32>
    %314 = arith.select %312, %302, %313 : vector<2x32xi1>, vector<2x32xf32>
    %315 = vector.shape_cast %310 : vector<2x32xf32> to vector<2x1x32xf32>
    %c0_112 = arith.constant 0 : index
    %316 = arith.index_cast %c2_i32_80 : i32 to index
    %c0_113 = arith.constant 0 : index
    %317 = vector.load %arg10[%c0_112, %316, %c0_113] : memref<2x8x32xf32, #tpu.memory_space<vmem>>, vector<2x1x32xf32>
    tpu.vector_store %arg10[%c0_112, %316, %c0_113], %315 {strides = array<i32>} : memref<2x8x32xf32, #tpu.memory_space<vmem>>, vector<2x1x32xf32>,
    %318 = vector.shape_cast %314 : vector<2x32xf32> to vector<2x1x32xf32>
    %c0_114 = arith.constant 0 : index
    %319 = arith.index_cast %226 : i32 to index
    %c0_115 = arith.constant 0 : index
    %320 = vector.load %arg11[%c0_114, %319, %c0_115] : memref<2x8x32xf32, #tpu.memory_space<vmem>>, vector<2x1x32xf32>
    tpu.vector_store %arg11[%c0_114, %319, %c0_115], %318 {strides = array<i32>} : memref<2x8x32xf32, #tpu.memory_space<vmem>>, vector<2x1x32xf32>,
    %321 = vector.shape_cast %304 : vector<2x1xi1> to vector<2x1xi1>
    %322 = vector.broadcast %321 : vector<2x1xi1> to vector<2x32xi1>
    %323 = arith.select %322, %271, %216 : vector<2x32xi1>, vector<2x32xf32>
    %324 = vector.shape_cast %304 : vector<2x1xi1> to vector<2x1xi1>
    %325 = vector.broadcast %324 : vector<2x1xi1> to vector<2x32xi1>
    %326 = arith.select %325, %269, %219 : vector<2x32xi1>, vector<2x32xf32>
    %327 = vector.shape_cast %306 : vector<2x1xi1> to vector<2x1xi1>
    %328 = vector.broadcast %327 : vector<2x1xi1> to vector<2x32xi1>
    %329 = arith.select %328, %302, %222 : vector<2x32xi1>, vector<2x32xf32>
    %330 = vector.shape_cast %306 : vector<2x1xi1> to vector<2x1xi1>
    %331 = vector.broadcast %330 : vector<2x1xi1> to vector<2x32xi1>
    %332 = arith.select %331, %300, %225 : vector<2x32xi1>, vector<2x32xf32>
    %c3_i32 = arith.constant 3 : i32
    %c7_i32_116 = arith.constant 7 : i32
    %333 = arith.subi %c7_i32_116, %c3_i32 : i32
    %c2_i32_117 = arith.constant 2 : i32
    %334 = arith.muli %c3_i32, %c2_i32_117 : i32
    %335 = arith.index_cast %334 : i32 to index
    %c0_118 = arith.constant 0 : index
    %336 = vector.load %arg8[%335, %c0_118] : memref<16x128xf32, #tpu.memory_space<vmem>>, vector<2x128xf32>
    %337 = arith.truncf %323 : vector<2x32xf32> to vector<2x32xbf16>
    %c0_119 = arith.constant 0 : index
    %c0_120 = arith.constant 0 : index
    %338 = vector.load %arg4[%c0_119, %c0_120] : memref<32x128xbf16, #tpu.memory_space<vmem>>, vector<32x128xbf16>
    %cst_121 = arith.constant dense<0.000000e+00> : vector<2x128xf32>
    %339 = tpu.matmul %337, %338, %cst_121 {dimension_numbers = #tpu.dot_dimension_numbers<[1], [0], [0], [1], [0, 0, 1, 1], [], []>} : vector<2x32xbf16>, vector<32x128xbf16>, vector<2x128xf32> -> vector<2x128xf32>
    %340 = arith.addf %336, %339 : vector<2x128xf32>
    %c2_i32_122 = arith.constant 2 : i32
    %341 = arith.muli %333, %c2_i32_122 : i32
    %342 = arith.index_cast %341 : i32 to index
    %c0_123 = arith.constant 0 : index
    %343 = vector.load %arg9[%342, %c0_123] : memref<16x128xf32, #tpu.memory_space<vmem>>, vector<2x128xf32>
    %344 = arith.truncf %329 : vector<2x32xf32> to vector<2x32xbf16>
    %c0_124 = arith.constant 0 : index
    %c0_125 = arith.constant 0 : index
    %345 = vector.load %arg5[%c0_124, %c0_125] : memref<32x128xbf16, #tpu.memory_space<vmem>>, vector<32x128xbf16>
    %cst_126 = arith.constant dense<0.000000e+00> : vector<2x128xf32>
    %346 = tpu.matmul %344, %345, %cst_126 {dimension_numbers = #tpu.dot_dimension_numbers<[1], [0], [0], [1], [0, 0, 1, 1], [], []>} : vector<2x32xbf16>, vector<32x128xbf16>, vector<2x128xf32> -> vector<2x128xf32>
    %347 = arith.addf %343, %346 : vector<2x128xf32>
    %348 = vector.extract_strided_slice %340 {offsets = [0, 0], sizes = [2, 32], strides = [1, 1]} : vector<2x128xf32> to vector<2x32xf32>
    %cst_127 = arith.constant 5.000000e-01 : f32
    %349 = vector.broadcast %cst_127 : f32 to vector<2x32xf32>
    %350 = arith.mulf %349, %348 : vector<2x32xf32>
    %351 = math.tanh %350 : vector<2x32xf32>
    %cst_128 = arith.constant 5.000000e-01 : f32
    %352 = vector.broadcast %cst_128 : f32 to vector<2x32xf32>
    %353 = arith.mulf %352, %351 : vector<2x32xf32>
    %cst_129 = arith.constant 5.000000e-01 : f32
    %354 = vector.broadcast %cst_129 : f32 to vector<2x32xf32>
    %355 = arith.addf %353, %354 : vector<2x32xf32>
    %356 = vector.extract_strided_slice %340 {offsets = [0, 32], sizes = [2, 32], strides = [1, 1]} : vector<2x128xf32> to vector<2x32xf32>
    %cst_130 = arith.constant 5.000000e-01 : f32
    %357 = vector.broadcast %cst_130 : f32 to vector<2x32xf32>
    %358 = arith.mulf %357, %356 : vector<2x32xf32>
    %359 = math.tanh %358 : vector<2x32xf32>
    %cst_131 = arith.constant 5.000000e-01 : f32
    %360 = vector.broadcast %cst_131 : f32 to vector<2x32xf32>
    %361 = arith.mulf %360, %359 : vector<2x32xf32>
    %cst_132 = arith.constant 5.000000e-01 : f32
    %362 = vector.broadcast %cst_132 : f32 to vector<2x32xf32>
    %363 = arith.addf %361, %362 : vector<2x32xf32>
    %364 = vector.extract_strided_slice %340 {offsets = [0, 64], sizes = [2, 32], strides = [1, 1]} : vector<2x128xf32> to vector<2x32xf32>
    %365 = math.tanh %364 : vector<2x32xf32>
    %366 = vector.extract_strided_slice %340 {offsets = [0, 96], sizes = [2, 32], strides = [1, 1]} : vector<2x128xf32> to vector<2x32xf32>
    %cst_133 = arith.constant 5.000000e-01 : f32
    %367 = vector.broadcast %cst_133 : f32 to vector<2x32xf32>
    %368 = arith.mulf %367, %366 : vector<2x32xf32>
    %369 = math.tanh %368 : vector<2x32xf32>
    %cst_134 = arith.constant 5.000000e-01 : f32
    %370 = vector.broadcast %cst_134 : f32 to vector<2x32xf32>
    %371 = arith.mulf %370, %369 : vector<2x32xf32>
    %cst_135 = arith.constant 5.000000e-01 : f32
    %372 = vector.broadcast %cst_135 : f32 to vector<2x32xf32>
    %373 = arith.addf %371, %372 : vector<2x32xf32>
    %374 = arith.mulf %363, %326 : vector<2x32xf32>
    %375 = arith.mulf %355, %365 : vector<2x32xf32>
    %376 = arith.addf %374, %375 : vector<2x32xf32>
    %377 = math.tanh %376 : vector<2x32xf32>
    %378 = arith.mulf %373, %377 : vector<2x32xf32>
    %379 = vector.extract_strided_slice %347 {offsets = [0, 0], sizes = [2, 32], strides = [1, 1]} : vector<2x128xf32> to vector<2x32xf32>
    %cst_136 = arith.constant 5.000000e-01 : f32
    %380 = vector.broadcast %cst_136 : f32 to vector<2x32xf32>
    %381 = arith.mulf %380, %379 : vector<2x32xf32>
    %382 = math.tanh %381 : vector<2x32xf32>
    %cst_137 = arith.constant 5.000000e-01 : f32
    %383 = vector.broadcast %cst_137 : f32 to vector<2x32xf32>
    %384 = arith.mulf %383, %382 : vector<2x32xf32>
    %cst_138 = arith.constant 5.000000e-01 : f32
    %385 = vector.broadcast %cst_138 : f32 to vector<2x32xf32>
    %386 = arith.addf %384, %385 : vector<2x32xf32>
    %387 = vector.extract_strided_slice %347 {offsets = [0, 32], sizes = [2, 32], strides = [1, 1]} : vector<2x128xf32> to vector<2x32xf32>
    %cst_139 = arith.constant 5.000000e-01 : f32
    %388 = vector.broadcast %cst_139 : f32 to vector<2x32xf32>
    %389 = arith.mulf %388, %387 : vector<2x32xf32>
    %390 = math.tanh %389 : vector<2x32xf32>
    %cst_140 = arith.constant 5.000000e-01 : f32
    %391 = vector.broadcast %cst_140 : f32 to vector<2x32xf32>
    %392 = arith.mulf %391, %390 : vector<2x32xf32>
    %cst_141 = arith.constant 5.000000e-01 : f32
    %393 = vector.broadcast %cst_141 : f32 to vector<2x32xf32>
    %394 = arith.addf %392, %393 : vector<2x32xf32>
    %395 = vector.extract_strided_slice %347 {offsets = [0, 64], sizes = [2, 32], strides = [1, 1]} : vector<2x128xf32> to vector<2x32xf32>
    %396 = math.tanh %395 : vector<2x32xf32>
    %397 = vector.extract_strided_slice %347 {offsets = [0, 96], sizes = [2, 32], strides = [1, 1]} : vector<2x128xf32> to vector<2x32xf32>
    %cst_142 = arith.constant 5.000000e-01 : f32
    %398 = vector.broadcast %cst_142 : f32 to vector<2x32xf32>
    %399 = arith.mulf %398, %397 : vector<2x32xf32>
    %400 = math.tanh %399 : vector<2x32xf32>
    %cst_143 = arith.constant 5.000000e-01 : f32
    %401 = vector.broadcast %cst_143 : f32 to vector<2x32xf32>
    %402 = arith.mulf %401, %400 : vector<2x32xf32>
    %cst_144 = arith.constant 5.000000e-01 : f32
    %403 = vector.broadcast %cst_144 : f32 to vector<2x32xf32>
    %404 = arith.addf %402, %403 : vector<2x32xf32>
    %405 = arith.mulf %394, %332 : vector<2x32xf32>
    %406 = arith.mulf %386, %396 : vector<2x32xf32>
    %407 = arith.addf %405, %406 : vector<2x32xf32>
    %408 = math.tanh %407 : vector<2x32xf32>
    %409 = arith.mulf %404, %408 : vector<2x32xf32>
    %410 = vector.broadcast %c3_i32 : i32 to vector<2x1xi32>
    %411 = arith.cmpi slt, %410, %0 : vector<2x1xi32>
    %412 = vector.broadcast %333 : i32 to vector<2x1xi32>
    %413 = arith.cmpi slt, %412, %0 : vector<2x1xi32>
    %cst_145 = arith.constant 0.000000e+00 : f32
    %414 = vector.shape_cast %411 : vector<2x1xi1> to vector<2x1xi1>
    %415 = vector.broadcast %414 : vector<2x1xi1> to vector<2x32xi1>
    %416 = vector.broadcast %cst_145 : f32 to vector<2x32xf32>
    %417 = arith.select %415, %378, %416 : vector<2x32xi1>, vector<2x32xf32>
    %cst_146 = arith.constant 0.000000e+00 : f32
    %418 = vector.shape_cast %413 : vector<2x1xi1> to vector<2x1xi1>
    %419 = vector.broadcast %418 : vector<2x1xi1> to vector<2x32xi1>
    %420 = vector.broadcast %cst_146 : f32 to vector<2x32xf32>
    %421 = arith.select %419, %409, %420 : vector<2x32xi1>, vector<2x32xf32>
    %422 = vector.shape_cast %417 : vector<2x32xf32> to vector<2x1x32xf32>
    %c0_147 = arith.constant 0 : index
    %423 = arith.index_cast %c3_i32 : i32 to index
    %c0_148 = arith.constant 0 : index
    %424 = vector.load %arg10[%c0_147, %423, %c0_148] : memref<2x8x32xf32, #tpu.memory_space<vmem>>, vector<2x1x32xf32>
    tpu.vector_store %arg10[%c0_147, %423, %c0_148], %422 {strides = array<i32>} : memref<2x8x32xf32, #tpu.memory_space<vmem>>, vector<2x1x32xf32>,
    %425 = vector.shape_cast %421 : vector<2x32xf32> to vector<2x1x32xf32>
    %c0_149 = arith.constant 0 : index
    %426 = arith.index_cast %333 : i32 to index
    %c0_150 = arith.constant 0 : index
    %427 = vector.load %arg11[%c0_149, %426, %c0_150] : memref<2x8x32xf32, #tpu.memory_space<vmem>>, vector<2x1x32xf32>
    tpu.vector_store %arg11[%c0_149, %426, %c0_150], %425 {strides = array<i32>} : memref<2x8x32xf32, #tpu.memory_space<vmem>>, vector<2x1x32xf32>,
    %428 = vector.shape_cast %411 : vector<2x1xi1> to vector<2x1xi1>
    %429 = vector.broadcast %428 : vector<2x1xi1> to vector<2x32xi1>
    %430 = arith.select %429, %378, %323 : vector<2x32xi1>, vector<2x32xf32>
    %431 = vector.shape_cast %411 : vector<2x1xi1> to vector<2x1xi1>
    %432 = vector.broadcast %431 : vector<2x1xi1> to vector<2x32xi1>
    %433 = arith.select %432, %376, %326 : vector<2x32xi1>, vector<2x32xf32>
    %434 = vector.shape_cast %413 : vector<2x1xi1> to vector<2x1xi1>
    %435 = vector.broadcast %434 : vector<2x1xi1> to vector<2x32xi1>
    %436 = arith.select %435, %409, %329 : vector<2x32xi1>, vector<2x32xf32>
    %437 = vector.shape_cast %413 : vector<2x1xi1> to vector<2x1xi1>
    %438 = vector.broadcast %437 : vector<2x1xi1> to vector<2x32xi1>
    %439 = arith.select %438, %407, %332 : vector<2x32xi1>, vector<2x32xf32>
    %c4_i32 = arith.constant 4 : i32
    %c7_i32_151 = arith.constant 7 : i32
    %440 = arith.subi %c7_i32_151, %c4_i32 : i32
    %c2_i32_152 = arith.constant 2 : i32
    %441 = arith.muli %c4_i32, %c2_i32_152 : i32
    %442 = arith.index_cast %441 : i32 to index
    %c0_153 = arith.constant 0 : index
    %443 = vector.load %arg8[%442, %c0_153] : memref<16x128xf32, #tpu.memory_space<vmem>>, vector<2x128xf32>
    %444 = arith.truncf %430 : vector<2x32xf32> to vector<2x32xbf16>
    %c0_154 = arith.constant 0 : index
    %c0_155 = arith.constant 0 : index
    %445 = vector.load %arg4[%c0_154, %c0_155] : memref<32x128xbf16, #tpu.memory_space<vmem>>, vector<32x128xbf16>
    %cst_156 = arith.constant dense<0.000000e+00> : vector<2x128xf32>
    %446 = tpu.matmul %444, %445, %cst_156 {dimension_numbers = #tpu.dot_dimension_numbers<[1], [0], [0], [1], [0, 0, 1, 1], [], []>} : vector<2x32xbf16>, vector<32x128xbf16>, vector<2x128xf32> -> vector<2x128xf32>
    %447 = arith.addf %443, %446 : vector<2x128xf32>
    %c2_i32_157 = arith.constant 2 : i32
    %448 = arith.muli %440, %c2_i32_157 : i32
    %449 = arith.index_cast %448 : i32 to index
    %c0_158 = arith.constant 0 : index
    %450 = vector.load %arg9[%449, %c0_158] : memref<16x128xf32, #tpu.memory_space<vmem>>, vector<2x128xf32>
    %451 = arith.truncf %436 : vector<2x32xf32> to vector<2x32xbf16>
    %c0_159 = arith.constant 0 : index
    %c0_160 = arith.constant 0 : index
    %452 = vector.load %arg5[%c0_159, %c0_160] : memref<32x128xbf16, #tpu.memory_space<vmem>>, vector<32x128xbf16>
    %cst_161 = arith.constant dense<0.000000e+00> : vector<2x128xf32>
    %453 = tpu.matmul %451, %452, %cst_161 {dimension_numbers = #tpu.dot_dimension_numbers<[1], [0], [0], [1], [0, 0, 1, 1], [], []>} : vector<2x32xbf16>, vector<32x128xbf16>, vector<2x128xf32> -> vector<2x128xf32>
    %454 = arith.addf %450, %453 : vector<2x128xf32>
    %455 = vector.extract_strided_slice %447 {offsets = [0, 0], sizes = [2, 32], strides = [1, 1]} : vector<2x128xf32> to vector<2x32xf32>
    %cst_162 = arith.constant 5.000000e-01 : f32
    %456 = vector.broadcast %cst_162 : f32 to vector<2x32xf32>
    %457 = arith.mulf %456, %455 : vector<2x32xf32>
    %458 = math.tanh %457 : vector<2x32xf32>
    %cst_163 = arith.constant 5.000000e-01 : f32
    %459 = vector.broadcast %cst_163 : f32 to vector<2x32xf32>
    %460 = arith.mulf %459, %458 : vector<2x32xf32>
    %cst_164 = arith.constant 5.000000e-01 : f32
    %461 = vector.broadcast %cst_164 : f32 to vector<2x32xf32>
    %462 = arith.addf %460, %461 : vector<2x32xf32>
    %463 = vector.extract_strided_slice %447 {offsets = [0, 32], sizes = [2, 32], strides = [1, 1]} : vector<2x128xf32> to vector<2x32xf32>
    %cst_165 = arith.constant 5.000000e-01 : f32
    %464 = vector.broadcast %cst_165 : f32 to vector<2x32xf32>
    %465 = arith.mulf %464, %463 : vector<2x32xf32>
    %466 = math.tanh %465 : vector<2x32xf32>
    %cst_166 = arith.constant 5.000000e-01 : f32
    %467 = vector.broadcast %cst_166 : f32 to vector<2x32xf32>
    %468 = arith.mulf %467, %466 : vector<2x32xf32>
    %cst_167 = arith.constant 5.000000e-01 : f32
    %469 = vector.broadcast %cst_167 : f32 to vector<2x32xf32>
    %470 = arith.addf %468, %469 : vector<2x32xf32>
    %471 = vector.extract_strided_slice %447 {offsets = [0, 64], sizes = [2, 32], strides = [1, 1]} : vector<2x128xf32> to vector<2x32xf32>
    %472 = math.tanh %471 : vector<2x32xf32>
    %473 = vector.extract_strided_slice %447 {offsets = [0, 96], sizes = [2, 32], strides = [1, 1]} : vector<2x128xf32> to vector<2x32xf32>
    %cst_168 = arith.constant 5.000000e-01 : f32
    %474 = vector.broadcast %cst_168 : f32 to vector<2x32xf32>
    %475 = arith.mulf %474, %473 : vector<2x32xf32>
    %476 = math.tanh %475 : vector<2x32xf32>
    %cst_169 = arith.constant 5.000000e-01 : f32
    %477 = vector.broadcast %cst_169 : f32 to vector<2x32xf32>
    %478 = arith.mulf %477, %476 : vector<2x32xf32>
    %cst_170 = arith.constant 5.000000e-01 : f32
    %479 = vector.broadcast %cst_170 : f32 to vector<2x32xf32>
    %480 = arith.addf %478, %479 : vector<2x32xf32>
    %481 = arith.mulf %470, %433 : vector<2x32xf32>
    %482 = arith.mulf %462, %472 : vector<2x32xf32>
    %483 = arith.addf %481, %482 : vector<2x32xf32>
    %484 = math.tanh %483 : vector<2x32xf32>
    %485 = arith.mulf %480, %484 : vector<2x32xf32>
    %486 = vector.extract_strided_slice %454 {offsets = [0, 0], sizes = [2, 32], strides = [1, 1]} : vector<2x128xf32> to vector<2x32xf32>
    %cst_171 = arith.constant 5.000000e-01 : f32
    %487 = vector.broadcast %cst_171 : f32 to vector<2x32xf32>
    %488 = arith.mulf %487, %486 : vector<2x32xf32>
    %489 = math.tanh %488 : vector<2x32xf32>
    %cst_172 = arith.constant 5.000000e-01 : f32
    %490 = vector.broadcast %cst_172 : f32 to vector<2x32xf32>
    %491 = arith.mulf %490, %489 : vector<2x32xf32>
    %cst_173 = arith.constant 5.000000e-01 : f32
    %492 = vector.broadcast %cst_173 : f32 to vector<2x32xf32>
    %493 = arith.addf %491, %492 : vector<2x32xf32>
    %494 = vector.extract_strided_slice %454 {offsets = [0, 32], sizes = [2, 32], strides = [1, 1]} : vector<2x128xf32> to vector<2x32xf32>
    %cst_174 = arith.constant 5.000000e-01 : f32
    %495 = vector.broadcast %cst_174 : f32 to vector<2x32xf32>
    %496 = arith.mulf %495, %494 : vector<2x32xf32>
    %497 = math.tanh %496 : vector<2x32xf32>
    %cst_175 = arith.constant 5.000000e-01 : f32
    %498 = vector.broadcast %cst_175 : f32 to vector<2x32xf32>
    %499 = arith.mulf %498, %497 : vector<2x32xf32>
    %cst_176 = arith.constant 5.000000e-01 : f32
    %500 = vector.broadcast %cst_176 : f32 to vector<2x32xf32>
    %501 = arith.addf %499, %500 : vector<2x32xf32>
    %502 = vector.extract_strided_slice %454 {offsets = [0, 64], sizes = [2, 32], strides = [1, 1]} : vector<2x128xf32> to vector<2x32xf32>
    %503 = math.tanh %502 : vector<2x32xf32>
    %504 = vector.extract_strided_slice %454 {offsets = [0, 96], sizes = [2, 32], strides = [1, 1]} : vector<2x128xf32> to vector<2x32xf32>
    %cst_177 = arith.constant 5.000000e-01 : f32
    %505 = vector.broadcast %cst_177 : f32 to vector<2x32xf32>
    %506 = arith.mulf %505, %504 : vector<2x32xf32>
    %507 = math.tanh %506 : vector<2x32xf32>
    %cst_178 = arith.constant 5.000000e-01 : f32
    %508 = vector.broadcast %cst_178 : f32 to vector<2x32xf32>
    %509 = arith.mulf %508, %507 : vector<2x32xf32>
    %cst_179 = arith.constant 5.000000e-01 : f32
    %510 = vector.broadcast %cst_179 : f32 to vector<2x32xf32>
    %511 = arith.addf %509, %510 : vector<2x32xf32>
    %512 = arith.mulf %501, %439 : vector<2x32xf32>
    %513 = arith.mulf %493, %503 : vector<2x32xf32>
    %514 = arith.addf %512, %513 : vector<2x32xf32>
    %515 = math.tanh %514 : vector<2x32xf32>
    %516 = arith.mulf %511, %515 : vector<2x32xf32>
    %517 = vector.broadcast %c4_i32 : i32 to vector<2x1xi32>
    %518 = arith.cmpi slt, %517, %0 : vector<2x1xi32>
    %519 = vector.broadcast %440 : i32 to vector<2x1xi32>
    %520 = arith.cmpi slt, %519, %0 : vector<2x1xi32>
    %cst_180 = arith.constant 0.000000e+00 : f32
    %521 = vector.shape_cast %518 : vector<2x1xi1> to vector<2x1xi1>
    %522 = vector.broadcast %521 : vector<2x1xi1> to vector<2x32xi1>
    %523 = vector.broadcast %cst_180 : f32 to vector<2x32xf32>
    %524 = arith.select %522, %485, %523 : vector<2x32xi1>, vector<2x32xf32>
    %cst_181 = arith.constant 0.000000e+00 : f32
    %525 = vector.shape_cast %520 : vector<2x1xi1> to vector<2x1xi1>
    %526 = vector.broadcast %525 : vector<2x1xi1> to vector<2x32xi1>
    %527 = vector.broadcast %cst_181 : f32 to vector<2x32xf32>
    %528 = arith.select %526, %516, %527 : vector<2x32xi1>, vector<2x32xf32>
    %529 = vector.shape_cast %524 : vector<2x32xf32> to vector<2x1x32xf32>
    %c0_182 = arith.constant 0 : index
    %530 = arith.index_cast %c4_i32 : i32 to index
    %c0_183 = arith.constant 0 : index
    %531 = vector.load %arg10[%c0_182, %530, %c0_183] : memref<2x8x32xf32, #tpu.memory_space<vmem>>, vector<2x1x32xf32>
    tpu.vector_store %arg10[%c0_182, %530, %c0_183], %529 {strides = array<i32>} : memref<2x8x32xf32, #tpu.memory_space<vmem>>, vector<2x1x32xf32>,
    %532 = vector.shape_cast %528 : vector<2x32xf32> to vector<2x1x32xf32>
    %c0_184 = arith.constant 0 : index
    %533 = arith.index_cast %440 : i32 to index
    %c0_185 = arith.constant 0 : index
    %534 = vector.load %arg11[%c0_184, %533, %c0_185] : memref<2x8x32xf32, #tpu.memory_space<vmem>>, vector<2x1x32xf32>
    tpu.vector_store %arg11[%c0_184, %533, %c0_185], %532 {strides = array<i32>} : memref<2x8x32xf32, #tpu.memory_space<vmem>>, vector<2x1x32xf32>,
    %535 = vector.shape_cast %518 : vector<2x1xi1> to vector<2x1xi1>
    %536 = vector.broadcast %535 : vector<2x1xi1> to vector<2x32xi1>
    %537 = arith.select %536, %485, %430 : vector<2x32xi1>, vector<2x32xf32>
    %538 = vector.shape_cast %518 : vector<2x1xi1> to vector<2x1xi1>
    %539 = vector.broadcast %538 : vector<2x1xi1> to vector<2x32xi1>
    %540 = arith.select %539, %483, %433 : vector<2x32xi1>, vector<2x32xf32>
    %541 = vector.shape_cast %520 : vector<2x1xi1> to vector<2x1xi1>
    %542 = vector.broadcast %541 : vector<2x1xi1> to vector<2x32xi1>
    %543 = arith.select %542, %516, %436 : vector<2x32xi1>, vector<2x32xf32>
    %544 = vector.shape_cast %520 : vector<2x1xi1> to vector<2x1xi1>
    %545 = vector.broadcast %544 : vector<2x1xi1> to vector<2x32xi1>
    %546 = arith.select %545, %514, %439 : vector<2x32xi1>, vector<2x32xf32>
    %c5_i32 = arith.constant 5 : i32
    %c7_i32_186 = arith.constant 7 : i32
    %547 = arith.subi %c7_i32_186, %c5_i32 : i32
    %c2_i32_187 = arith.constant 2 : i32
    %548 = arith.muli %c5_i32, %c2_i32_187 : i32
    %549 = arith.index_cast %548 : i32 to index
    %c0_188 = arith.constant 0 : index
    %550 = vector.load %arg8[%549, %c0_188] : memref<16x128xf32, #tpu.memory_space<vmem>>, vector<2x128xf32>
    %551 = arith.truncf %537 : vector<2x32xf32> to vector<2x32xbf16>
    %c0_189 = arith.constant 0 : index
    %c0_190 = arith.constant 0 : index
    %552 = vector.load %arg4[%c0_189, %c0_190] : memref<32x128xbf16, #tpu.memory_space<vmem>>, vector<32x128xbf16>
    %cst_191 = arith.constant dense<0.000000e+00> : vector<2x128xf32>
    %553 = tpu.matmul %551, %552, %cst_191 {dimension_numbers = #tpu.dot_dimension_numbers<[1], [0], [0], [1], [0, 0, 1, 1], [], []>} : vector<2x32xbf16>, vector<32x128xbf16>, vector<2x128xf32> -> vector<2x128xf32>
    %554 = arith.addf %550, %553 : vector<2x128xf32>
    %c2_i32_192 = arith.constant 2 : i32
    %555 = arith.muli %547, %c2_i32_192 : i32
    %556 = arith.index_cast %555 : i32 to index
    %c0_193 = arith.constant 0 : index
    %557 = vector.load %arg9[%556, %c0_193] : memref<16x128xf32, #tpu.memory_space<vmem>>, vector<2x128xf32>
    %558 = arith.truncf %543 : vector<2x32xf32> to vector<2x32xbf16>
    %c0_194 = arith.constant 0 : index
    %c0_195 = arith.constant 0 : index
    %559 = vector.load %arg5[%c0_194, %c0_195] : memref<32x128xbf16, #tpu.memory_space<vmem>>, vector<32x128xbf16>
    %cst_196 = arith.constant dense<0.000000e+00> : vector<2x128xf32>
    %560 = tpu.matmul %558, %559, %cst_196 {dimension_numbers = #tpu.dot_dimension_numbers<[1], [0], [0], [1], [0, 0, 1, 1], [], []>} : vector<2x32xbf16>, vector<32x128xbf16>, vector<2x128xf32> -> vector<2x128xf32>
    %561 = arith.addf %557, %560 : vector<2x128xf32>
    %562 = vector.extract_strided_slice %554 {offsets = [0, 0], sizes = [2, 32], strides = [1, 1]} : vector<2x128xf32> to vector<2x32xf32>
    %cst_197 = arith.constant 5.000000e-01 : f32
    %563 = vector.broadcast %cst_197 : f32 to vector<2x32xf32>
    %564 = arith.mulf %563, %562 : vector<2x32xf32>
    %565 = math.tanh %564 : vector<2x32xf32>
    %cst_198 = arith.constant 5.000000e-01 : f32
    %566 = vector.broadcast %cst_198 : f32 to vector<2x32xf32>
    %567 = arith.mulf %566, %565 : vector<2x32xf32>
    %cst_199 = arith.constant 5.000000e-01 : f32
    %568 = vector.broadcast %cst_199 : f32 to vector<2x32xf32>
    %569 = arith.addf %567, %568 : vector<2x32xf32>
    %570 = vector.extract_strided_slice %554 {offsets = [0, 32], sizes = [2, 32], strides = [1, 1]} : vector<2x128xf32> to vector<2x32xf32>
    %cst_200 = arith.constant 5.000000e-01 : f32
    %571 = vector.broadcast %cst_200 : f32 to vector<2x32xf32>
    %572 = arith.mulf %571, %570 : vector<2x32xf32>
    %573 = math.tanh %572 : vector<2x32xf32>
    %cst_201 = arith.constant 5.000000e-01 : f32
    %574 = vector.broadcast %cst_201 : f32 to vector<2x32xf32>
    %575 = arith.mulf %574, %573 : vector<2x32xf32>
    %cst_202 = arith.constant 5.000000e-01 : f32
    %576 = vector.broadcast %cst_202 : f32 to vector<2x32xf32>
    %577 = arith.addf %575, %576 : vector<2x32xf32>
    %578 = vector.extract_strided_slice %554 {offsets = [0, 64], sizes = [2, 32], strides = [1, 1]} : vector<2x128xf32> to vector<2x32xf32>
    %579 = math.tanh %578 : vector<2x32xf32>
    %580 = vector.extract_strided_slice %554 {offsets = [0, 96], sizes = [2, 32], strides = [1, 1]} : vector<2x128xf32> to vector<2x32xf32>
    %cst_203 = arith.constant 5.000000e-01 : f32
    %581 = vector.broadcast %cst_203 : f32 to vector<2x32xf32>
    %582 = arith.mulf %581, %580 : vector<2x32xf32>
    %583 = math.tanh %582 : vector<2x32xf32>
    %cst_204 = arith.constant 5.000000e-01 : f32
    %584 = vector.broadcast %cst_204 : f32 to vector<2x32xf32>
    %585 = arith.mulf %584, %583 : vector<2x32xf32>
    %cst_205 = arith.constant 5.000000e-01 : f32
    %586 = vector.broadcast %cst_205 : f32 to vector<2x32xf32>
    %587 = arith.addf %585, %586 : vector<2x32xf32>
    %588 = arith.mulf %577, %540 : vector<2x32xf32>
    %589 = arith.mulf %569, %579 : vector<2x32xf32>
    %590 = arith.addf %588, %589 : vector<2x32xf32>
    %591 = math.tanh %590 : vector<2x32xf32>
    %592 = arith.mulf %587, %591 : vector<2x32xf32>
    %593 = vector.extract_strided_slice %561 {offsets = [0, 0], sizes = [2, 32], strides = [1, 1]} : vector<2x128xf32> to vector<2x32xf32>
    %cst_206 = arith.constant 5.000000e-01 : f32
    %594 = vector.broadcast %cst_206 : f32 to vector<2x32xf32>
    %595 = arith.mulf %594, %593 : vector<2x32xf32>
    %596 = math.tanh %595 : vector<2x32xf32>
    %cst_207 = arith.constant 5.000000e-01 : f32
    %597 = vector.broadcast %cst_207 : f32 to vector<2x32xf32>
    %598 = arith.mulf %597, %596 : vector<2x32xf32>
    %cst_208 = arith.constant 5.000000e-01 : f32
    %599 = vector.broadcast %cst_208 : f32 to vector<2x32xf32>
    %600 = arith.addf %598, %599 : vector<2x32xf32>
    %601 = vector.extract_strided_slice %561 {offsets = [0, 32], sizes = [2, 32], strides = [1, 1]} : vector<2x128xf32> to vector<2x32xf32>
    %cst_209 = arith.constant 5.000000e-01 : f32
    %602 = vector.broadcast %cst_209 : f32 to vector<2x32xf32>
    %603 = arith.mulf %602, %601 : vector<2x32xf32>
    %604 = math.tanh %603 : vector<2x32xf32>
    %cst_210 = arith.constant 5.000000e-01 : f32
    %605 = vector.broadcast %cst_210 : f32 to vector<2x32xf32>
    %606 = arith.mulf %605, %604 : vector<2x32xf32>
    %cst_211 = arith.constant 5.000000e-01 : f32
    %607 = vector.broadcast %cst_211 : f32 to vector<2x32xf32>
    %608 = arith.addf %606, %607 : vector<2x32xf32>
    %609 = vector.extract_strided_slice %561 {offsets = [0, 64], sizes = [2, 32], strides = [1, 1]} : vector<2x128xf32> to vector<2x32xf32>
    %610 = math.tanh %609 : vector<2x32xf32>
    %611 = vector.extract_strided_slice %561 {offsets = [0, 96], sizes = [2, 32], strides = [1, 1]} : vector<2x128xf32> to vector<2x32xf32>
    %cst_212 = arith.constant 5.000000e-01 : f32
    %612 = vector.broadcast %cst_212 : f32 to vector<2x32xf32>
    %613 = arith.mulf %612, %611 : vector<2x32xf32>
    %614 = math.tanh %613 : vector<2x32xf32>
    %cst_213 = arith.constant 5.000000e-01 : f32
    %615 = vector.broadcast %cst_213 : f32 to vector<2x32xf32>
    %616 = arith.mulf %615, %614 : vector<2x32xf32>
    %cst_214 = arith.constant 5.000000e-01 : f32
    %617 = vector.broadcast %cst_214 : f32 to vector<2x32xf32>
    %618 = arith.addf %616, %617 : vector<2x32xf32>
    %619 = arith.mulf %608, %546 : vector<2x32xf32>
    %620 = arith.mulf %600, %610 : vector<2x32xf32>
    %621 = arith.addf %619, %620 : vector<2x32xf32>
    %622 = math.tanh %621 : vector<2x32xf32>
    %623 = arith.mulf %618, %622 : vector<2x32xf32>
    %624 = vector.broadcast %c5_i32 : i32 to vector<2x1xi32>
    %625 = arith.cmpi slt, %624, %0 : vector<2x1xi32>
    %626 = vector.broadcast %547 : i32 to vector<2x1xi32>
    %627 = arith.cmpi slt, %626, %0 : vector<2x1xi32>
    %cst_215 = arith.constant 0.000000e+00 : f32
    %628 = vector.shape_cast %625 : vector<2x1xi1> to vector<2x1xi1>
    %629 = vector.broadcast %628 : vector<2x1xi1> to vector<2x32xi1>
    %630 = vector.broadcast %cst_215 : f32 to vector<2x32xf32>
    %631 = arith.select %629, %592, %630 : vector<2x32xi1>, vector<2x32xf32>
    %cst_216 = arith.constant 0.000000e+00 : f32
    %632 = vector.shape_cast %627 : vector<2x1xi1> to vector<2x1xi1>
    %633 = vector.broadcast %632 : vector<2x1xi1> to vector<2x32xi1>
    %634 = vector.broadcast %cst_216 : f32 to vector<2x32xf32>
    %635 = arith.select %633, %623, %634 : vector<2x32xi1>, vector<2x32xf32>
    %636 = vector.shape_cast %631 : vector<2x32xf32> to vector<2x1x32xf32>
    %c0_217 = arith.constant 0 : index
    %637 = arith.index_cast %c5_i32 : i32 to index
    %c0_218 = arith.constant 0 : index
    %638 = vector.load %arg10[%c0_217, %637, %c0_218] : memref<2x8x32xf32, #tpu.memory_space<vmem>>, vector<2x1x32xf32>
    tpu.vector_store %arg10[%c0_217, %637, %c0_218], %636 {strides = array<i32>} : memref<2x8x32xf32, #tpu.memory_space<vmem>>, vector<2x1x32xf32>,
    %639 = vector.shape_cast %635 : vector<2x32xf32> to vector<2x1x32xf32>
    %c0_219 = arith.constant 0 : index
    %640 = arith.index_cast %547 : i32 to index
    %c0_220 = arith.constant 0 : index
    %641 = vector.load %arg11[%c0_219, %640, %c0_220] : memref<2x8x32xf32, #tpu.memory_space<vmem>>, vector<2x1x32xf32>
    tpu.vector_store %arg11[%c0_219, %640, %c0_220], %639 {strides = array<i32>} : memref<2x8x32xf32, #tpu.memory_space<vmem>>, vector<2x1x32xf32>,
    %642 = vector.shape_cast %625 : vector<2x1xi1> to vector<2x1xi1>
    %643 = vector.broadcast %642 : vector<2x1xi1> to vector<2x32xi1>
    %644 = arith.select %643, %592, %537 : vector<2x32xi1>, vector<2x32xf32>
    %645 = vector.shape_cast %625 : vector<2x1xi1> to vector<2x1xi1>
    %646 = vector.broadcast %645 : vector<2x1xi1> to vector<2x32xi1>
    %647 = arith.select %646, %590, %540 : vector<2x32xi1>, vector<2x32xf32>
    %648 = vector.shape_cast %627 : vector<2x1xi1> to vector<2x1xi1>
    %649 = vector.broadcast %648 : vector<2x1xi1> to vector<2x32xi1>
    %650 = arith.select %649, %623, %543 : vector<2x32xi1>, vector<2x32xf32>
    %651 = vector.shape_cast %627 : vector<2x1xi1> to vector<2x1xi1>
    %652 = vector.broadcast %651 : vector<2x1xi1> to vector<2x32xi1>
    %653 = arith.select %652, %621, %546 : vector<2x32xi1>, vector<2x32xf32>
    %c6_i32 = arith.constant 6 : i32
    %c7_i32_221 = arith.constant 7 : i32
    %654 = arith.subi %c7_i32_221, %c6_i32 : i32
    %c2_i32_222 = arith.constant 2 : i32
    %655 = arith.muli %c6_i32, %c2_i32_222 : i32
    %656 = arith.index_cast %655 : i32 to index
    %c0_223 = arith.constant 0 : index
    %657 = vector.load %arg8[%656, %c0_223] : memref<16x128xf32, #tpu.memory_space<vmem>>, vector<2x128xf32>
    %658 = arith.truncf %644 : vector<2x32xf32> to vector<2x32xbf16>
    %c0_224 = arith.constant 0 : index
    %c0_225 = arith.constant 0 : index
    %659 = vector.load %arg4[%c0_224, %c0_225] : memref<32x128xbf16, #tpu.memory_space<vmem>>, vector<32x128xbf16>
    %cst_226 = arith.constant dense<0.000000e+00> : vector<2x128xf32>
    %660 = tpu.matmul %658, %659, %cst_226 {dimension_numbers = #tpu.dot_dimension_numbers<[1], [0], [0], [1], [0, 0, 1, 1], [], []>} : vector<2x32xbf16>, vector<32x128xbf16>, vector<2x128xf32> -> vector<2x128xf32>
    %661 = arith.addf %657, %660 : vector<2x128xf32>
    %c2_i32_227 = arith.constant 2 : i32
    %662 = arith.muli %654, %c2_i32_227 : i32
    %663 = arith.index_cast %662 : i32 to index
    %c0_228 = arith.constant 0 : index
    %664 = vector.load %arg9[%663, %c0_228] : memref<16x128xf32, #tpu.memory_space<vmem>>, vector<2x128xf32>
    %665 = arith.truncf %650 : vector<2x32xf32> to vector<2x32xbf16>
    %c0_229 = arith.constant 0 : index
    %c0_230 = arith.constant 0 : index
    %666 = vector.load %arg5[%c0_229, %c0_230] : memref<32x128xbf16, #tpu.memory_space<vmem>>, vector<32x128xbf16>
    %cst_231 = arith.constant dense<0.000000e+00> : vector<2x128xf32>
    %667 = tpu.matmul %665, %666, %cst_231 {dimension_numbers = #tpu.dot_dimension_numbers<[1], [0], [0], [1], [0, 0, 1, 1], [], []>} : vector<2x32xbf16>, vector<32x128xbf16>, vector<2x128xf32> -> vector<2x128xf32>
    %668 = arith.addf %664, %667 : vector<2x128xf32>
    %669 = vector.extract_strided_slice %661 {offsets = [0, 0], sizes = [2, 32], strides = [1, 1]} : vector<2x128xf32> to vector<2x32xf32>
    %cst_232 = arith.constant 5.000000e-01 : f32
    %670 = vector.broadcast %cst_232 : f32 to vector<2x32xf32>
    %671 = arith.mulf %670, %669 : vector<2x32xf32>
    %672 = math.tanh %671 : vector<2x32xf32>
    %cst_233 = arith.constant 5.000000e-01 : f32
    %673 = vector.broadcast %cst_233 : f32 to vector<2x32xf32>
    %674 = arith.mulf %673, %672 : vector<2x32xf32>
    %cst_234 = arith.constant 5.000000e-01 : f32
    %675 = vector.broadcast %cst_234 : f32 to vector<2x32xf32>
    %676 = arith.addf %674, %675 : vector<2x32xf32>
    %677 = vector.extract_strided_slice %661 {offsets = [0, 32], sizes = [2, 32], strides = [1, 1]} : vector<2x128xf32> to vector<2x32xf32>
    %cst_235 = arith.constant 5.000000e-01 : f32
    %678 = vector.broadcast %cst_235 : f32 to vector<2x32xf32>
    %679 = arith.mulf %678, %677 : vector<2x32xf32>
    %680 = math.tanh %679 : vector<2x32xf32>
    %cst_236 = arith.constant 5.000000e-01 : f32
    %681 = vector.broadcast %cst_236 : f32 to vector<2x32xf32>
    %682 = arith.mulf %681, %680 : vector<2x32xf32>
    %cst_237 = arith.constant 5.000000e-01 : f32
    %683 = vector.broadcast %cst_237 : f32 to vector<2x32xf32>
    %684 = arith.addf %682, %683 : vector<2x32xf32>
    %685 = vector.extract_strided_slice %661 {offsets = [0, 64], sizes = [2, 32], strides = [1, 1]} : vector<2x128xf32> to vector<2x32xf32>
    %686 = math.tanh %685 : vector<2x32xf32>
    %687 = vector.extract_strided_slice %661 {offsets = [0, 96], sizes = [2, 32], strides = [1, 1]} : vector<2x128xf32> to vector<2x32xf32>
    %cst_238 = arith.constant 5.000000e-01 : f32
    %688 = vector.broadcast %cst_238 : f32 to vector<2x32xf32>
    %689 = arith.mulf %688, %687 : vector<2x32xf32>
    %690 = math.tanh %689 : vector<2x32xf32>
    %cst_239 = arith.constant 5.000000e-01 : f32
    %691 = vector.broadcast %cst_239 : f32 to vector<2x32xf32>
    %692 = arith.mulf %691, %690 : vector<2x32xf32>
    %cst_240 = arith.constant 5.000000e-01 : f32
    %693 = vector.broadcast %cst_240 : f32 to vector<2x32xf32>
    %694 = arith.addf %692, %693 : vector<2x32xf32>
    %695 = arith.mulf %684, %647 : vector<2x32xf32>
    %696 = arith.mulf %676, %686 : vector<2x32xf32>
    %697 = arith.addf %695, %696 : vector<2x32xf32>
    %698 = math.tanh %697 : vector<2x32xf32>
    %699 = arith.mulf %694, %698 : vector<2x32xf32>
    %700 = vector.extract_strided_slice %668 {offsets = [0, 0], sizes = [2, 32], strides = [1, 1]} : vector<2x128xf32> to vector<2x32xf32>
    %cst_241 = arith.constant 5.000000e-01 : f32
    %701 = vector.broadcast %cst_241 : f32 to vector<2x32xf32>
    %702 = arith.mulf %701, %700 : vector<2x32xf32>
    %703 = math.tanh %702 : vector<2x32xf32>
    %cst_242 = arith.constant 5.000000e-01 : f32
    %704 = vector.broadcast %cst_242 : f32 to vector<2x32xf32>
    %705 = arith.mulf %704, %703 : vector<2x32xf32>
    %cst_243 = arith.constant 5.000000e-01 : f32
    %706 = vector.broadcast %cst_243 : f32 to vector<2x32xf32>
    %707 = arith.addf %705, %706 : vector<2x32xf32>
    %708 = vector.extract_strided_slice %668 {offsets = [0, 32], sizes = [2, 32], strides = [1, 1]} : vector<2x128xf32> to vector<2x32xf32>
    %cst_244 = arith.constant 5.000000e-01 : f32
    %709 = vector.broadcast %cst_244 : f32 to vector<2x32xf32>
    %710 = arith.mulf %709, %708 : vector<2x32xf32>
    %711 = math.tanh %710 : vector<2x32xf32>
    %cst_245 = arith.constant 5.000000e-01 : f32
    %712 = vector.broadcast %cst_245 : f32 to vector<2x32xf32>
    %713 = arith.mulf %712, %711 : vector<2x32xf32>
    %cst_246 = arith.constant 5.000000e-01 : f32
    %714 = vector.broadcast %cst_246 : f32 to vector<2x32xf32>
    %715 = arith.addf %713, %714 : vector<2x32xf32>
    %716 = vector.extract_strided_slice %668 {offsets = [0, 64], sizes = [2, 32], strides = [1, 1]} : vector<2x128xf32> to vector<2x32xf32>
    %717 = math.tanh %716 : vector<2x32xf32>
    %718 = vector.extract_strided_slice %668 {offsets = [0, 96], sizes = [2, 32], strides = [1, 1]} : vector<2x128xf32> to vector<2x32xf32>
    %cst_247 = arith.constant 5.000000e-01 : f32
    %719 = vector.broadcast %cst_247 : f32 to vector<2x32xf32>
    %720 = arith.mulf %719, %718 : vector<2x32xf32>
    %721 = math.tanh %720 : vector<2x32xf32>
    %cst_248 = arith.constant 5.000000e-01 : f32
    %722 = vector.broadcast %cst_248 : f32 to vector<2x32xf32>
    %723 = arith.mulf %722, %721 : vector<2x32xf32>
    %cst_249 = arith.constant 5.000000e-01 : f32
    %724 = vector.broadcast %cst_249 : f32 to vector<2x32xf32>
    %725 = arith.addf %723, %724 : vector<2x32xf32>
    %726 = arith.mulf %715, %653 : vector<2x32xf32>
    %727 = arith.mulf %707, %717 : vector<2x32xf32>
    %728 = arith.addf %726, %727 : vector<2x32xf32>
    %729 = math.tanh %728 : vector<2x32xf32>
    %730 = arith.mulf %725, %729 : vector<2x32xf32>
    %731 = vector.broadcast %c6_i32 : i32 to vector<2x1xi32>
    %732 = arith.cmpi slt, %731, %0 : vector<2x1xi32>
    %733 = vector.broadcast %654 : i32 to vector<2x1xi32>
    %734 = arith.cmpi slt, %733, %0 : vector<2x1xi32>
    %cst_250 = arith.constant 0.000000e+00 : f32
    %735 = vector.shape_cast %732 : vector<2x1xi1> to vector<2x1xi1>
    %736 = vector.broadcast %735 : vector<2x1xi1> to vector<2x32xi1>
    %737 = vector.broadcast %cst_250 : f32 to vector<2x32xf32>
    %738 = arith.select %736, %699, %737 : vector<2x32xi1>, vector<2x32xf32>
    %cst_251 = arith.constant 0.000000e+00 : f32
    %739 = vector.shape_cast %734 : vector<2x1xi1> to vector<2x1xi1>
    %740 = vector.broadcast %739 : vector<2x1xi1> to vector<2x32xi1>
    %741 = vector.broadcast %cst_251 : f32 to vector<2x32xf32>
    %742 = arith.select %740, %730, %741 : vector<2x32xi1>, vector<2x32xf32>
    %743 = vector.shape_cast %738 : vector<2x32xf32> to vector<2x1x32xf32>
    %c0_252 = arith.constant 0 : index
    %744 = arith.index_cast %c6_i32 : i32 to index
    %c0_253 = arith.constant 0 : index
    %745 = vector.load %arg10[%c0_252, %744, %c0_253] : memref<2x8x32xf32, #tpu.memory_space<vmem>>, vector<2x1x32xf32>
    tpu.vector_store %arg10[%c0_252, %744, %c0_253], %743 {strides = array<i32>} : memref<2x8x32xf32, #tpu.memory_space<vmem>>, vector<2x1x32xf32>,
    %746 = vector.shape_cast %742 : vector<2x32xf32> to vector<2x1x32xf32>
    %c0_254 = arith.constant 0 : index
    %747 = arith.index_cast %654 : i32 to index
    %c0_255 = arith.constant 0 : index
    %748 = vector.load %arg11[%c0_254, %747, %c0_255] : memref<2x8x32xf32, #tpu.memory_space<vmem>>, vector<2x1x32xf32>
    tpu.vector_store %arg11[%c0_254, %747, %c0_255], %746 {strides = array<i32>} : memref<2x8x32xf32, #tpu.memory_space<vmem>>, vector<2x1x32xf32>,
    %749 = vector.shape_cast %732 : vector<2x1xi1> to vector<2x1xi1>
    %750 = vector.broadcast %749 : vector<2x1xi1> to vector<2x32xi1>
    %751 = arith.select %750, %699, %644 : vector<2x32xi1>, vector<2x32xf32>
    %752 = vector.shape_cast %732 : vector<2x1xi1> to vector<2x1xi1>
    %753 = vector.broadcast %752 : vector<2x1xi1> to vector<2x32xi1>
    %754 = arith.select %753, %697, %647 : vector<2x32xi1>, vector<2x32xf32>
    %755 = vector.shape_cast %734 : vector<2x1xi1> to vector<2x1xi1>
    %756 = vector.broadcast %755 : vector<2x1xi1> to vector<2x32xi1>
    %757 = arith.select %756, %730, %650 : vector<2x32xi1>, vector<2x32xf32>
    %758 = vector.shape_cast %734 : vector<2x1xi1> to vector<2x1xi1>
    %759 = vector.broadcast %758 : vector<2x1xi1> to vector<2x32xi1>
    %760 = arith.select %759, %728, %653 : vector<2x32xi1>, vector<2x32xf32>
    %c7_i32_256 = arith.constant 7 : i32
    %c7_i32_257 = arith.constant 7 : i32
    %761 = arith.subi %c7_i32_257, %c7_i32_256 : i32
    %c2_i32_258 = arith.constant 2 : i32
    %762 = arith.muli %c7_i32_256, %c2_i32_258 : i32
    %763 = arith.index_cast %762 : i32 to index
    %c0_259 = arith.constant 0 : index
    %764 = vector.load %arg8[%763, %c0_259] : memref<16x128xf32, #tpu.memory_space<vmem>>, vector<2x128xf32>
    %765 = arith.truncf %751 : vector<2x32xf32> to vector<2x32xbf16>
    %c0_260 = arith.constant 0 : index
    %c0_261 = arith.constant 0 : index
    %766 = vector.load %arg4[%c0_260, %c0_261] : memref<32x128xbf16, #tpu.memory_space<vmem>>, vector<32x128xbf16>
    %cst_262 = arith.constant dense<0.000000e+00> : vector<2x128xf32>
    %767 = tpu.matmul %765, %766, %cst_262 {dimension_numbers = #tpu.dot_dimension_numbers<[1], [0], [0], [1], [0, 0, 1, 1], [], []>} : vector<2x32xbf16>, vector<32x128xbf16>, vector<2x128xf32> -> vector<2x128xf32>
    %768 = arith.addf %764, %767 : vector<2x128xf32>
    %c2_i32_263 = arith.constant 2 : i32
    %769 = arith.muli %761, %c2_i32_263 : i32
    %770 = arith.index_cast %769 : i32 to index
    %c0_264 = arith.constant 0 : index
    %771 = vector.load %arg9[%770, %c0_264] : memref<16x128xf32, #tpu.memory_space<vmem>>, vector<2x128xf32>
    %772 = arith.truncf %757 : vector<2x32xf32> to vector<2x32xbf16>
    %c0_265 = arith.constant 0 : index
    %c0_266 = arith.constant 0 : index
    %773 = vector.load %arg5[%c0_265, %c0_266] : memref<32x128xbf16, #tpu.memory_space<vmem>>, vector<32x128xbf16>
    %cst_267 = arith.constant dense<0.000000e+00> : vector<2x128xf32>
    %774 = tpu.matmul %772, %773, %cst_267 {dimension_numbers = #tpu.dot_dimension_numbers<[1], [0], [0], [1], [0, 0, 1, 1], [], []>} : vector<2x32xbf16>, vector<32x128xbf16>, vector<2x128xf32> -> vector<2x128xf32>
    %775 = arith.addf %771, %774 : vector<2x128xf32>
    %776 = vector.extract_strided_slice %768 {offsets = [0, 0], sizes = [2, 32], strides = [1, 1]} : vector<2x128xf32> to vector<2x32xf32>
    %cst_268 = arith.constant 5.000000e-01 : f32
    %777 = vector.broadcast %cst_268 : f32 to vector<2x32xf32>
    %778 = arith.mulf %777, %776 : vector<2x32xf32>
    %779 = math.tanh %778 : vector<2x32xf32>
    %cst_269 = arith.constant 5.000000e-01 : f32
    %780 = vector.broadcast %cst_269 : f32 to vector<2x32xf32>
    %781 = arith.mulf %780, %779 : vector<2x32xf32>
    %cst_270 = arith.constant 5.000000e-01 : f32
    %782 = vector.broadcast %cst_270 : f32 to vector<2x32xf32>
    %783 = arith.addf %781, %782 : vector<2x32xf32>
    %784 = vector.extract_strided_slice %768 {offsets = [0, 32], sizes = [2, 32], strides = [1, 1]} : vector<2x128xf32> to vector<2x32xf32>
    %cst_271 = arith.constant 5.000000e-01 : f32
    %785 = vector.broadcast %cst_271 : f32 to vector<2x32xf32>
    %786 = arith.mulf %785, %784 : vector<2x32xf32>
    %787 = math.tanh %786 : vector<2x32xf32>
    %cst_272 = arith.constant 5.000000e-01 : f32
    %788 = vector.broadcast %cst_272 : f32 to vector<2x32xf32>
    %789 = arith.mulf %788, %787 : vector<2x32xf32>
    %cst_273 = arith.constant 5.000000e-01 : f32
    %790 = vector.broadcast %cst_273 : f32 to vector<2x32xf32>
    %791 = arith.addf %789, %790 : vector<2x32xf32>
    %792 = vector.extract_strided_slice %768 {offsets = [0, 64], sizes = [2, 32], strides = [1, 1]} : vector<2x128xf32> to vector<2x32xf32>
    %793 = math.tanh %792 : vector<2x32xf32>
    %794 = vector.extract_strided_slice %768 {offsets = [0, 96], sizes = [2, 32], strides = [1, 1]} : vector<2x128xf32> to vector<2x32xf32>
    %cst_274 = arith.constant 5.000000e-01 : f32
    %795 = vector.broadcast %cst_274 : f32 to vector<2x32xf32>
    %796 = arith.mulf %795, %794 : vector<2x32xf32>
    %797 = math.tanh %796 : vector<2x32xf32>
    %cst_275 = arith.constant 5.000000e-01 : f32
    %798 = vector.broadcast %cst_275 : f32 to vector<2x32xf32>
    %799 = arith.mulf %798, %797 : vector<2x32xf32>
    %cst_276 = arith.constant 5.000000e-01 : f32
    %800 = vector.broadcast %cst_276 : f32 to vector<2x32xf32>
    %801 = arith.addf %799, %800 : vector<2x32xf32>
    %802 = arith.mulf %791, %754 : vector<2x32xf32>
    %803 = arith.mulf %783, %793 : vector<2x32xf32>
    %804 = arith.addf %802, %803 : vector<2x32xf32>
    %805 = math.tanh %804 : vector<2x32xf32>
    %806 = arith.mulf %801, %805 : vector<2x32xf32>
    %807 = vector.extract_strided_slice %775 {offsets = [0, 0], sizes = [2, 32], strides = [1, 1]} : vector<2x128xf32> to vector<2x32xf32>
    %cst_277 = arith.constant 5.000000e-01 : f32
    %808 = vector.broadcast %cst_277 : f32 to vector<2x32xf32>
    %809 = arith.mulf %808, %807 : vector<2x32xf32>
    %810 = math.tanh %809 : vector<2x32xf32>
    %cst_278 = arith.constant 5.000000e-01 : f32
    %811 = vector.broadcast %cst_278 : f32 to vector<2x32xf32>
    %812 = arith.mulf %811, %810 : vector<2x32xf32>
    %cst_279 = arith.constant 5.000000e-01 : f32
    %813 = vector.broadcast %cst_279 : f32 to vector<2x32xf32>
    %814 = arith.addf %812, %813 : vector<2x32xf32>
    %815 = vector.extract_strided_slice %775 {offsets = [0, 32], sizes = [2, 32], strides = [1, 1]} : vector<2x128xf32> to vector<2x32xf32>
    %cst_280 = arith.constant 5.000000e-01 : f32
    %816 = vector.broadcast %cst_280 : f32 to vector<2x32xf32>
    %817 = arith.mulf %816, %815 : vector<2x32xf32>
    %818 = math.tanh %817 : vector<2x32xf32>
    %cst_281 = arith.constant 5.000000e-01 : f32
    %819 = vector.broadcast %cst_281 : f32 to vector<2x32xf32>
    %820 = arith.mulf %819, %818 : vector<2x32xf32>
    %cst_282 = arith.constant 5.000000e-01 : f32
    %821 = vector.broadcast %cst_282 : f32 to vector<2x32xf32>
    %822 = arith.addf %820, %821 : vector<2x32xf32>
    %823 = vector.extract_strided_slice %775 {offsets = [0, 64], sizes = [2, 32], strides = [1, 1]} : vector<2x128xf32> to vector<2x32xf32>
    %824 = math.tanh %823 : vector<2x32xf32>
    %825 = vector.extract_strided_slice %775 {offsets = [0, 96], sizes = [2, 32], strides = [1, 1]} : vector<2x128xf32> to vector<2x32xf32>
    %cst_283 = arith.constant 5.000000e-01 : f32
    %826 = vector.broadcast %cst_283 : f32 to vector<2x32xf32>
    %827 = arith.mulf %826, %825 : vector<2x32xf32>
    %828 = math.tanh %827 : vector<2x32xf32>
    %cst_284 = arith.constant 5.000000e-01 : f32
    %829 = vector.broadcast %cst_284 : f32 to vector<2x32xf32>
    %830 = arith.mulf %829, %828 : vector<2x32xf32>
    %cst_285 = arith.constant 5.000000e-01 : f32
    %831 = vector.broadcast %cst_285 : f32 to vector<2x32xf32>
    %832 = arith.addf %830, %831 : vector<2x32xf32>
    %833 = arith.mulf %822, %760 : vector<2x32xf32>
    %834 = arith.mulf %814, %824 : vector<2x32xf32>
    %835 = arith.addf %833, %834 : vector<2x32xf32>
    %836 = math.tanh %835 : vector<2x32xf32>
    %837 = arith.mulf %832, %836 : vector<2x32xf32>
    %838 = vector.broadcast %c7_i32_256 : i32 to vector<2x1xi32>
    %839 = arith.cmpi slt, %838, %0 : vector<2x1xi32>
    %840 = vector.broadcast %761 : i32 to vector<2x1xi32>
    %841 = arith.cmpi slt, %840, %0 : vector<2x1xi32>
    %cst_286 = arith.constant 0.000000e+00 : f32
    %842 = vector.shape_cast %839 : vector<2x1xi1> to vector<2x1xi1>
    %843 = vector.broadcast %842 : vector<2x1xi1> to vector<2x32xi1>
    %844 = vector.broadcast %cst_286 : f32 to vector<2x32xf32>
    %845 = arith.select %843, %806, %844 : vector<2x32xi1>, vector<2x32xf32>
    %cst_287 = arith.constant 0.000000e+00 : f32
    %846 = vector.shape_cast %841 : vector<2x1xi1> to vector<2x1xi1>
    %847 = vector.broadcast %846 : vector<2x1xi1> to vector<2x32xi1>
    %848 = vector.broadcast %cst_287 : f32 to vector<2x32xf32>
    %849 = arith.select %847, %837, %848 : vector<2x32xi1>, vector<2x32xf32>
    %850 = vector.shape_cast %845 : vector<2x32xf32> to vector<2x1x32xf32>
    %c0_288 = arith.constant 0 : index
    %851 = arith.index_cast %c7_i32_256 : i32 to index
    %c0_289 = arith.constant 0 : index
    %852 = vector.load %arg10[%c0_288, %851, %c0_289] : memref<2x8x32xf32, #tpu.memory_space<vmem>>, vector<2x1x32xf32>
    tpu.vector_store %arg10[%c0_288, %851, %c0_289], %850 {strides = array<i32>} : memref<2x8x32xf32, #tpu.memory_space<vmem>>, vector<2x1x32xf32>,
    %853 = vector.shape_cast %849 : vector<2x32xf32> to vector<2x1x32xf32>
    %c0_290 = arith.constant 0 : index
    %854 = arith.index_cast %761 : i32 to index
    %c0_291 = arith.constant 0 : index
    %855 = vector.load %arg11[%c0_290, %854, %c0_291] : memref<2x8x32xf32, #tpu.memory_space<vmem>>, vector<2x1x32xf32>
    tpu.vector_store %arg11[%c0_290, %854, %c0_291], %853 {strides = array<i32>} : memref<2x8x32xf32, #tpu.memory_space<vmem>>, vector<2x1x32xf32>,
    %856 = vector.shape_cast %839 : vector<2x1xi1> to vector<2x1xi1>
    %857 = vector.broadcast %856 : vector<2x1xi1> to vector<2x32xi1>
    %858 = arith.select %857, %806, %751 : vector<2x32xi1>, vector<2x32xf32>
    %859 = vector.shape_cast %839 : vector<2x1xi1> to vector<2x1xi1>
    %860 = vector.broadcast %859 : vector<2x1xi1> to vector<2x32xi1>
    %861 = arith.select %860, %804, %754 : vector<2x32xi1>, vector<2x32xf32>
    %862 = vector.shape_cast %841 : vector<2x1xi1> to vector<2x1xi1>
    %863 = vector.broadcast %862 : vector<2x1xi1> to vector<2x32xi1>
    %864 = arith.select %863, %837, %757 : vector<2x32xi1>, vector<2x32xf32>
    %865 = vector.shape_cast %841 : vector<2x1xi1> to vector<2x1xi1>
    %866 = vector.broadcast %865 : vector<2x1xi1> to vector<2x32xi1>
    %867 = arith.select %866, %835, %760 : vector<2x32xi1>, vector<2x32xf32>
    %c8_i32 = arith.constant 8 : i32
    %c0_292 = arith.constant 0 : index
    %c0_293 = arith.constant 0 : index
    %c0_294 = arith.constant 0 : index
    %868 = vector.load %arg10[%c0_292, %c0_293, %c0_294] : memref<2x8x32xf32, #tpu.memory_space<vmem>>, vector<2x8x32xf32>
    %c0_295 = arith.constant 0 : index
    %c0_296 = arith.constant 0 : index
    %c0_297 = arith.constant 0 : index
    %869 = vector.load %arg11[%c0_295, %c0_296, %c0_297] : memref<2x8x32xf32, #tpu.memory_space<vmem>>, vector<2x8x32xf32>
    %870 = tpu.concatenate %868, %869 in 2 : vector<2x8x32xf32>, vector<2x8x32xf32> -> vector<2x8x64xf32>
    %c0_298 = arith.constant 0 : index
    %c0_299 = arith.constant 0 : index
    %c0_300 = arith.constant 0 : index
    %871 = vector.load %arg6[%c0_298, %c0_299, %c0_300] : memref<2x8x64xf32, #tpu.memory_space<vmem>>, vector<2x8x64xf32>
    tpu.vector_store %arg6[%c0_298, %c0_299, %c0_300], %870 {strides = array<i32>} : memref<2x8x64xf32, #tpu.memory_space<vmem>>, vector<2x8x64xf32>,
    %872 = tpu.concatenate %858, %864 in 1 : vector<2x32xf32>, vector<2x32xf32> -> vector<2x64xf32>
    %c0_301 = arith.constant 0 : index
    %c0_302 = arith.constant 0 : index
    %873 = vector.load %arg7[%c0_301, %c0_302] : memref<2x64xf32, #tpu.memory_space<vmem>>, vector<2x64xf32>
    tpu.vector_store %arg7[%c0_301, %c0_302], %872 {strides = array<i32>} : memref<2x64xf32, #tpu.memory_space<vmem>>, vector<2x64xf32>,
    return
  }
}

</mosaic_0001>

<llo_original>
// kernel: tpu_custom_call.1
$region0: #{tpu_custom_call.1}
  #allocation0 [shape = 'u32[]', space=smem, size = 0x4, offset = 0x4, fixed_abs, tag = 'smem constant byte address 0x4 - core index']
  #allocation1 [shape = 'u32[144,128]{1,0:T(1,128)}', space=vmem, size = 0x12000, scoped, tag = 'internal scratch']
  #allocation2 [shape = 'f32[16,128]{1,0:T(8,128)}', space=vmem, size = 0x2000, scoped, tag = 'scratch operand']
  #allocation3 [shape = 'f32[16,128]{1,0:T(8,128)}', space=vmem, size = 0x2000, scoped, tag = 'scratch operand']
  #allocation4 [shape = 'f32[2,8,32]{2,1,0:T(8,128)}', space=vmem, size = 0x2000, scoped, tag = 'scratch operand']
  #allocation5 [shape = 'f32[2,8,32]{2,1,0:T(8,128)}', space=vmem, size = 0x2000, scoped, tag = 'scratch operand']
  %s0 = inlined_call_operand.hbm [shape: bf16[16,16], index: 0, kind: input, shape index: {}]
  %s1 = inlined_call_operand.vmem [shape: s32[2,1], index: 1, kind: input, shape index: {}]
  %s2 = inlined_call_operand.hbm [shape: bf16[16,256], index: 2, kind: input, shape index: {}]
  %s3 = inlined_call_operand.vmem [shape: f32[1,256], index: 3, kind: input, shape index: {}]
  %s4 = inlined_call_operand.vmem [shape: bf16[32,128], index: 4, kind: input, shape index: {}]
  %s5 = inlined_call_operand.hbm [shape: bf16[32,128], index: 5, kind: input, shape index: {}]
  %s6 = inlined_call_operand.hbm [shape: f32[2,8,64], index: 6, kind: output, shape index: {0}]
  %s7 = inlined_call_operand.hbm [shape: f32[2,64], index: 7, kind: output, shape index: {1}]
  %8 = xla_tuple %s6, %s7
  %s9 = sld [smem:[#allocation0]]
  $region54: #{tpu_custom_call.1} parent=0
    _
  %s11 = ssub.s32 1, %s9
  %s12 = scalar_select 0, %s11, %s9
  $region1: #{tpu_custom_call.1} parent=0
    #allocation6 [shape = 'u8[4096]{0}', space=vmem, size = 0x1000, scoped, tag = 'input window, operand 0, single buffered']
    #allocation7 [shape = 's32[1]{0}', space=sflag, size = 0x4, scoped, tag = 'scoped memory for tpu_custom_call.1']
    #allocation8 [shape = 's32[1]{0}', space=sflag, size = 0x4, scoped, tag = 'scoped memory for tpu_custom_call.1']
    #allocation9 [shape = 'u8[8192]{0}', space=vmem, size = 0x2000, scoped, tag = 'input window, operand 2, single buffered']
    #allocation10 [shape = 's32[1]{0}', space=sflag, size = 0x4, scoped, tag = 'scoped memory for tpu_custom_call.1']
    #allocation11 [shape = 'u8[8192]{0}', space=vmem, size = 0x2000, scoped, tag = 'input window, operand 5, single buffered']
    #allocation12 [shape = 'u8[8192]{0}', space=vmem, size = 0x2000, scoped, tag = 'output window, operand 0, single buffered']
    #allocation13 [shape = 'u8[1024]{0}', space=vmem, size = 0x400, scoped, tag = 'output window, operand 1, single buffered']
    #allocation14 [shape = 's32[1]{0}', space=sflag, size = 0x4, scoped, tag = 'scoped memory for tpu_custom_call.1']
    %13 = vsyncpa [#allocation7], 0
    %14 = vsyncpa [#allocation10], 0
    %15 = vsyncpa [#allocation8], 0
    %16 = vsyncpa [#allocation14], 0
    // Predicated region
    $region2: #{tpu_custom_call.1} parent=1 // pred_check
      _
    $region3: #{tpu_custom_call.1} parent=1 // pred_check_branch
      %18 = sbr.rel (0) target = $region5
    $region4: #{tpu_custom_call.1} parent=1 // pred_region
      %s20 = ssub.s32 128, 128
      %21 = vsyncadd [#allocation7], %s20
      %s22 = sshll.u32 [#allocation6], 4
      %s23 = int_to_ptr.vmem [resolvable:$true] %s22
      %28 = dma.hbm_to_vmem [thread:$0]  %s0, 128, %s23, [#allocation7], 64, 64, 4
    $region5: #{tpu_custom_call.1} parent=1 // pred_fallthru
      _
    // Predicated region
    $region6: #{tpu_custom_call.1} parent=1 // pred_check
      _
    $region7: #{tpu_custom_call.1} parent=1 // pred_check_branch
      %30 = sbr.rel (0) target = $region9
    $region8: #{tpu_custom_call.1} parent=1 // pred_region
      _
    $region9: #{tpu_custom_call.1} parent=1 // pred_fallthru
      _
    // Predicated region
    $region10: #{tpu_custom_call.1} parent=1 // pred_check
      _
    $region11: #{tpu_custom_call.1} parent=1 // pred_check_branch
      %32 = sbr.rel (0) target = $region13
    $region12: #{tpu_custom_call.1} parent=1 // pred_region
      %s34 = ssub.s32 256, 256
      %35 = vsyncadd [#allocation10], %s34
      %s36 = sshll.u32 [#allocation9], 4
      %s37 = int_to_ptr.vmem [resolvable:$true] %s36
      %42 = dma.hbm_to_vmem [thread:$0]  %s2, 256, %s37, [#allocation10], 128, 128, 8
    $region13: #{tpu_custom_call.1} parent=1 // pred_fallthru
      _
    // Predicated region
    $region14: #{tpu_custom_call.1} parent=1 // pred_check
      _
    $region15: #{tpu_custom_call.1} parent=1 // pred_check_branch
      %44 = sbr.rel (0) target = $region17
    $region16: #{tpu_custom_call.1} parent=1 // pred_region
      _
    $region17: #{tpu_custom_call.1} parent=1 // pred_fallthru
      _
    // Predicated region
    $region18: #{tpu_custom_call.1} parent=1 // pred_check
      _
    $region19: #{tpu_custom_call.1} parent=1 // pred_check_branch
      %46 = sbr.rel (0) target = $region21
    $region20: #{tpu_custom_call.1} parent=1 // pred_region
      _
    $region21: #{tpu_custom_call.1} parent=1 // pred_fallthru
      _
    // Predicated region
    $region22: #{tpu_custom_call.1} parent=1 // pred_check
      _
    $region23: #{tpu_custom_call.1} parent=1 // pred_check_branch
      %48 = sbr.rel (0) target = $region25
    $region24: #{tpu_custom_call.1} parent=1 // pred_region
      %s50 = ssub.s32 256, 256
      %51 = vsyncadd [#allocation10], %s50
      %s52 = sshll.u32 [#allocation11], 4
      %s53 = int_to_ptr.vmem [resolvable:$true] %s52
      %58 = dma.hbm_to_vmem [thread:$0]  %s5, 256, %s53, [#allocation10], 64, 64, 4
    $region25: #{tpu_custom_call.1} parent=1 // pred_fallthru
      _
    // Predicated region
    $region26: #{tpu_custom_call.1} parent=1 // pred_check
      _
    $region27: #{tpu_custom_call.1} parent=1 // pred_check_branch
      %60 = sbr.rel (0) target = $region29
    $region28: #{tpu_custom_call.1} parent=1 // pred_region
      %61 = dma.done [#allocation7], 128
    $region29: #{tpu_custom_call.1} parent=1 // pred_fallthru
      _
    // Predicated region
    $region30: #{tpu_custom_call.1} parent=1 // pred_check
      _
    $region31: #{tpu_custom_call.1} parent=1 // pred_check_branch
      %63 = sbr.rel (0) target = $region33
    $region32: #{tpu_custom_call.1} parent=1 // pred_region
      %64 = dma.done [#allocation10], 256
    $region33: #{tpu_custom_call.1} parent=1 // pred_fallthru
      _
    // Predicated region
    $region34: #{tpu_custom_call.1} parent=1 // pred_check
      _
    $region35: #{tpu_custom_call.1} parent=1 // pred_check_branch
      %66 = sbr.rel (0) target = $region37
    $region36: #{tpu_custom_call.1} parent=1 // pred_region
      %67 = dma.done [#allocation10], 256
    $region37: #{tpu_custom_call.1} parent=1 // pred_fallthru
      _
    %v69 = vld [vmem:[%s1] sm:$0x3]
    %v70 = vld [vmem:[#allocation6] sm:$0xf]
    %v71 = vld [vmem:[#allocation6 + $0x4] sm:$0xf]
    %v72 = vld [vmem:[#allocation9] sm:$0xff]
    %v73 = vld [vmem:[#allocation9 + $0x8] sm:$0xff]
    %v74 = vld [vmem:[%s3] sm:$0x3]
    %v76 = vlaneseq
    %v77 = vshrl.u32 %v76, 7
    %v78 = vsub.s32 0, %v77
    %v79 = vrot.slane %v74, %v78
    %v80 = vlaneseq
    %v81 = vshrl.u32 %v80, 7
    %v82 = vsub.s32 1, %v81
    %v83 = vrot.slane %v74, %v82
    %v88 = vunpack.c.l.b16 %v70
    %v89 = vunpack.c.l.b16 %v71
    %v90 = vpack.c.b16 %v89, %v88
    %v93 = vunpack.c.l.b16 %v72
    %v94 = vunpack.c.h.b16 %v72
    %v95 = vunpack.c.l.b16 %v73
    %v96 = vunpack.c.h.b16 %v73
    %v97 = vpack.c.b16 %v95, %v93
    %v98 = vpack.c.b16 %v96, %v94
    %vm101 = vcmask 130048
    %v103 = vsel %vm101, %v90, 0
    %105 = vmatprep.subr.bf16.mxu0 %v98
    %106 = vmatpush1.bf16.msra.mxu0 %v97
    %107 = vmatprep.subr.bf16.mxu0 0
    %108 = vmatpush1.bf16.msra.mxu0 0
    %109 = vmatprep.subr.bf16.mxu0 0
    %110 = vmatpush1.bf16.msra.mxu0 0
    %111 = vmatprep.subr.bf16.mxu0 0
    %112 = vmatpush1.bf16.msra.mxu0 0
    %113 = vmatprep.subr.bf16.mxu0 0
    %114 = vmatpush1.bf16.msra.mxu0 0
    %115 = vmatprep.subr.bf16.mxu0 0
    %116 = vmatpush1.bf16.msra.mxu0 0
    %117 = vmatprep.subr.bf16.mxu0 0
    %118 = vmatpush1.bf16.msra.mxu0 0
    %119 = vmatprep.subr.bf16.mxu0 0
    %120 = vmatpush1.bf16.msra.mxu0 0
    %121 = vmatprep.subr.bf16.mxu0 0
    %122 = vmatpush1.bf16.msra.mxu0 0
    %123 = vmatprep.subr.bf16.mxu0 0
    %124 = vmatpush1.bf16.msra.mxu0 0
    %125 = vmatprep.subr.bf16.mxu0 0
    %126 = vmatpush1.bf16.msra.mxu0 0
    %127 = vmatprep.subr.bf16.mxu0 0
    %128 = vmatpush1.bf16.msra.mxu0 0
    %129 = vmatprep.subr.bf16.mxu0 0
    %130 = vmatpush1.bf16.msra.mxu0 0
    %131 = vmatprep.subr.bf16.mxu0 0
    %132 = vmatpush1.bf16.msra.mxu0 0
    %133 = vmatprep.subr.bf16.mxu0 0
    %134 = vmatpush1.bf16.msra.mxu0 0
    %135 = vmatprep.subr.bf16.mxu0 0
    %136 = vmatpush1.bf16.msra.mxu0 0
    %137 = vmatprep.mubr.bf16.mxu0 0
    %138 = vmatmul.mubr.bf16.gmra.mrb[0].mxu0 %v103
    %v139 = vpop.f32.mrb[0].mxu0
    %v140 = vadd.f32 %v79, %v139
    %v141 = vpop.f32.mrb[0].mxu0
    %v142 = vadd.f32 %v83, %v141
    %v143 = vpop.f32.mrb[0].mxu0
    %v144 = vadd.f32 %v79, %v143
    %v145 = vpop.f32.mrb[0].mxu0
    %v146 = vadd.f32 %v83, %v145
    %147 = vdwg.mxu0
    %148 = vst [vmem:[#allocation2] sm:$0xff] %v140
    %149 = vst [vmem:[#allocation2 + $0x8] sm:$0xff] %v144
    %150 = vst [vmem:[#allocation3] sm:$0xff] %v142
    %151 = vst [vmem:[#allocation3 + $0x8] sm:$0xff] %v146
    %v152 = vld [vmem:[#allocation2] sm:$0x3]
    %v153 = vld [vmem:[%s4] sm:$0xf]
    %v154 = vld [vmem:[%s4 + $0x4] sm:$0xf]
    %v155 = vld [vmem:[%s4 + $0x8] sm:$0xf]
    %v156 = vld [vmem:[%s4 + $0xc] sm:$0xf]
    %v161 = vunpack.c.l.b16 %v153
    %v162 = vunpack.c.l.b16 %v154
    %v163 = vunpack.c.l.b16 %v155
    %v164 = vunpack.c.l.b16 %v156
    %v165 = vpack.c.b16 %v162, %v161
    %v166 = vpack.c.b16 %v164, %v163
    %vm169 = vcmask 261120
    %v171 = vsel %vm169, 0, 0
    %173 = vmatprep.subr.bf16.mxu0 0
    %174 = vmatpush1.bf16.msra.mxu0 %v165
    %175 = vmatprep.subr.bf16.mxu0 0
    %176 = vmatpush1.bf16.msra.mxu0 %v166
    %177 = vmatprep.subr.bf16.mxu0 0
    %178 = vmatpush1.bf16.msra.mxu0 0
    %179 = vmatprep.subr.bf16.mxu0 0
    %180 = vmatpush1.bf16.msra.mxu0 0
    %181 = vmatprep.subr.bf16.mxu0 0
    %182 = vmatpush1.bf16.msra.mxu0 0
    %183 = vmatprep.subr.bf16.mxu0 0
    %184 = vmatpush1.bf16.msra.mxu0 0
    %185 = vmatprep.subr.bf16.mxu0 0
    %186 = vmatpush1.bf16.msra.mxu0 0
    %187 = vmatprep.subr.bf16.mxu0 0
    %188 = vmatpush1.bf16.msra.mxu0 0
    %189 = vmatprep.subr.bf16.mxu0 0
    %190 = vmatpush1.bf16.msra.mxu0 0
    %191 = vmatprep.subr.bf16.mxu0 0
    %192 = vmatpush1.bf16.msra.mxu0 0
    %193 = vmatprep.subr.bf16.mxu0 0
    %194 = vmatpush1.bf16.msra.mxu0 0
    %195 = vmatprep.subr.bf16.mxu0 0
    %196 = vmatpush1.bf16.msra.mxu0 0
    %197 = vmatprep.subr.bf16.mxu0 0
    %198 = vmatpush1.bf16.msra.mxu0 0
    %199 = vmatprep.subr.bf16.mxu0 0
    %200 = vmatpush1.bf16.msra.mxu0 0
    %201 = vmatprep.subr.bf16.mxu0 0
    %202 = vmatpush1.bf16.msra.mxu0 0
    %203 = vmatprep.subr.bf16.mxu0 0
    %204 = vmatpush1.bf16.msra.mxu0 0
    %205 = vmatprep.mubr.bf16.mxu0 0
    %206 = vmatmul.mubr.bf16.gmra.mrb[0].mxu0 %v171
    %v207 = vpop.f32.mrb[0].mxu0
    %v208 = vadd.f32 0.0, %v207
    %v209 = vpop.f32.mrb[0].mxu0
    %v210 = vpop.f32.mrb[0].mxu0
    %v211 = vpop.f32.mrb[0].mxu0
    %212 = vdwg.mxu0
    %v213 = vadd.f32 %v152, %v208
    %v214 = vld [vmem:[#allocation3 + $0xe] sm:$0x3]
    %v215 = vld [vmem:[#allocation11] sm:$0xf]
    %v216 = vld [vmem:[#allocation11 + $0x4] sm:$0xf]
    %v217 = vld [vmem:[#allocation11 + $0x8] sm:$0xf]
    %v218 = vld [vmem:[#allocation11 + $0xc] sm:$0xf]
    %v223 = vunpack.c.l.b16 %v215
    %v224 = vunpack.c.l.b16 %v216
    %v225 = vunpack.c.l.b16 %v217
    %v226 = vunpack.c.l.b16 %v218
    %v227 = vpack.c.b16 %v224, %v223
    %v228 = vpack.c.b16 %v226, %v225
    %231 = vmatprep.subr.bf16.mxu0 0
    %232 = vmatpush1.bf16.msra.mxu0 %v227
    %233 = vmatprep.subr.bf16.mxu0 0
    %234 = vmatpush1.bf16.msra.mxu0 %v228
    %235 = vmatprep.subr.bf16.mxu0 0
    %236 = vmatpush1.bf16.msra.mxu0 0
    %237 = vmatprep.subr.bf16.mxu0 0
    %238 = vmatpush1.bf16.msra.mxu0 0
    %239 = vmatprep.subr.bf16.mxu0 0
    %240 = vmatpush1.bf16.msra.mxu0 0
    %241 = vmatprep.subr.bf16.mxu0 0
    %242 = vmatpush1.bf16.msra.mxu0 0
    %243 = vmatprep.subr.bf16.mxu0 0
    %244 = vmatpush1.bf16.msra.mxu0 0
    %245 = vmatprep.subr.bf16.mxu0 0
    %246 = vmatpush1.bf16.msra.mxu0 0
    %247 = vmatprep.subr.bf16.mxu0 0
    %248 = vmatpush1.bf16.msra.mxu0 0
    %249 = vmatprep.subr.bf16.mxu0 0
    %250 = vmatpush1.bf16.msra.mxu0 0
    %251 = vmatprep.subr.bf16.mxu0 0
    %252 = vmatpush1.bf16.msra.mxu0 0
    %253 = vmatprep.subr.bf16.mxu0 0
    %254 = vmatpush1.bf16.msra.mxu0 0
    %255 = vmatprep.subr.bf16.mxu0 0
    %256 = vmatpush1.bf16.msra.mxu0 0
    %257 = vmatprep.subr.bf16.mxu0 0
    %258 = vmatpush1.bf16.msra.mxu0 0
    %259 = vmatprep.subr.bf16.mxu0 0
    %260 = vmatpush1.bf16.msra.mxu0 0
    %261 = vmatprep.subr.bf16.mxu0 0
    %262 = vmatpush1.bf16.msra.mxu0 0
    %263 = vmatprep.mubr.bf16.mxu0 0
    %264 = vmatmul.mubr.bf16.gmra.mrb[0].mxu0 %v171
    %v265 = vpop.f32.mrb[0].mxu0
    %v266 = vadd.f32 0.0, %v265
    %v267 = vpop.f32.mrb[0].mxu0
    %v268 = vpop.f32.mrb[0].mxu0
    %v269 = vpop.f32.mrb[0].mxu0
    %270 = vdwg.mxu0
    %v271 = vadd.f32 %v214, %v266
    %v272 = vmul.f32 %v213, 0.5
    %v273 = vtanh.pop %v272
    %v274 = vmul.f32 %v273, 0.5
    %v275 = vadd.f32 %v274, 0.5
    %v276 = vtanh.pop %v213
    %v277 = vmul.f32 %v275, 0.0
    %279 = vrot.lane.b32.xlu0 %v276, 64
    %v280 = vpop.permute.xlu0 %279
    %v282 = vmul.f32 %v275, %v280
    %284 = vrot.lane.b32.xlu0 %v282, 32
    %v285 = vpop.permute.xlu0 %284
    %v287 = vadd.f32 %v277, %v285
    %v288 = vtanh.pop %v287
    %290 = vrot.lane.b32.xlu0 %v288, 64
    %v291 = vpop.permute.xlu0 %290
    %v293 = vmul.f32 %v275, %v291
    %v294 = vmul.f32 %v271, 0.5
    %v295 = vtanh.pop %v294
    %v296 = vmul.f32 %v295, 0.5
    %v297 = vadd.f32 %v296, 0.5
    %v298 = vtanh.pop %v271
    %v299 = vmul.f32 %v297, 0.0
    %301 = vrot.lane.b32.xlu0 %v298, 64
    %v302 = vpop.permute.xlu0 %301
    %v304 = vmul.f32 %v297, %v302
    %306 = vrot.lane.b32.xlu0 %v304, 32
    %v307 = vpop.permute.xlu0 %306
    %v309 = vadd.f32 %v299, %v307
    %v310 = vtanh.pop %v309
    %312 = vrot.lane.b32.xlu0 %v310, 64
    %v313 = vpop.permute.xlu0 %312
    %v315 = vmul.f32 %v297, %v313
    %vm316 = vcmp.gt.s32.totalorder %v69, 0
    %vm317 = vcmp.gt.s32.totalorder %v69, 7
    %v318 = vsel %vm316, 1, 0
    %319 = vset.pattern.permute.xlu0 0
    %320 = vperm.xlu0 %319, %v318
    %v321 = vpop.permute.xlu0 %320
    %vm322 = vcmp.eq.s32.totalorder %v321, 1
    %v323 = vsel %vm322, %v293, 0.0
    %v324 = vsel %vm317, 1, 0
    %325 = vset.pattern.permute.xlu0 0
    %326 = vperm.xlu0 %325, %v324
    %v327 = vpop.permute.xlu0 %326
    %vm328 = vcmp.eq.s32.totalorder %v327, 1
    %v329 = vsel %vm328, %v315, 0.0
    %v332 = vunpack.c.l.s4 1966171168
    %v333 = vunpack.c.0.s8 %v332
    %v334 = vlaneseq
    %v335 = vshrl.u32 %v334, 7
    %v336 = vsub.s32 %v333, %v335
    %v337 = vrot.slane %v323, %v336
    %v338 = vcombine.high %v337, %v337
    %v340 = vunpack.c.l.s4 1966171168
    %v341 = vunpack.c.0.s8 %v340
    %v342 = vlaneseq
    %v343 = vshrl.u32 %v342, 7
    %v344 = vsub.s32 %v341, %v343
    %v345 = vrot.slane %v337, %v344
    %v347 = vunpack.c.l.s4 1966171168
    %v348 = vunpack.c.0.s8 %v347
    %v349 = vlaneseq
    %v350 = vshrl.u32 %v349, 7
    %v351 = vsub.s32 %v348, %v350
    %v352 = vrot.slane %v338, %v351
    %v353 = vlaneseq
    %v354 = vshrl.u32 %v353, 7
    %v355 = vsub.s32 0, %v354
    %v356 = vrot.slane %v345, %v355
    %v357 = vlaneseq
    %v358 = vshrl.u32 %v357, 7
    %v359 = vsub.s32 0, %v358
    %v360 = vrot.slane %v352, %v359
    %361 = vrot.lane.b32.xlu0 %v356, 32
    %v362 = vpop.permute.xlu0 %361
    %363 = vrot.lane.b32.xlu0 %v360, 32
    %v364 = vpop.permute.xlu0 %363
    %vm367 = vcmask 253952
    %368 = vst.msk [vmem:[#allocation4] sm:$0x1] %vm367, %v362
    %369 = vst.msk [vmem:[#allocation4 + $0x8] sm:$0x1] %vm367, %v364
    %v372 = vunpack.c.l.s4 1966171168
    %v373 = vunpack.c.0.s8 %v372
    %v374 = vlaneseq
    %v375 = vshrl.u32 %v374, 7
    %v376 = vsub.s32 %v373, %v375
    %v377 = vrot.slane %v329, %v376
    %v378 = vcombine.high %v377, %v377
    %v380 = vunpack.c.l.s4 1966171168
    %v381 = vunpack.c.0.s8 %v380
    %v382 = vlaneseq
    %v383 = vshrl.u32 %v382, 7
    %v384 = vsub.s32 %v381, %v383
    %v385 = vrot.slane %v377, %v384
    %v387 = vunpack.c.l.s4 1966171168
    %v388 = vunpack.c.0.s8 %v387
    %v389 = vlaneseq
    %v390 = vshrl.u32 %v389, 7
    %v391 = vsub.s32 %v388, %v390
    %v392 = vrot.slane %v378, %v391
    %v393 = vlaneseq
    %v394 = vshrl.u32 %v393, 7
    %v395 = vsub.s32 0, %v394
    %v396 = vrot.slane %v385, %v395
    %v397 = vlaneseq
    %v398 = vshrl.u32 %v397, 7
    %v399 = vsub.s32 0, %v398
    %v400 = vrot.slane %v392, %v399
    %401 = vrot.lane.b32.xlu0 %v396, 32
    %v402 = vpop.permute.xlu0 %401
    %403 = vrot.lane.b32.xlu0 %v400, 32
    %v404 = vpop.permute.xlu0 %403
    %407 = vst.msk [vmem:[#allocation5 + $0x7] sm:$0x1] %vm367, %v402
    %408 = vst.msk [vmem:[#allocation5 + $0xf] sm:$0x1] %vm367, %v404
    %v409 = vsel %vm322, %v287, 0.0
    %v410 = vsel %vm328, %v309, 0.0
    %v411 = vld [vmem:[#allocation2 + $0x2] sm:$0x3]
    %v412 = vpack.c.bf16 %v323, %v323
    %v413 = vld [vmem:[%s4] sm:$0xf]
    %v414 = vld [vmem:[%s4 + $0x4] sm:$0xf]
    %v415 = vld [vmem:[%s4 + $0x8] sm:$0xf]
    %v416 = vld [vmem:[%s4 + $0xc] sm:$0xf]
    %418 = vrot.lane.b32.xlu0 %v412, 32
    %v419 = vpop.permute.xlu0 %418
    %v424 = vunpack.c.l.b16 %v413
    %v425 = vunpack.c.l.b16 %v414
    %v426 = vunpack.c.l.b16 %v415
    %v427 = vunpack.c.l.b16 %v416
    %v428 = vpack.c.b16 %v425, %v424
    %v429 = vpack.c.b16 %v427, %v426
    %v433 = vsel %vm169, %v419, 0
    %435 = vmatprep.subr.bf16.mxu0 0
    %436 = vmatpush1.bf16.msra.mxu0 %v428
    %437 = vmatprep.subr.bf16.mxu0 0
    %438 = vmatpush1.bf16.msra.mxu0 %v429
    %439 = vmatprep.subr.bf16.mxu0 0
    %440 = vmatpush1.bf16.msra.mxu0 0
    %441 = vmatprep.subr.bf16.mxu0 0
    %442 = vmatpush1.bf16.msra.mxu0 0
    %443 = vmatprep.subr.bf16.mxu0 0
    %444 = vmatpush1.bf16.msra.mxu0 0
    %445 = vmatprep.subr.bf16.mxu0 0
    %446 = vmatpush1.bf16.msra.mxu0 0
    %447 = vmatprep.subr.bf16.mxu0 0
    %448 = vmatpush1.bf16.msra.mxu0 0
    %449 = vmatprep.subr.bf16.mxu0 0
    %450 = vmatpush1.bf16.msra.mxu0 0
    %451 = vmatprep.subr.bf16.mxu0 0
    %452 = vmatpush1.bf16.msra.mxu0 0
    %453 = vmatprep.subr.bf16.mxu0 0
    %454 = vmatpush1.bf16.msra.mxu0 0
    %455 = vmatprep.subr.bf16.mxu0 0
    %456 = vmatpush1.bf16.msra.mxu0 0
    %457 = vmatprep.subr.bf16.mxu0 0
    %458 = vmatpush1.bf16.msra.mxu0 0
    %459 = vmatprep.subr.bf16.mxu0 0
    %460 = vmatpush1.bf16.msra.mxu0 0
    %461 = vmatprep.subr.bf16.mxu0 0
    %462 = vmatpush1.bf16.msra.mxu0 0
    %463 = vmatprep.subr.bf16.mxu0 0
    %464 = vmatpush1.bf16.msra.mxu0 0
    %465 = vmatprep.subr.bf16.mxu0 0
    %466 = vmatpush1.bf16.msra.mxu0 0
    %467 = vmatprep.mubr.bf16.mxu0 0
    %468 = vmatmul.mubr.bf16.gmra.mrb[0].mxu0 %v433
    %v469 = vpop.f32.mrb[0].mxu0
    %v470 = vadd.f32 0.0, %v469
    %v471 = vpop.f32.mrb[0].mxu0
    %v472 = vpop.f32.mrb[0].mxu0
    %v473 = vpop.f32.mrb[0].mxu0
    %474 = vdwg.mxu0
    %v475 = vadd.f32 %v411, %v470
    %v476 = vld [vmem:[#allocation3 + $0xc] sm:$0x3]
    %v477 = vpack.c.bf16 %v329, %v329
    %v478 = vld [vmem:[#allocation11] sm:$0xf]
    %v479 = vld [vmem:[#allocation11 + $0x4] sm:$0xf]
    %v480 = vld [vmem:[#allocation11 + $0x8] sm:$0xf]
    %v481 = vld [vmem:[#allocation11 + $0xc] sm:$0xf]
    %483 = vrot.lane.b32.xlu0 %v477, 32
    %v484 = vpop.permute.xlu0 %483
    %v489 = vunpack.c.l.b16 %v478
    %v490 = vunpack.c.l.b16 %v479
    %v491 = vunpack.c.l.b16 %v480
    %v492 = vunpack.c.l.b16 %v481
    %v493 = vpack.c.b16 %v490, %v489
    %v494 = vpack.c.b16 %v492, %v491
    %v498 = vsel %vm169, %v484, 0
    %500 = vmatprep.subr.bf16.mxu0 0
    %501 = vmatpush1.bf16.msra.mxu0 %v493
    %502 = vmatprep.subr.bf16.mxu0 0
    %503 = vmatpush1.bf16.msra.mxu0 %v494
    %504 = vmatprep.subr.bf16.mxu0 0
    %505 = vmatpush1.bf16.msra.mxu0 0
    %506 = vmatprep.subr.bf16.mxu0 0
    %507 = vmatpush1.bf16.msra.mxu0 0
    %508 = vmatprep.subr.bf16.mxu0 0
    %509 = vmatpush1.bf16.msra.mxu0 0
    %510 = vmatprep.subr.bf16.mxu0 0
    %511 = vmatpush1.bf16.msra.mxu0 0
    %512 = vmatprep.subr.bf16.mxu0 0
    %513 = vmatpush1.bf16.msra.mxu0 0
    %514 = vmatprep.subr.bf16.mxu0 0
    %515 = vmatpush1.bf16.msra.mxu0 0
    %516 = vmatprep.subr.bf16.mxu0 0
    %517 = vmatpush1.bf16.msra.mxu0 0
    %518 = vmatprep.subr.bf16.mxu0 0
    %519 = vmatpush1.bf16.msra.mxu0 0
    %520 = vmatprep.subr.bf16.mxu0 0
    %521 = vmatpush1.bf16.msra.mxu0 0
    %522 = vmatprep.subr.bf16.mxu0 0
    %523 = vmatpush1.bf16.msra.mxu0 0
    %524 = vmatprep.subr.bf16.mxu0 0
    %525 = vmatpush1.bf16.msra.mxu0 0
    %526 = vmatprep.subr.bf16.mxu0 0
    %527 = vmatpush1.bf16.msra.mxu0 0
    %528 = vmatprep.subr.bf16.mxu0 0
    %529 = vmatpush1.bf16.msra.mxu0 0
    %530 = vmatprep.subr.bf16.mxu0 0
    %531 = vmatpush1.bf16.msra.mxu0 0
    %532 = vmatprep.mubr.bf16.mxu0 0
    %533 = vmatmul.mubr.bf16.gmra.mrb[0].mxu0 %v498
    %v534 = vpop.f32.mrb[0].mxu0
    %v535 = vadd.f32 0.0, %v534
    %v536 = vpop.f32.mrb[0].mxu0
    %v537 = vpop.f32.mrb[0].mxu0
    %v538 = vpop.f32.mrb[0].mxu0
    %539 = vdwg.mxu0
    %v540 = vadd.f32 %v476, %v535
    %v541 = vmul.f32 %v475, 0.5
    %v542 = vtanh.pop %v541
    %v543 = vmul.f32 %v542, 0.5
    %v544 = vadd.f32 %v543, 0.5
    %v545 = vtanh.pop %v475
    %v546 = vmul.f32 %v544, %v409
    %548 = vrot.lane.b32.xlu0 %v545, 64
    %v549 = vpop.permute.xlu0 %548
    %v551 = vmul.f32 %v544, %v549
    %553 = vrot.lane.b32.xlu0 %v551, 32
    %v554 = vpop.permute.xlu0 %553
    %v556 = vadd.f32 %v546, %v554
    %v557 = vtanh.pop %v556
    %559 = vrot.lane.b32.xlu0 %v557, 64
    %v560 = vpop.permute.xlu0 %559
    %v562 = vmul.f32 %v544, %v560
    %v563 = vmul.f32 %v540, 0.5
    %v564 = vtanh.pop %v563
    %v565 = vmul.f32 %v564, 0.5
    %v566 = vadd.f32 %v565, 0.5
    %v567 = vtanh.pop %v540
    %v568 = vmul.f32 %v566, %v410
    %570 = vrot.lane.b32.xlu0 %v567, 64
    %v571 = vpop.permute.xlu0 %570
    %v573 = vmul.f32 %v566, %v571
    %575 = vrot.lane.b32.xlu0 %v573, 32
    %v576 = vpop.permute.xlu0 %575
    %v578 = vadd.f32 %v568, %v576
    %v579 = vtanh.pop %v578
    %581 = vrot.lane.b32.xlu0 %v579, 64
    %v582 = vpop.permute.xlu0 %581
    %v584 = vmul.f32 %v566, %v582
    %vm585 = vcmp.gt.s32.totalorder %v69, 1
    %vm586 = vcmp.gt.s32.totalorder %v69, 6
    %v587 = vsel %vm585, 1, 0
    %588 = vset.pattern.permute.xlu0 0
    %589 = vperm.xlu0 %588, %v587
    %v590 = vpop.permute.xlu0 %589
    %vm591 = vcmp.eq.s32.totalorder %v590, 1
    %v592 = vsel %vm591, %v562, 0.0
    %v593 = vsel %vm586, 1, 0
    %594 = vset.pattern.permute.xlu0 0
    %595 = vperm.xlu0 %594, %v593
    %v596 = vpop.permute.xlu0 %595
    %vm597 = vcmp.eq.s32.totalorder %v596, 1
    %v598 = vsel %vm597, %v584, 0.0
    %v601 = vunpack.c.l.s4 1966171168
    %v602 = vunpack.c.0.s8 %v601
    %v603 = vlaneseq
    %v604 = vshrl.u32 %v603, 7
    %v605 = vsub.s32 %v602, %v604
    %v606 = vrot.slane %v592, %v605
    %v607 = vcombine.high %v606, %v606
    %v609 = vunpack.c.l.s4 1966171168
    %v610 = vunpack.c.0.s8 %v609
    %v611 = vlaneseq
    %v612 = vshrl.u32 %v611, 7
    %v613 = vsub.s32 %v610, %v612
    %v614 = vrot.slane %v606, %v613
    %v616 = vunpack.c.l.s4 1966171168
    %v617 = vunpack.c.0.s8 %v616
    %v618 = vlaneseq
    %v619 = vshrl.u32 %v618, 7
    %v620 = vsub.s32 %v617, %v619
    %v621 = vrot.slane %v607, %v620
    %v622 = vlaneseq
    %v623 = vshrl.u32 %v622, 7
    %v624 = vsub.s32 0, %v623
    %v625 = vrot.slane %v614, %v624
    %v626 = vlaneseq
    %v627 = vshrl.u32 %v626, 7
    %v628 = vsub.s32 0, %v627
    %v629 = vrot.slane %v621, %v628
    %630 = vrot.lane.b32.xlu0 %v625, 32
    %v631 = vpop.permute.xlu0 %630
    %632 = vrot.lane.b32.xlu0 %v629, 32
    %v633 = vpop.permute.xlu0 %632
    %636 = vst.msk [vmem:[#allocation4 + $0x1] sm:$0x1] %vm367, %v631
    %637 = vst.msk [vmem:[#allocation4 + $0x9] sm:$0x1] %vm367, %v633
    %v640 = vunpack.c.l.s4 1966171168
    %v641 = vunpack.c.0.s8 %v640
    %v642 = vlaneseq
    %v643 = vshrl.u32 %v642, 7
    %v644 = vsub.s32 %v641, %v643
    %v645 = vrot.slane %v598, %v644
    %v646 = vcombine.high %v645, %v645
    %v648 = vunpack.c.l.s4 1966171168
    %v649 = vunpack.c.0.s8 %v648
    %v650 = vlaneseq
    %v651 = vshrl.u32 %v650, 7
    %v652 = vsub.s32 %v649, %v651
    %v653 = vrot.slane %v645, %v652
    %v655 = vunpack.c.l.s4 1966171168
    %v656 = vunpack.c.0.s8 %v655
    %v657 = vlaneseq
    %v658 = vshrl.u32 %v657, 7
    %v659 = vsub.s32 %v656, %v658
    %v660 = vrot.slane %v646, %v659
    %v661 = vlaneseq
    %v662 = vshrl.u32 %v661, 7
    %v663 = vsub.s32 0, %v662
    %v664 = vrot.slane %v653, %v663
    %v665 = vlaneseq
    %v666 = vshrl.u32 %v665, 7
    %v667 = vsub.s32 0, %v666
    %v668 = vrot.slane %v660, %v667
    %669 = vrot.lane.b32.xlu0 %v664, 32
    %v670 = vpop.permute.xlu0 %669
    %671 = vrot.lane.b32.xlu0 %v668, 32
    %v672 = vpop.permute.xlu0 %671
    %675 = vst.msk [vmem:[#allocation5 + $0x6] sm:$0x1] %vm367, %v670
    %676 = vst.msk [vmem:[#allocation5 + $0xe] sm:$0x1] %vm367, %v672
    %v677 = vsel %vm591, %v562, %v323
    %v678 = vsel %vm591, %v556, %v409
    %v679 = vsel %vm597, %v584, %v329
    %v680 = vsel %vm597, %v578, %v410
    %v681 = vld [vmem:[#allocation2 + $0x4] sm:$0x3]
    %v682 = vpack.c.bf16 %v677, %v677
    %v683 = vld [vmem:[%s4] sm:$0xf]
    %v684 = vld [vmem:[%s4 + $0x4] sm:$0xf]
    %v685 = vld [vmem:[%s4 + $0x8] sm:$0xf]
    %v686 = vld [vmem:[%s4 + $0xc] sm:$0xf]
    %688 = vrot.lane.b32.xlu0 %v682, 32
    %v689 = vpop.permute.xlu0 %688
    %v694 = vunpack.c.l.b16 %v683
    %v695 = vunpack.c.l.b16 %v684
    %v696 = vunpack.c.l.b16 %v685
    %v697 = vunpack.c.l.b16 %v686
    %v698 = vpack.c.b16 %v695, %v694
    %v699 = vpack.c.b16 %v697, %v696
    %v703 = vsel %vm169, %v689, 0
    %705 = vmatprep.subr.bf16.mxu0 0
    %706 = vmatpush1.bf16.msra.mxu0 %v698
    %707 = vmatprep.subr.bf16.mxu0 0
    %708 = vmatpush1.bf16.msra.mxu0 %v699
    %709 = vmatprep.subr.bf16.mxu0 0
    %710 = vmatpush1.bf16.msra.mxu0 0
    %711 = vmatprep.subr.bf16.mxu0 0
    %712 = vmatpush1.bf16.msra.mxu0 0
    %713 = vmatprep.subr.bf16.mxu0 0
    %714 = vmatpush1.bf16.msra.mxu0 0
    %715 = vmatprep.subr.bf16.mxu0 0
    %716 = vmatpush1.bf16.msra.mxu0 0
    %717 = vmatprep.subr.bf16.mxu0 0
    %718 = vmatpush1.bf16.msra.mxu0 0
    %719 = vmatprep.subr.bf16.mxu0 0
    %720 = vmatpush1.bf16.msra.mxu0 0
    %721 = vmatprep.subr.bf16.mxu0 0
    %722 = vmatpush1.bf16.msra.mxu0 0
    %723 = vmatprep.subr.bf16.mxu0 0
    %724 = vmatpush1.bf16.msra.mxu0 0
    %725 = vmatprep.subr.bf16.mxu0 0
    %726 = vmatpush1.bf16.msra.mxu0 0
    %727 = vmatprep.subr.bf16.mxu0 0
    %728 = vmatpush1.bf16.msra.mxu0 0
    %729 = vmatprep.subr.bf16.mxu0 0
    %730 = vmatpush1.bf16.msra.mxu0 0
    %731 = vmatprep.subr.bf16.mxu0 0
    %732 = vmatpush1.bf16.msra.mxu0 0
    %733 = vmatprep.subr.bf16.mxu0 0
    %734 = vmatpush1.bf16.msra.mxu0 0
    %735 = vmatprep.subr.bf16.mxu0 0
    %736 = vmatpush1.bf16.msra.mxu0 0
    %737 = vmatprep.mubr.bf16.mxu0 0
    %738 = vmatmul.mubr.bf16.gmra.mrb[0].mxu0 %v703
    %v739 = vpop.f32.mrb[0].mxu0
    %v740 = vadd.f32 0.0, %v739
    %v741 = vpop.f32.mrb[0].mxu0
    %v742 = vpop.f32.mrb[0].mxu0
    %v743 = vpop.f32.mrb[0].mxu0
    %744 = vdwg.mxu0
    %v745 = vadd.f32 %v681, %v740
    %v746 = vld [vmem:[#allocation3 + $0xa] sm:$0x3]
    %v747 = vpack.c.bf16 %v679, %v679
    %v748 = vld [vmem:[#allocation11] sm:$0xf]
    %v749 = vld [vmem:[#allocation11 + $0x4] sm:$0xf]
    %v750 = vld [vmem:[#allocation11 + $0x8] sm:$0xf]
    %v751 = vld [vmem:[#allocation11 + $0xc] sm:$0xf]
    %753 = vrot.lane.b32.xlu0 %v747, 32
    %v754 = vpop.permute.xlu0 %753
    %v759 = vunpack.c.l.b16 %v748
    %v760 = vunpack.c.l.b16 %v749
    %v761 = vunpack.c.l.b16 %v750
    %v762 = vunpack.c.l.b16 %v751
    %v763 = vpack.c.b16 %v760, %v759
    %v764 = vpack.c.b16 %v762, %v761
    %v768 = vsel %vm169, %v754, 0
    %770 = vmatprep.subr.bf16.mxu0 0
    %771 = vmatpush1.bf16.msra.mxu0 %v763
    %772 = vmatprep.subr.bf16.mxu0 0
    %773 = vmatpush1.bf16.msra.mxu0 %v764
    %774 = vmatprep.subr.bf16.mxu0 0
    %775 = vmatpush1.bf16.msra.mxu0 0
    %776 = vmatprep.subr.bf16.mxu0 0
    %777 = vmatpush1.bf16.msra.mxu0 0
    %778 = vmatprep.subr.bf16.mxu0 0
    %779 = vmatpush1.bf16.msra.mxu0 0
    %780 = vmatprep.subr.bf16.mxu0 0
    %781 = vmatpush1.bf16.msra.mxu0 0
    %782 = vmatprep.subr.bf16.mxu0 0
    %783 = vmatpush1.bf16.msra.mxu0 0
    %784 = vmatprep.subr.bf16.mxu0 0
    %785 = vmatpush1.bf16.msra.mxu0 0
    %786 = vmatprep.subr.bf16.mxu0 0
    %787 = vmatpush1.bf16.msra.mxu0 0
    %788 = vmatprep.subr.bf16.mxu0 0
    %789 = vmatpush1.bf16.msra.mxu0 0
    %790 = vmatprep.subr.bf16.mxu0 0
    %791 = vmatpush1.bf16.msra.mxu0 0
    %792 = vmatprep.subr.bf16.mxu0 0
    %793 = vmatpush1.bf16.msra.mxu0 0
    %794 = vmatprep.subr.bf16.mxu0 0
    %795 = vmatpush1.bf16.msra.mxu0 0
    %796 = vmatprep.subr.bf16.mxu0 0
    %797 = vmatpush1.bf16.msra.mxu0 0
    %798 = vmatprep.subr.bf16.mxu0 0
    %799 = vmatpush1.bf16.msra.mxu0 0
    %800 = vmatprep.subr.bf16.mxu0 0
    %801 = vmatpush1.bf16.msra.mxu0 0
    %802 = vmatprep.mubr.bf16.mxu0 0
    %803 = vmatmul.mubr.bf16.gmra.mrb[0].mxu0 %v768
    %v804 = vpop.f32.mrb[0].mxu0
    %v805 = vadd.f32 0.0, %v804
    %v806 = vpop.f32.mrb[0].mxu0
    %v807 = vpop.f32.mrb[0].mxu0
    %v808 = vpop.f32.mrb[0].mxu0
    %809 = vdwg.mxu0
    %v810 = vadd.f32 %v746, %v805
    %v811 = vmul.f32 %v745, 0.5
    %v812 = vtanh.pop %v811
    %v813 = vmul.f32 %v812, 0.5
    %v814 = vadd.f32 %v813, 0.5
    %v815 = vtanh.pop %v745
    %v816 = vmul.f32 %v814, %v678
    %818 = vrot.lane.b32.xlu0 %v815, 64
    %v819 = vpop.permute.xlu0 %818
    %v821 = vmul.f32 %v814, %v819
    %823 = vrot.lane.b32.xlu0 %v821, 32
    %v824 = vpop.permute.xlu0 %823
    %v826 = vadd.f32 %v816, %v824
    %v827 = vtanh.pop %v826
    %829 = vrot.lane.b32.xlu0 %v827, 64
    %v830 = vpop.permute.xlu0 %829
    %v832 = vmul.f32 %v814, %v830
    %v833 = vmul.f32 %v810, 0.5
    %v834 = vtanh.pop %v833
    %v835 = vmul.f32 %v834, 0.5
    %v836 = vadd.f32 %v835, 0.5
    %v837 = vtanh.pop %v810
    %v838 = vmul.f32 %v836, %v680
    %840 = vrot.lane.b32.xlu0 %v837, 64
    %v841 = vpop.permute.xlu0 %840
    %v843 = vmul.f32 %v836, %v841
    %845 = vrot.lane.b32.xlu0 %v843, 32
    %v846 = vpop.permute.xlu0 %845
    %v848 = vadd.f32 %v838, %v846
    %v849 = vtanh.pop %v848
    %851 = vrot.lane.b32.xlu0 %v849, 64
    %v852 = vpop.permute.xlu0 %851
    %v854 = vmul.f32 %v836, %v852
    %vm855 = vcmp.gt.s32.totalorder %v69, 2
    %vm856 = vcmp.gt.s32.totalorder %v69, 5
    %v857 = vsel %vm855, 1, 0
    %858 = vset.pattern.permute.xlu0 0
    %859 = vperm.xlu0 %858, %v857
    %v860 = vpop.permute.xlu0 %859
    %vm861 = vcmp.eq.s32.totalorder %v860, 1
    %v862 = vsel %vm861, %v832, 0.0
    %v863 = vsel %vm856, 1, 0
    %864 = vset.pattern.permute.xlu0 0
    %865 = vperm.xlu0 %864, %v863
    %v866 = vpop.permute.xlu0 %865
    %vm867 = vcmp.eq.s32.totalorder %v866, 1
    %v868 = vsel %vm867, %v854, 0.0
    %v871 = vunpack.c.l.s4 1966171168
    %v872 = vunpack.c.0.s8 %v871
    %v873 = vlaneseq
    %v874 = vshrl.u32 %v873, 7
    %v875 = vsub.s32 %v872, %v874
    %v876 = vrot.slane %v862, %v875
    %v877 = vcombine.high %v876, %v876
    %v879 = vunpack.c.l.s4 1966171168
    %v880 = vunpack.c.0.s8 %v879
    %v881 = vlaneseq
    %v882 = vshrl.u32 %v881, 7
    %v883 = vsub.s32 %v880, %v882
    %v884 = vrot.slane %v876, %v883
    %v886 = vunpack.c.l.s4 1966171168
    %v887 = vunpack.c.0.s8 %v886
    %v888 = vlaneseq
    %v889 = vshrl.u32 %v888, 7
    %v890 = vsub.s32 %v887, %v889
    %v891 = vrot.slane %v877, %v890
    %v892 = vlaneseq
    %v893 = vshrl.u32 %v892, 7
    %v894 = vsub.s32 0, %v893
    %v895 = vrot.slane %v884, %v894
    %v896 = vlaneseq
    %v897 = vshrl.u32 %v896, 7
    %v898 = vsub.s32 0, %v897
    %v899 = vrot.slane %v891, %v898
    %900 = vrot.lane.b32.xlu0 %v895, 32
    %v901 = vpop.permute.xlu0 %900
    %902 = vrot.lane.b32.xlu0 %v899, 32
    %v903 = vpop.permute.xlu0 %902
    %906 = vst.msk [vmem:[#allocation4 + $0x2] sm:$0x1] %vm367, %v901
    %907 = vst.msk [vmem:[#allocation4 + $0xa] sm:$0x1] %vm367, %v903
    %v910 = vunpack.c.l.s4 1966171168
    %v911 = vunpack.c.0.s8 %v910
    %v912 = vlaneseq
    %v913 = vshrl.u32 %v912, 7
    %v914 = vsub.s32 %v911, %v913
    %v915 = vrot.slane %v868, %v914
    %v916 = vcombine.high %v915, %v915
    %v918 = vunpack.c.l.s4 1966171168
    %v919 = vunpack.c.0.s8 %v918
    %v920 = vlaneseq
    %v921 = vshrl.u32 %v920, 7
    %v922 = vsub.s32 %v919, %v921
    %v923 = vrot.slane %v915, %v922
    %v925 = vunpack.c.l.s4 1966171168
    %v926 = vunpack.c.0.s8 %v925
    %v927 = vlaneseq
    %v928 = vshrl.u32 %v927, 7
    %v929 = vsub.s32 %v926, %v928
    %v930 = vrot.slane %v916, %v929
    %v931 = vlaneseq
    %v932 = vshrl.u32 %v931, 7
    %v933 = vsub.s32 0, %v932
    %v934 = vrot.slane %v923, %v933
    %v935 = vlaneseq
    %v936 = vshrl.u32 %v935, 7
    %v937 = vsub.s32 0, %v936
    %v938 = vrot.slane %v930, %v937
    %939 = vrot.lane.b32.xlu0 %v934, 32
    %v940 = vpop.permute.xlu0 %939
    %941 = vrot.lane.b32.xlu0 %v938, 32
    %v942 = vpop.permute.xlu0 %941
    %945 = vst.msk [vmem:[#allocation5 + $0x5] sm:$0x1] %vm367, %v940
    %946 = vst.msk [vmem:[#allocation5 + $0xd] sm:$0x1] %vm367, %v942
    %v947 = vsel %vm861, %v832, %v677
    %v948 = vsel %vm861, %v826, %v678
    %v949 = vsel %vm867, %v854, %v679
    %v950 = vsel %vm867, %v848, %v680
    %v951 = vld [vmem:[#allocation2 + $0x6] sm:$0x3]
    %v952 = vpack.c.bf16 %v947, %v947
    %v953 = vld [vmem:[%s4] sm:$0xf]
    %v954 = vld [vmem:[%s4 + $0x4] sm:$0xf]
    %v955 = vld [vmem:[%s4 + $0x8] sm:$0xf]
    %v956 = vld [vmem:[%s4 + $0xc] sm:$0xf]
    %958 = vrot.lane.b32.xlu0 %v952, 32
    %v959 = vpop.permute.xlu0 %958
    %v964 = vunpack.c.l.b16 %v953
    %v965 = vunpack.c.l.b16 %v954
    %v966 = vunpack.c.l.b16 %v955
    %v967 = vunpack.c.l.b16 %v956
    %v968 = vpack.c.b16 %v965, %v964
    %v969 = vpack.c.b16 %v967, %v966
    %v973 = vsel %vm169, %v959, 0
    %975 = vmatprep.subr.bf16.mxu0 0
    %976 = vmatpush1.bf16.msra.mxu0 %v968
    %977 = vmatprep.subr.bf16.mxu0 0
    %978 = vmatpush1.bf16.msra.mxu0 %v969
    %979 = vmatprep.subr.bf16.mxu0 0
    %980 = vmatpush1.bf16.msra.mxu0 0
    %981 = vmatprep.subr.bf16.mxu0 0
    %982 = vmatpush1.bf16.msra.mxu0 0
    %983 = vmatprep.subr.bf16.mxu0 0
    %984 = vmatpush1.bf16.msra.mxu0 0
    %985 = vmatprep.subr.bf16.mxu0 0
    %986 = vmatpush1.bf16.msra.mxu0 0
    %987 = vmatprep.subr.bf16.mxu0 0
    %988 = vmatpush1.bf16.msra.mxu0 0
    %989 = vmatprep.subr.bf16.mxu0 0
    %990 = vmatpush1.bf16.msra.mxu0 0
    %991 = vmatprep.subr.bf16.mxu0 0
    %992 = vmatpush1.bf16.msra.mxu0 0
    %993 = vmatprep.subr.bf16.mxu0 0
    %994 = vmatpush1.bf16.msra.mxu0 0
    %995 = vmatprep.subr.bf16.mxu0 0
    %996 = vmatpush1.bf16.msra.mxu0 0
    %997 = vmatprep.subr.bf16.mxu0 0
    %998 = vmatpush1.bf16.msra.mxu0 0
    %999 = vmatprep.subr.bf16.mxu0 0
    %1000 = vmatpush1.bf16.msra.mxu0 0
    %1001 = vmatprep.subr.bf16.mxu0 0
    %1002 = vmatpush1.bf16.msra.mxu0 0
    %1003 = vmatprep.subr.bf16.mxu0 0
    %1004 = vmatpush1.bf16.msra.mxu0 0
    %1005 = vmatprep.subr.bf16.mxu0 0
    %1006 = vmatpush1.bf16.msra.mxu0 0
    %1007 = vmatprep.mubr.bf16.mxu0 0
    %1008 = vmatmul.mubr.bf16.gmra.mrb[0].mxu0 %v973
    %v1009 = vpop.f32.mrb[0].mxu0
    %v1010 = vadd.f32 0.0, %v1009
    %v1011 = vpop.f32.mrb[0].mxu0
    %v1012 = vpop.f32.mrb[0].mxu0
    %v1013 = vpop.f32.mrb[0].mxu0
    %1014 = vdwg.mxu0
    %v1015 = vadd.f32 %v951, %v1010
    %v1016 = vld [vmem:[#allocation3 + $0x8] sm:$0x3]
    %v1017 = vpack.c.bf16 %v949, %v949
    %v1018 = vld [vmem:[#allocation11] sm:$0xf]
    %v1019 = vld [vmem:[#allocation11 + $0x4] sm:$0xf]
    %v1020 = vld [vmem:[#allocation11 + $0x8] sm:$0xf]
    %v1021 = vld [vmem:[#allocation11 + $0xc] sm:$0xf]
    %1023 = vrot.lane.b32.xlu0 %v1017, 32
    %v1024 = vpop.permute.xlu0 %1023
    %v1029 = vunpack.c.l.b16 %v1018
    %v1030 = vunpack.c.l.b16 %v1019
    %v1031 = vunpack.c.l.b16 %v1020
    %v1032 = vunpack.c.l.b16 %v1021
    %v1033 = vpack.c.b16 %v1030, %v1029
    %v1034 = vpack.c.b16 %v1032, %v1031
    %v1038 = vsel %vm169, %v1024, 0
    %1040 = vmatprep.subr.bf16.mxu0 0
    %1041 = vmatpush1.bf16.msra.mxu0 %v1033
    %1042 = vmatprep.subr.bf16.mxu0 0
    %1043 = vmatpush1.bf16.msra.mxu0 %v1034
    %1044 = vmatprep.subr.bf16.mxu0 0
    %1045 = vmatpush1.bf16.msra.mxu0 0
    %1046 = vmatprep.subr.bf16.mxu0 0
    %1047 = vmatpush1.bf16.msra.mxu0 0
    %1048 = vmatprep.subr.bf16.mxu0 0
    %1049 = vmatpush1.bf16.msra.mxu0 0
    %1050 = vmatprep.subr.bf16.mxu0 0
    %1051 = vmatpush1.bf16.msra.mxu0 0
    %1052 = vmatprep.subr.bf16.mxu0 0
    %1053 = vmatpush1.bf16.msra.mxu0 0
    %1054 = vmatprep.subr.bf16.mxu0 0
    %1055 = vmatpush1.bf16.msra.mxu0 0
    %1056 = vmatprep.subr.bf16.mxu0 0
    %1057 = vmatpush1.bf16.msra.mxu0 0
    %1058 = vmatprep.subr.bf16.mxu0 0
    %1059 = vmatpush1.bf16.msra.mxu0 0
    %1060 = vmatprep.subr.bf16.mxu0 0
    %1061 = vmatpush1.bf16.msra.mxu0 0
    %1062 = vmatprep.subr.bf16.mxu0 0
    %1063 = vmatpush1.bf16.msra.mxu0 0
    %1064 = vmatprep.subr.bf16.mxu0 0
    %1065 = vmatpush1.bf16.msra.mxu0 0
    %1066 = vmatprep.subr.bf16.mxu0 0
    %1067 = vmatpush1.bf16.msra.mxu0 0
    %1068 = vmatprep.subr.bf16.mxu0 0
    %1069 = vmatpush1.bf16.msra.mxu0 0
    %1070 = vmatprep.subr.bf16.mxu0 0
    %1071 = vmatpush1.bf16.msra.mxu0 0
    %1072 = vmatprep.mubr.bf16.mxu0 0
    %1073 = vmatmul.mubr.bf16.gmra.mrb[0].mxu0 %v1038
    %v1074 = vpop.f32.mrb[0].mxu0
    %v1075 = vadd.f32 0.0, %v1074
    %v1076 = vpop.f32.mrb[0].mxu0
    %v1077 = vpop.f32.mrb[0].mxu0
    %v1078 = vpop.f32.mrb[0].mxu0
    %1079 = vdwg.mxu0
    %v1080 = vadd.f32 %v1016, %v1075
    %v1081 = vmul.f32 %v1015, 0.5
    %v1082 = vtanh.pop %v1081
    %v1083 = vmul.f32 %v1082, 0.5
    %v1084 = vadd.f32 %v1083, 0.5
    %v1085 = vtanh.pop %v1015
    %v1086 = vmul.f32 %v1084, %v948
    %1088 = vrot.lane.b32.xlu0 %v1085, 64
    %v1089 = vpop.permute.xlu0 %1088
    %v1091 = vmul.f32 %v1084, %v1089
    %1093 = vrot.lane.b32.xlu0 %v1091, 32
    %v1094 = vpop.permute.xlu0 %1093
    %v1096 = vadd.f32 %v1086, %v1094
    %v1097 = vtanh.pop %v1096
    %1099 = vrot.lane.b32.xlu0 %v1097, 64
    %v1100 = vpop.permute.xlu0 %1099
    %v1102 = vmul.f32 %v1084, %v1100
    %v1103 = vmul.f32 %v1080, 0.5
    %v1104 = vtanh.pop %v1103
    %v1105 = vmul.f32 %v1104, 0.5
    %v1106 = vadd.f32 %v1105, 0.5
    %v1107 = vtanh.pop %v1080
    %v1108 = vmul.f32 %v1106, %v950
    %1110 = vrot.lane.b32.xlu0 %v1107, 64
    %v1111 = vpop.permute.xlu0 %1110
    %v1113 = vmul.f32 %v1106, %v1111
    %1115 = vrot.lane.b32.xlu0 %v1113, 32
    %v1116 = vpop.permute.xlu0 %1115
    %v1118 = vadd.f32 %v1108, %v1116
    %v1119 = vtanh.pop %v1118
    %1121 = vrot.lane.b32.xlu0 %v1119, 64
    %v1122 = vpop.permute.xlu0 %1121
    %v1124 = vmul.f32 %v1106, %v1122
    %vm1125 = vcmp.gt.s32.totalorder %v69, 3
    %vm1126 = vcmp.gt.s32.totalorder %v69, 4
    %v1127 = vsel %vm1125, 1, 0
    %1128 = vset.pattern.permute.xlu0 0
    %1129 = vperm.xlu0 %1128, %v1127
    %v1130 = vpop.permute.xlu0 %1129
    %vm1131 = vcmp.eq.s32.totalorder %v1130, 1
    %v1132 = vsel %vm1131, %v1102, 0.0
    %v1133 = vsel %vm1126, 1, 0
    %1134 = vset.pattern.permute.xlu0 0
    %1135 = vperm.xlu0 %1134, %v1133
    %v1136 = vpop.permute.xlu0 %1135
    %vm1137 = vcmp.eq.s32.totalorder %v1136, 1
    %v1138 = vsel %vm1137, %v1124, 0.0
    %v1141 = vunpack.c.l.s4 1966171168
    %v1142 = vunpack.c.0.s8 %v1141
    %v1143 = vlaneseq
    %v1144 = vshrl.u32 %v1143, 7
    %v1145 = vsub.s32 %v1142, %v1144
    %v1146 = vrot.slane %v1132, %v1145
    %v1147 = vcombine.high %v1146, %v1146
    %v1149 = vunpack.c.l.s4 1966171168
    %v1150 = vunpack.c.0.s8 %v1149
    %v1151 = vlaneseq
    %v1152 = vshrl.u32 %v1151, 7
    %v1153 = vsub.s32 %v1150, %v1152
    %v1154 = vrot.slane %v1146, %v1153
    %v1156 = vunpack.c.l.s4 1966171168
    %v1157 = vunpack.c.0.s8 %v1156
    %v1158 = vlaneseq
    %v1159 = vshrl.u32 %v1158, 7
    %v1160 = vsub.s32 %v1157, %v1159
    %v1161 = vrot.slane %v1147, %v1160
    %v1162 = vlaneseq
    %v1163 = vshrl.u32 %v1162, 7
    %v1164 = vsub.s32 0, %v1163
    %v1165 = vrot.slane %v1154, %v1164
    %v1166 = vlaneseq
    %v1167 = vshrl.u32 %v1166, 7
    %v1168 = vsub.s32 0, %v1167
    %v1169 = vrot.slane %v1161, %v1168
    %1170 = vrot.lane.b32.xlu0 %v1165, 32
    %v1171 = vpop.permute.xlu0 %1170
    %1172 = vrot.lane.b32.xlu0 %v1169, 32
    %v1173 = vpop.permute.xlu0 %1172
    %1176 = vst.msk [vmem:[#allocation4 + $0x3] sm:$0x1] %vm367, %v1171
    %1177 = vst.msk [vmem:[#allocation4 + $0xb] sm:$0x1] %vm367, %v1173
    %v1180 = vunpack.c.l.s4 1966171168
    %v1181 = vunpack.c.0.s8 %v1180
    %v1182 = vlaneseq
    %v1183 = vshrl.u32 %v1182, 7
    %v1184 = vsub.s32 %v1181, %v1183
    %v1185 = vrot.slane %v1138, %v1184
    %v1186 = vcombine.high %v1185, %v1185
    %v1188 = vunpack.c.l.s4 1966171168
    %v1189 = vunpack.c.0.s8 %v1188
    %v1190 = vlaneseq
    %v1191 = vshrl.u32 %v1190, 7
    %v1192 = vsub.s32 %v1189, %v1191
    %v1193 = vrot.slane %v1185, %v1192
    %v1195 = vunpack.c.l.s4 1966171168
    %v1196 = vunpack.c.0.s8 %v1195
    %v1197 = vlaneseq
    %v1198 = vshrl.u32 %v1197, 7
    %v1199 = vsub.s32 %v1196, %v1198
    %v1200 = vrot.slane %v1186, %v1199
    %v1201 = vlaneseq
    %v1202 = vshrl.u32 %v1201, 7
    %v1203 = vsub.s32 0, %v1202
    %v1204 = vrot.slane %v1193, %v1203
    %v1205 = vlaneseq
    %v1206 = vshrl.u32 %v1205, 7
    %v1207 = vsub.s32 0, %v1206
    %v1208 = vrot.slane %v1200, %v1207
    %1209 = vrot.lane.b32.xlu0 %v1204, 32
    %v1210 = vpop.permute.xlu0 %1209
    %1211 = vrot.lane.b32.xlu0 %v1208, 32
    %v1212 = vpop.permute.xlu0 %1211
    %1215 = vst.msk [vmem:[#allocation5 + $0x4] sm:$0x1] %vm367, %v1210
    %1216 = vst.msk [vmem:[#allocation5 + $0xc] sm:$0x1] %vm367, %v1212
    %v1217 = vsel %vm1131, %v1102, %v947
    %v1218 = vsel %vm1131, %v1096, %v948
    %v1219 = vsel %vm1137, %v1124, %v949
    %v1220 = vsel %vm1137, %v1118, %v950
    %v1221 = vld [vmem:[#allocation2 + $0x8] sm:$0x3]
    %v1222 = vpack.c.bf16 %v1217, %v1217
    %v1223 = vld [vmem:[%s4] sm:$0xf]
    %v1224 = vld [vmem:[%s4 + $0x4] sm:$0xf]
    %v1225 = vld [vmem:[%s4 + $0x8] sm:$0xf]
    %v1226 = vld [vmem:[%s4 + $0xc] sm:$0xf]
    %1228 = vrot.lane.b32.xlu0 %v1222, 32
    %v1229 = vpop.permute.xlu0 %1228
    %v1234 = vunpack.c.l.b16 %v1223
    %v1235 = vunpack.c.l.b16 %v1224
    %v1236 = vunpack.c.l.b16 %v1225
    %v1237 = vunpack.c.l.b16 %v1226
    %v1238 = vpack.c.b16 %v1235, %v1234
    %v1239 = vpack.c.b16 %v1237, %v1236
    %v1243 = vsel %vm169, %v1229, 0
    %1245 = vmatprep.subr.bf16.mxu0 0
    %1246 = vmatpush1.bf16.msra.mxu0 %v1238
    %1247 = vmatprep.subr.bf16.mxu0 0
    %1248 = vmatpush1.bf16.msra.mxu0 %v1239
    %1249 = vmatprep.subr.bf16.mxu0 0
    %1250 = vmatpush1.bf16.msra.mxu0 0
    %1251 = vmatprep.subr.bf16.mxu0 0
    %1252 = vmatpush1.bf16.msra.mxu0 0
    %1253 = vmatprep.subr.bf16.mxu0 0
    %1254 = vmatpush1.bf16.msra.mxu0 0
    %1255 = vmatprep.subr.bf16.mxu0 0
    %1256 = vmatpush1.bf16.msra.mxu0 0
    %1257 = vmatprep.subr.bf16.mxu0 0
    %1258 = vmatpush1.bf16.msra.mxu0 0
    %1259 = vmatprep.subr.bf16.mxu0 0
    %1260 = vmatpush1.bf16.msra.mxu0 0
    %1261 = vmatprep.subr.bf16.mxu0 0
    %1262 = vmatpush1.bf16.msra.mxu0 0
    %1263 = vmatprep.subr.bf16.mxu0 0
    %1264 = vmatpush1.bf16.msra.mxu0 0
    %1265 = vmatprep.subr.bf16.mxu0 0
    %1266 = vmatpush1.bf16.msra.mxu0 0
    %1267 = vmatprep.subr.bf16.mxu0 0
    %1268 = vmatpush1.bf16.msra.mxu0 0
    %1269 = vmatprep.subr.bf16.mxu0 0
    %1270 = vmatpush1.bf16.msra.mxu0 0
    %1271 = vmatprep.subr.bf16.mxu0 0
    %1272 = vmatpush1.bf16.msra.mxu0 0
    %1273 = vmatprep.subr.bf16.mxu0 0
    %1274 = vmatpush1.bf16.msra.mxu0 0
    %1275 = vmatprep.subr.bf16.mxu0 0
    %1276 = vmatpush1.bf16.msra.mxu0 0
    %1277 = vmatprep.mubr.bf16.mxu0 0
    %1278 = vmatmul.mubr.bf16.gmra.mrb[0].mxu0 %v1243
    %v1279 = vpop.f32.mrb[0].mxu0
    %v1280 = vadd.f32 0.0, %v1279
    %v1281 = vpop.f32.mrb[0].mxu0
    %v1282 = vpop.f32.mrb[0].mxu0
    %v1283 = vpop.f32.mrb[0].mxu0
    %1284 = vdwg.mxu0
    %v1285 = vadd.f32 %v1221, %v1280
    %v1286 = vld [vmem:[#allocation3 + $0x6] sm:$0x3]
    %v1287 = vpack.c.bf16 %v1219, %v1219
    %v1288 = vld [vmem:[#allocation11] sm:$0xf]
    %v1289 = vld [vmem:[#allocation11 + $0x4] sm:$0xf]
    %v1290 = vld [vmem:[#allocation11 + $0x8] sm:$0xf]
    %v1291 = vld [vmem:[#allocation11 + $0xc] sm:$0xf]
    %1293 = vrot.lane.b32.xlu0 %v1287, 32
    %v1294 = vpop.permute.xlu0 %1293
    %v1299 = vunpack.c.l.b16 %v1288
    %v1300 = vunpack.c.l.b16 %v1289
    %v1301 = vunpack.c.l.b16 %v1290
    %v1302 = vunpack.c.l.b16 %v1291
    %v1303 = vpack.c.b16 %v1300, %v1299
    %v1304 = vpack.c.b16 %v1302, %v1301
    %v1308 = vsel %vm169, %v1294, 0
    %1310 = vmatprep.subr.bf16.mxu0 0
    %1311 = vmatpush1.bf16.msra.mxu0 %v1303
    %1312 = vmatprep.subr.bf16.mxu0 0
    %1313 = vmatpush1.bf16.msra.mxu0 %v1304
    %1314 = vmatprep.subr.bf16.mxu0 0
    %1315 = vmatpush1.bf16.msra.mxu0 0
    %1316 = vmatprep.subr.bf16.mxu0 0
    %1317 = vmatpush1.bf16.msra.mxu0 0
    %1318 = vmatprep.subr.bf16.mxu0 0
    %1319 = vmatpush1.bf16.msra.mxu0 0
    %1320 = vmatprep.subr.bf16.mxu0 0
    %1321 = vmatpush1.bf16.msra.mxu0 0
    %1322 = vmatprep.subr.bf16.mxu0 0
    %1323 = vmatpush1.bf16.msra.mxu0 0
    %1324 = vmatprep.subr.bf16.mxu0 0
    %1325 = vmatpush1.bf16.msra.mxu0 0
    %1326 = vmatprep.subr.bf16.mxu0 0
    %1327 = vmatpush1.bf16.msra.mxu0 0
    %1328 = vmatprep.subr.bf16.mxu0 0
    %1329 = vmatpush1.bf16.msra.mxu0 0
    %1330 = vmatprep.subr.bf16.mxu0 0
    %1331 = vmatpush1.bf16.msra.mxu0 0
    %1332 = vmatprep.subr.bf16.mxu0 0
    %1333 = vmatpush1.bf16.msra.mxu0 0
    %1334 = vmatprep.subr.bf16.mxu0 0
    %1335 = vmatpush1.bf16.msra.mxu0 0
    %1336 = vmatprep.subr.bf16.mxu0 0
    %1337 = vmatpush1.bf16.msra.mxu0 0
    %1338 = vmatprep.subr.bf16.mxu0 0
    %1339 = vmatpush1.bf16.msra.mxu0 0
    %1340 = vmatprep.subr.bf16.mxu0 0
    %1341 = vmatpush1.bf16.msra.mxu0 0
    %1342 = vmatprep.mubr.bf16.mxu0 0
    %1343 = vmatmul.mubr.bf16.gmra.mrb[0].mxu0 %v1308
    %v1344 = vpop.f32.mrb[0].mxu0
    %v1345 = vadd.f32 0.0, %v1344
    %v1346 = vpop.f32.mrb[0].mxu0
    %v1347 = vpop.f32.mrb[0].mxu0
    %v1348 = vpop.f32.mrb[0].mxu0
    %1349 = vdwg.mxu0
    %v1350 = vadd.f32 %v1286, %v1345
    %v1351 = vmul.f32 %v1285, 0.5
    %v1352 = vtanh.pop %v1351
    %v1353 = vmul.f32 %v1352, 0.5
    %v1354 = vadd.f32 %v1353, 0.5
    %v1355 = vtanh.pop %v1285
    %v1356 = vmul.f32 %v1354, %v1218
    %1358 = vrot.lane.b32.xlu0 %v1355, 64
    %v1359 = vpop.permute.xlu0 %1358
    %v1361 = vmul.f32 %v1354, %v1359
    %1363 = vrot.lane.b32.xlu0 %v1361, 32
    %v1364 = vpop.permute.xlu0 %1363
    %v1366 = vadd.f32 %v1356, %v1364
    %v1367 = vtanh.pop %v1366
    %1369 = vrot.lane.b32.xlu0 %v1367, 64
    %v1370 = vpop.permute.xlu0 %1369
    %v1372 = vmul.f32 %v1354, %v1370
    %v1373 = vmul.f32 %v1350, 0.5
    %v1374 = vtanh.pop %v1373
    %v1375 = vmul.f32 %v1374, 0.5
    %v1376 = vadd.f32 %v1375, 0.5
    %v1377 = vtanh.pop %v1350
    %v1378 = vmul.f32 %v1376, %v1220
    %1380 = vrot.lane.b32.xlu0 %v1377, 64
    %v1381 = vpop.permute.xlu0 %1380
    %v1383 = vmul.f32 %v1376, %v1381
    %1385 = vrot.lane.b32.xlu0 %v1383, 32
    %v1386 = vpop.permute.xlu0 %1385
    %v1388 = vadd.f32 %v1378, %v1386
    %v1389 = vtanh.pop %v1388
    %1391 = vrot.lane.b32.xlu0 %v1389, 64
    %v1392 = vpop.permute.xlu0 %1391
    %v1394 = vmul.f32 %v1376, %v1392
    %v1395 = vsel %vm1137, %v1372, 0.0
    %v1396 = vsel %vm1131, %v1394, 0.0
    %v1399 = vunpack.c.l.s4 1966171168
    %v1400 = vunpack.c.0.s8 %v1399
    %v1401 = vlaneseq
    %v1402 = vshrl.u32 %v1401, 7
    %v1403 = vsub.s32 %v1400, %v1402
    %v1404 = vrot.slane %v1395, %v1403
    %v1405 = vcombine.high %v1404, %v1404
    %v1407 = vunpack.c.l.s4 1966171168
    %v1408 = vunpack.c.0.s8 %v1407
    %v1409 = vlaneseq
    %v1410 = vshrl.u32 %v1409, 7
    %v1411 = vsub.s32 %v1408, %v1410
    %v1412 = vrot.slane %v1404, %v1411
    %v1414 = vunpack.c.l.s4 1966171168
    %v1415 = vunpack.c.0.s8 %v1414
    %v1416 = vlaneseq
    %v1417 = vshrl.u32 %v1416, 7
    %v1418 = vsub.s32 %v1415, %v1417
    %v1419 = vrot.slane %v1405, %v1418
    %v1420 = vlaneseq
    %v1421 = vshrl.u32 %v1420, 7
    %v1422 = vsub.s32 0, %v1421
    %v1423 = vrot.slane %v1412, %v1422
    %v1424 = vlaneseq
    %v1425 = vshrl.u32 %v1424, 7
    %v1426 = vsub.s32 0, %v1425
    %v1427 = vrot.slane %v1419, %v1426
    %1428 = vrot.lane.b32.xlu0 %v1423, 32
    %v1429 = vpop.permute.xlu0 %1428
    %1430 = vrot.lane.b32.xlu0 %v1427, 32
    %v1431 = vpop.permute.xlu0 %1430
    %1434 = vst.msk [vmem:[#allocation4 + $0x4] sm:$0x1] %vm367, %v1429
    %1435 = vst.msk [vmem:[#allocation4 + $0xc] sm:$0x1] %vm367, %v1431
    %v1438 = vunpack.c.l.s4 1966171168
    %v1439 = vunpack.c.0.s8 %v1438
    %v1440 = vlaneseq
    %v1441 = vshrl.u32 %v1440, 7
    %v1442 = vsub.s32 %v1439, %v1441
    %v1443 = vrot.slane %v1396, %v1442
    %v1444 = vcombine.high %v1443, %v1443
    %v1446 = vunpack.c.l.s4 1966171168
    %v1447 = vunpack.c.0.s8 %v1446
    %v1448 = vlaneseq
    %v1449 = vshrl.u32 %v1448, 7
    %v1450 = vsub.s32 %v1447, %v1449
    %v1451 = vrot.slane %v1443, %v1450
    %v1453 = vunpack.c.l.s4 1966171168
    %v1454 = vunpack.c.0.s8 %v1453
    %v1455 = vlaneseq
    %v1456 = vshrl.u32 %v1455, 7
    %v1457 = vsub.s32 %v1454, %v1456
    %v1458 = vrot.slane %v1444, %v1457
    %v1459 = vlaneseq
    %v1460 = vshrl.u32 %v1459, 7
    %v1461 = vsub.s32 0, %v1460
    %v1462 = vrot.slane %v1451, %v1461
    %v1463 = vlaneseq
    %v1464 = vshrl.u32 %v1463, 7
    %v1465 = vsub.s32 0, %v1464
    %v1466 = vrot.slane %v1458, %v1465
    %1467 = vrot.lane.b32.xlu0 %v1462, 32
    %v1468 = vpop.permute.xlu0 %1467
    %1469 = vrot.lane.b32.xlu0 %v1466, 32
    %v1470 = vpop.permute.xlu0 %1469
    %1473 = vst.msk [vmem:[#allocation5 + $0x3] sm:$0x1] %vm367, %v1468
    %1474 = vst.msk [vmem:[#allocation5 + $0xb] sm:$0x1] %vm367, %v1470
    %v1475 = vsel %vm1137, %v1372, %v1217
    %v1476 = vsel %vm1137, %v1366, %v1218
    %v1477 = vsel %vm1131, %v1394, %v1219
    %v1478 = vsel %vm1131, %v1388, %v1220
    %v1479 = vld [vmem:[#allocation2 + $0xa] sm:$0x3]
    %v1480 = vpack.c.bf16 %v1475, %v1475
    %v1481 = vld [vmem:[%s4] sm:$0xf]
    %v1482 = vld [vmem:[%s4 + $0x4] sm:$0xf]
    %v1483 = vld [vmem:[%s4 + $0x8] sm:$0xf]
    %v1484 = vld [vmem:[%s4 + $0xc] sm:$0xf]
    %1486 = vrot.lane.b32.xlu0 %v1480, 32
    %v1487 = vpop.permute.xlu0 %1486
    %v1492 = vunpack.c.l.b16 %v1481
    %v1493 = vunpack.c.l.b16 %v1482
    %v1494 = vunpack.c.l.b16 %v1483
    %v1495 = vunpack.c.l.b16 %v1484
    %v1496 = vpack.c.b16 %v1493, %v1492
    %v1497 = vpack.c.b16 %v1495, %v1494
    %v1501 = vsel %vm169, %v1487, 0
    %1503 = vmatprep.subr.bf16.mxu0 0
    %1504 = vmatpush1.bf16.msra.mxu0 %v1496
    %1505 = vmatprep.subr.bf16.mxu0 0
    %1506 = vmatpush1.bf16.msra.mxu0 %v1497
    %1507 = vmatprep.subr.bf16.mxu0 0
    %1508 = vmatpush1.bf16.msra.mxu0 0
    %1509 = vmatprep.subr.bf16.mxu0 0
    %1510 = vmatpush1.bf16.msra.mxu0 0
    %1511 = vmatprep.subr.bf16.mxu0 0
    %1512 = vmatpush1.bf16.msra.mxu0 0
    %1513 = vmatprep.subr.bf16.mxu0 0
    %1514 = vmatpush1.bf16.msra.mxu0 0
    %1515 = vmatprep.subr.bf16.mxu0 0
    %1516 = vmatpush1.bf16.msra.mxu0 0
    %1517 = vmatprep.subr.bf16.mxu0 0
    %1518 = vmatpush1.bf16.msra.mxu0 0
    %1519 = vmatprep.subr.bf16.mxu0 0
    %1520 = vmatpush1.bf16.msra.mxu0 0
    %1521 = vmatprep.subr.bf16.mxu0 0
    %1522 = vmatpush1.bf16.msra.mxu0 0
    %1523 = vmatprep.subr.bf16.mxu0 0
    %1524 = vmatpush1.bf16.msra.mxu0 0
    %1525 = vmatprep.subr.bf16.mxu0 0
    %1526 = vmatpush1.bf16.msra.mxu0 0
    %1527 = vmatprep.subr.bf16.mxu0 0
    %1528 = vmatpush1.bf16.msra.mxu0 0
    %1529 = vmatprep.subr.bf16.mxu0 0
    %1530 = vmatpush1.bf16.msra.mxu0 0
    %1531 = vmatprep.subr.bf16.mxu0 0
    %1532 = vmatpush1.bf16.msra.mxu0 0
    %1533 = vmatprep.subr.bf16.mxu0 0
    %1534 = vmatpush1.bf16.msra.mxu0 0
    %1535 = vmatprep.mubr.bf16.mxu0 0
    %1536 = vmatmul.mubr.bf16.gmra.mrb[0].mxu0 %v1501
    %v1537 = vpop.f32.mrb[0].mxu0
    %v1538 = vadd.f32 0.0, %v1537
    %v1539 = vpop.f32.mrb[0].mxu0
    %v1540 = vpop.f32.mrb[0].mxu0
    %v1541 = vpop.f32.mrb[0].mxu0
    %1542 = vdwg.mxu0
    %v1543 = vadd.f32 %v1479, %v1538
    %v1544 = vld [vmem:[#allocation3 + $0x4] sm:$0x3]
    %v1545 = vpack.c.bf16 %v1477, %v1477
    %v1546 = vld [vmem:[#allocation11] sm:$0xf]
    %v1547 = vld [vmem:[#allocation11 + $0x4] sm:$0xf]
    %v1548 = vld [vmem:[#allocation11 + $0x8] sm:$0xf]
    %v1549 = vld [vmem:[#allocation11 + $0xc] sm:$0xf]
    %1551 = vrot.lane.b32.xlu0 %v1545, 32
    %v1552 = vpop.permute.xlu0 %1551
    %v1557 = vunpack.c.l.b16 %v1546
    %v1558 = vunpack.c.l.b16 %v1547
    %v1559 = vunpack.c.l.b16 %v1548
    %v1560 = vunpack.c.l.b16 %v1549
    %v1561 = vpack.c.b16 %v1558, %v1557
    %v1562 = vpack.c.b16 %v1560, %v1559
    %v1566 = vsel %vm169, %v1552, 0
    %1568 = vmatprep.subr.bf16.mxu0 0
    %1569 = vmatpush1.bf16.msra.mxu0 %v1561
    %1570 = vmatprep.subr.bf16.mxu0 0
    %1571 = vmatpush1.bf16.msra.mxu0 %v1562
    %1572 = vmatprep.subr.bf16.mxu0 0
    %1573 = vmatpush1.bf16.msra.mxu0 0
    %1574 = vmatprep.subr.bf16.mxu0 0
    %1575 = vmatpush1.bf16.msra.mxu0 0
    %1576 = vmatprep.subr.bf16.mxu0 0
    %1577 = vmatpush1.bf16.msra.mxu0 0
    %1578 = vmatprep.subr.bf16.mxu0 0
    %1579 = vmatpush1.bf16.msra.mxu0 0
    %1580 = vmatprep.subr.bf16.mxu0 0
    %1581 = vmatpush1.bf16.msra.mxu0 0
    %1582 = vmatprep.subr.bf16.mxu0 0
    %1583 = vmatpush1.bf16.msra.mxu0 0
    %1584 = vmatprep.subr.bf16.mxu0 0
    %1585 = vmatpush1.bf16.msra.mxu0 0
    %1586 = vmatprep.subr.bf16.mxu0 0
    %1587 = vmatpush1.bf16.msra.mxu0 0
    %1588 = vmatprep.subr.bf16.mxu0 0
    %1589 = vmatpush1.bf16.msra.mxu0 0
    %1590 = vmatprep.subr.bf16.mxu0 0
    %1591 = vmatpush1.bf16.msra.mxu0 0
    %1592 = vmatprep.subr.bf16.mxu0 0
    %1593 = vmatpush1.bf16.msra.mxu0 0
    %1594 = vmatprep.subr.bf16.mxu0 0
    %1595 = vmatpush1.bf16.msra.mxu0 0
    %1596 = vmatprep.subr.bf16.mxu0 0
    %1597 = vmatpush1.bf16.msra.mxu0 0
    %1598 = vmatprep.subr.bf16.mxu0 0
    %1599 = vmatpush1.bf16.msra.mxu0 0
    %1600 = vmatprep.mubr.bf16.mxu0 0
    %1601 = vmatmul.mubr.bf16.gmra.mrb[0].mxu0 %v1566
    %v1602 = vpop.f32.mrb[0].mxu0
    %v1603 = vadd.f32 0.0, %v1602
    %v1604 = vpop.f32.mrb[0].mxu0
    %v1605 = vpop.f32.mrb[0].mxu0
    %v1606 = vpop.f32.mrb[0].mxu0
    %1607 = vdwg.mxu0
    %v1608 = vadd.f32 %v1544, %v1603
    %v1609 = vmul.f32 %v1543, 0.5
    %v1610 = vtanh.pop %v1609
    %v1611 = vmul.f32 %v1610, 0.5
    %v1612 = vadd.f32 %v1611, 0.5
    %v1613 = vtanh.pop %v1543
    %v1614 = vmul.f32 %v1612, %v1476
    %1616 = vrot.lane.b32.xlu0 %v1613, 64
    %v1617 = vpop.permute.xlu0 %1616
    %v1619 = vmul.f32 %v1612, %v1617
    %1621 = vrot.lane.b32.xlu0 %v1619, 32
    %v1622 = vpop.permute.xlu0 %1621
    %v1624 = vadd.f32 %v1614, %v1622
    %v1625 = vtanh.pop %v1624
    %1627 = vrot.lane.b32.xlu0 %v1625, 64
    %v1628 = vpop.permute.xlu0 %1627
    %v1630 = vmul.f32 %v1612, %v1628
    %v1631 = vmul.f32 %v1608, 0.5
    %v1632 = vtanh.pop %v1631
    %v1633 = vmul.f32 %v1632, 0.5
    %v1634 = vadd.f32 %v1633, 0.5
    %v1635 = vtanh.pop %v1608
    %v1636 = vmul.f32 %v1634, %v1478
    %1638 = vrot.lane.b32.xlu0 %v1635, 64
    %v1639 = vpop.permute.xlu0 %1638
    %v1641 = vmul.f32 %v1634, %v1639
    %1643 = vrot.lane.b32.xlu0 %v1641, 32
    %v1644 = vpop.permute.xlu0 %1643
    %v1646 = vadd.f32 %v1636, %v1644
    %v1647 = vtanh.pop %v1646
    %1649 = vrot.lane.b32.xlu0 %v1647, 64
    %v1650 = vpop.permute.xlu0 %1649
    %v1652 = vmul.f32 %v1634, %v1650
    %v1653 = vsel %vm867, %v1630, 0.0
    %v1654 = vsel %vm861, %v1652, 0.0
    %v1657 = vunpack.c.l.s4 1966171168
    %v1658 = vunpack.c.0.s8 %v1657
    %v1659 = vlaneseq
    %v1660 = vshrl.u32 %v1659, 7
    %v1661 = vsub.s32 %v1658, %v1660
    %v1662 = vrot.slane %v1653, %v1661
    %v1663 = vcombine.high %v1662, %v1662
    %v1665 = vunpack.c.l.s4 1966171168
    %v1666 = vunpack.c.0.s8 %v1665
    %v1667 = vlaneseq
    %v1668 = vshrl.u32 %v1667, 7
    %v1669 = vsub.s32 %v1666, %v1668
    %v1670 = vrot.slane %v1662, %v1669
    %v1672 = vunpack.c.l.s4 1966171168
    %v1673 = vunpack.c.0.s8 %v1672
    %v1674 = vlaneseq
    %v1675 = vshrl.u32 %v1674, 7
    %v1676 = vsub.s32 %v1673, %v1675
    %v1677 = vrot.slane %v1663, %v1676
    %v1678 = vlaneseq
    %v1679 = vshrl.u32 %v1678, 7
    %v1680 = vsub.s32 0, %v1679
    %v1681 = vrot.slane %v1670, %v1680
    %v1682 = vlaneseq
    %v1683 = vshrl.u32 %v1682, 7
    %v1684 = vsub.s32 0, %v1683
    %v1685 = vrot.slane %v1677, %v1684
    %1686 = vrot.lane.b32.xlu0 %v1681, 32
    %v1687 = vpop.permute.xlu0 %1686
    %1688 = vrot.lane.b32.xlu0 %v1685, 32
    %v1689 = vpop.permute.xlu0 %1688
    %1692 = vst.msk [vmem:[#allocation4 + $0x5] sm:$0x1] %vm367, %v1687
    %1693 = vst.msk [vmem:[#allocation4 + $0xd] sm:$0x1] %vm367, %v1689
    %v1696 = vunpack.c.l.s4 1966171168
    %v1697 = vunpack.c.0.s8 %v1696
    %v1698 = vlaneseq
    %v1699 = vshrl.u32 %v1698, 7
    %v1700 = vsub.s32 %v1697, %v1699
    %v1701 = vrot.slane %v1654, %v1700
    %v1702 = vcombine.high %v1701, %v1701
    %v1704 = vunpack.c.l.s4 1966171168
    %v1705 = vunpack.c.0.s8 %v1704
    %v1706 = vlaneseq
    %v1707 = vshrl.u32 %v1706, 7
    %v1708 = vsub.s32 %v1705, %v1707
    %v1709 = vrot.slane %v1701, %v1708
    %v1711 = vunpack.c.l.s4 1966171168
    %v1712 = vunpack.c.0.s8 %v1711
    %v1713 = vlaneseq
    %v1714 = vshrl.u32 %v1713, 7
    %v1715 = vsub.s32 %v1712, %v1714
    %v1716 = vrot.slane %v1702, %v1715
    %v1717 = vlaneseq
    %v1718 = vshrl.u32 %v1717, 7
    %v1719 = vsub.s32 0, %v1718
    %v1720 = vrot.slane %v1709, %v1719
    %v1721 = vlaneseq
    %v1722 = vshrl.u32 %v1721, 7
    %v1723 = vsub.s32 0, %v1722
    %v1724 = vrot.slane %v1716, %v1723
    %1725 = vrot.lane.b32.xlu0 %v1720, 32
    %v1726 = vpop.permute.xlu0 %1725
    %1727 = vrot.lane.b32.xlu0 %v1724, 32
    %v1728 = vpop.permute.xlu0 %1727
    %1731 = vst.msk [vmem:[#allocation5 + $0x2] sm:$0x1] %vm367, %v1726
    %1732 = vst.msk [vmem:[#allocation5 + $0xa] sm:$0x1] %vm367, %v1728
    %v1733 = vsel %vm867, %v1630, %v1475
    %v1734 = vsel %vm867, %v1624, %v1476
    %v1735 = vsel %vm861, %v1652, %v1477
    %v1736 = vsel %vm861, %v1646, %v1478
    %v1737 = vld [vmem:[#allocation2 + $0xc] sm:$0x3]
    %v1738 = vpack.c.bf16 %v1733, %v1733
    %v1739 = vld [vmem:[%s4] sm:$0xf]
    %v1740 = vld [vmem:[%s4 + $0x4] sm:$0xf]
    %v1741 = vld [vmem:[%s4 + $0x8] sm:$0xf]
    %v1742 = vld [vmem:[%s4 + $0xc] sm:$0xf]
    %1744 = vrot.lane.b32.xlu0 %v1738, 32
    %v1745 = vpop.permute.xlu0 %1744
    %v1750 = vunpack.c.l.b16 %v1739
    %v1751 = vunpack.c.l.b16 %v1740
    %v1752 = vunpack.c.l.b16 %v1741
    %v1753 = vunpack.c.l.b16 %v1742
    %v1754 = vpack.c.b16 %v1751, %v1750
    %v1755 = vpack.c.b16 %v1753, %v1752
    %v1759 = vsel %vm169, %v1745, 0
    %1761 = vmatprep.subr.bf16.mxu0 0
    %1762 = vmatpush1.bf16.msra.mxu0 %v1754
    %1763 = vmatprep.subr.bf16.mxu0 0
    %1764 = vmatpush1.bf16.msra.mxu0 %v1755
    %1765 = vmatprep.subr.bf16.mxu0 0
    %1766 = vmatpush1.bf16.msra.mxu0 0
    %1767 = vmatprep.subr.bf16.mxu0 0
    %1768 = vmatpush1.bf16.msra.mxu0 0
    %1769 = vmatprep.subr.bf16.mxu0 0
    %1770 = vmatpush1.bf16.msra.mxu0 0
    %1771 = vmatprep.subr.bf16.mxu0 0
    %1772 = vmatpush1.bf16.msra.mxu0 0
    %1773 = vmatprep.subr.bf16.mxu0 0
    %1774 = vmatpush1.bf16.msra.mxu0 0
    %1775 = vmatprep.subr.bf16.mxu0 0
    %1776 = vmatpush1.bf16.msra.mxu0 0
    %1777 = vmatprep.subr.bf16.mxu0 0
    %1778 = vmatpush1.bf16.msra.mxu0 0
    %1779 = vmatprep.subr.bf16.mxu0 0
    %1780 = vmatpush1.bf16.msra.mxu0 0
    %1781 = vmatprep.subr.bf16.mxu0 0
    %1782 = vmatpush1.bf16.msra.mxu0 0
    %1783 = vmatprep.subr.bf16.mxu0 0
    %1784 = vmatpush1.bf16.msra.mxu0 0
    %1785 = vmatprep.subr.bf16.mxu0 0
    %1786 = vmatpush1.bf16.msra.mxu0 0
    %1787 = vmatprep.subr.bf16.mxu0 0
    %1788 = vmatpush1.bf16.msra.mxu0 0
    %1789 = vmatprep.subr.bf16.mxu0 0
    %1790 = vmatpush1.bf16.msra.mxu0 0
    %1791 = vmatprep.subr.bf16.mxu0 0
    %1792 = vmatpush1.bf16.msra.mxu0 0
    %1793 = vmatprep.mubr.bf16.mxu0 0
    %1794 = vmatmul.mubr.bf16.gmra.mrb[0].mxu0 %v1759
    %v1795 = vpop.f32.mrb[0].mxu0
    %v1796 = vadd.f32 0.0, %v1795
    %v1797 = vpop.f32.mrb[0].mxu0
    %v1798 = vpop.f32.mrb[0].mxu0
    %v1799 = vpop.f32.mrb[0].mxu0
    %1800 = vdwg.mxu0
    %v1801 = vadd.f32 %v1737, %v1796
    %v1802 = vld [vmem:[#allocation3 + $0x2] sm:$0x3]
    %v1803 = vpack.c.bf16 %v1735, %v1735
    %v1804 = vld [vmem:[#allocation11] sm:$0xf]
    %v1805 = vld [vmem:[#allocation11 + $0x4] sm:$0xf]
    %v1806 = vld [vmem:[#allocation11 + $0x8] sm:$0xf]
    %v1807 = vld [vmem:[#allocation11 + $0xc] sm:$0xf]
    %1809 = vrot.lane.b32.xlu0 %v1803, 32
    %v1810 = vpop.permute.xlu0 %1809
    %v1815 = vunpack.c.l.b16 %v1804
    %v1816 = vunpack.c.l.b16 %v1805
    %v1817 = vunpack.c.l.b16 %v1806
    %v1818 = vunpack.c.l.b16 %v1807
    %v1819 = vpack.c.b16 %v1816, %v1815
    %v1820 = vpack.c.b16 %v1818, %v1817
    %v1824 = vsel %vm169, %v1810, 0
    %1826 = vmatprep.subr.bf16.mxu0 0
    %1827 = vmatpush1.bf16.msra.mxu0 %v1819
    %1828 = vmatprep.subr.bf16.mxu0 0
    %1829 = vmatpush1.bf16.msra.mxu0 %v1820
    %1830 = vmatprep.subr.bf16.mxu0 0
    %1831 = vmatpush1.bf16.msra.mxu0 0
    %1832 = vmatprep.subr.bf16.mxu0 0
    %1833 = vmatpush1.bf16.msra.mxu0 0
    %1834 = vmatprep.subr.bf16.mxu0 0
    %1835 = vmatpush1.bf16.msra.mxu0 0
    %1836 = vmatprep.subr.bf16.mxu0 0
    %1837 = vmatpush1.bf16.msra.mxu0 0
    %1838 = vmatprep.subr.bf16.mxu0 0
    %1839 = vmatpush1.bf16.msra.mxu0 0
    %1840 = vmatprep.subr.bf16.mxu0 0
    %1841 = vmatpush1.bf16.msra.mxu0 0
    %1842 = vmatprep.subr.bf16.mxu0 0
    %1843 = vmatpush1.bf16.msra.mxu0 0
    %1844 = vmatprep.subr.bf16.mxu0 0
    %1845 = vmatpush1.bf16.msra.mxu0 0
    %1846 = vmatprep.subr.bf16.mxu0 0
    %1847 = vmatpush1.bf16.msra.mxu0 0
    %1848 = vmatprep.subr.bf16.mxu0 0
    %1849 = vmatpush1.bf16.msra.mxu0 0
    %1850 = vmatprep.subr.bf16.mxu0 0
    %1851 = vmatpush1.bf16.msra.mxu0 0
    %1852 = vmatprep.subr.bf16.mxu0 0
    %1853 = vmatpush1.bf16.msra.mxu0 0
    %1854 = vmatprep.subr.bf16.mxu0 0
    %1855 = vmatpush1.bf16.msra.mxu0 0
    %1856 = vmatprep.subr.bf16.mxu0 0
    %1857 = vmatpush1.bf16.msra.mxu0 0
    %1858 = vmatprep.mubr.bf16.mxu0 0
    %1859 = vmatmul.mubr.bf16.gmra.mrb[0].mxu0 %v1824
    %v1860 = vpop.f32.mrb[0].mxu0
    %v1861 = vadd.f32 0.0, %v1860
    %v1862 = vpop.f32.mrb[0].mxu0
    %v1863 = vpop.f32.mrb[0].mxu0
    %v1864 = vpop.f32.mrb[0].mxu0
    %1865 = vdwg.mxu0
    %v1866 = vadd.f32 %v1802, %v1861
    %v1867 = vmul.f32 %v1801, 0.5
    %v1868 = vtanh.pop %v1867
    %v1869 = vmul.f32 %v1868, 0.5
    %v1870 = vadd.f32 %v1869, 0.5
    %v1871 = vtanh.pop %v1801
    %v1872 = vmul.f32 %v1870, %v1734
    %1874 = vrot.lane.b32.xlu0 %v1871, 64
    %v1875 = vpop.permute.xlu0 %1874
    %v1877 = vmul.f32 %v1870, %v1875
    %1879 = vrot.lane.b32.xlu0 %v1877, 32
    %v1880 = vpop.permute.xlu0 %1879
    %v1882 = vadd.f32 %v1872, %v1880
    %v1883 = vtanh.pop %v1882
    %1885 = vrot.lane.b32.xlu0 %v1883, 64
    %v1886 = vpop.permute.xlu0 %1885
    %v1888 = vmul.f32 %v1870, %v1886
    %v1889 = vmul.f32 %v1866, 0.5
    %v1890 = vtanh.pop %v1889
    %v1891 = vmul.f32 %v1890, 0.5
    %v1892 = vadd.f32 %v1891, 0.5
    %v1893 = vtanh.pop %v1866
    %v1894 = vmul.f32 %v1892, %v1736
    %1896 = vrot.lane.b32.xlu0 %v1893, 64
    %v1897 = vpop.permute.xlu0 %1896
    %v1899 = vmul.f32 %v1892, %v1897
    %1901 = vrot.lane.b32.xlu0 %v1899, 32
    %v1902 = vpop.permute.xlu0 %1901
    %v1904 = vadd.f32 %v1894, %v1902
    %v1905 = vtanh.pop %v1904
    %1907 = vrot.lane.b32.xlu0 %v1905, 64
    %v1908 = vpop.permute.xlu0 %1907
    %v1910 = vmul.f32 %v1892, %v1908
    %v1911 = vsel %vm597, %v1888, 0.0
    %v1912 = vsel %vm591, %v1910, 0.0
    %v1915 = vunpack.c.l.s4 1966171168
    %v1916 = vunpack.c.0.s8 %v1915
    %v1917 = vlaneseq
    %v1918 = vshrl.u32 %v1917, 7
    %v1919 = vsub.s32 %v1916, %v1918
    %v1920 = vrot.slane %v1911, %v1919
    %v1921 = vcombine.high %v1920, %v1920
    %v1923 = vunpack.c.l.s4 1966171168
    %v1924 = vunpack.c.0.s8 %v1923
    %v1925 = vlaneseq
    %v1926 = vshrl.u32 %v1925, 7
    %v1927 = vsub.s32 %v1924, %v1926
    %v1928 = vrot.slane %v1920, %v1927
    %v1930 = vunpack.c.l.s4 1966171168
    %v1931 = vunpack.c.0.s8 %v1930
    %v1932 = vlaneseq
    %v1933 = vshrl.u32 %v1932, 7
    %v1934 = vsub.s32 %v1931, %v1933
    %v1935 = vrot.slane %v1921, %v1934
    %v1936 = vlaneseq
    %v1937 = vshrl.u32 %v1936, 7
    %v1938 = vsub.s32 0, %v1937
    %v1939 = vrot.slane %v1928, %v1938
    %v1940 = vlaneseq
    %v1941 = vshrl.u32 %v1940, 7
    %v1942 = vsub.s32 0, %v1941
    %v1943 = vrot.slane %v1935, %v1942
    %1944 = vrot.lane.b32.xlu0 %v1939, 32
    %v1945 = vpop.permute.xlu0 %1944
    %1946 = vrot.lane.b32.xlu0 %v1943, 32
    %v1947 = vpop.permute.xlu0 %1946
    %1950 = vst.msk [vmem:[#allocation4 + $0x6] sm:$0x1] %vm367, %v1945
    %1951 = vst.msk [vmem:[#allocation4 + $0xe] sm:$0x1] %vm367, %v1947
    %v1954 = vunpack.c.l.s4 1966171168
    %v1955 = vunpack.c.0.s8 %v1954
    %v1956 = vlaneseq
    %v1957 = vshrl.u32 %v1956, 7
    %v1958 = vsub.s32 %v1955, %v1957
    %v1959 = vrot.slane %v1912, %v1958
    %v1960 = vcombine.high %v1959, %v1959
    %v1962 = vunpack.c.l.s4 1966171168
    %v1963 = vunpack.c.0.s8 %v1962
    %v1964 = vlaneseq
    %v1965 = vshrl.u32 %v1964, 7
    %v1966 = vsub.s32 %v1963, %v1965
    %v1967 = vrot.slane %v1959, %v1966
    %v1969 = vunpack.c.l.s4 1966171168
    %v1970 = vunpack.c.0.s8 %v1969
    %v1971 = vlaneseq
    %v1972 = vshrl.u32 %v1971, 7
    %v1973 = vsub.s32 %v1970, %v1972
    %v1974 = vrot.slane %v1960, %v1973
    %v1975 = vlaneseq
    %v1976 = vshrl.u32 %v1975, 7
    %v1977 = vsub.s32 0, %v1976
    %v1978 = vrot.slane %v1967, %v1977
    %v1979 = vlaneseq
    %v1980 = vshrl.u32 %v1979, 7
    %v1981 = vsub.s32 0, %v1980
    %v1982 = vrot.slane %v1974, %v1981
    %1983 = vrot.lane.b32.xlu0 %v1978, 32
    %v1984 = vpop.permute.xlu0 %1983
    %1985 = vrot.lane.b32.xlu0 %v1982, 32
    %v1986 = vpop.permute.xlu0 %1985
    %1989 = vst.msk [vmem:[#allocation5 + $0x1] sm:$0x1] %vm367, %v1984
    %1990 = vst.msk [vmem:[#allocation5 + $0x9] sm:$0x1] %vm367, %v1986
    %v1991 = vsel %vm597, %v1888, %v1733
    %v1992 = vsel %vm597, %v1882, %v1734
    %v1993 = vsel %vm591, %v1910, %v1735
    %v1994 = vsel %vm591, %v1904, %v1736
    %v1995 = vld [vmem:[#allocation2 + $0xe] sm:$0x3]
    %v1996 = vpack.c.bf16 %v1991, %v1991
    %v1997 = vld [vmem:[%s4] sm:$0xf]
    %v1998 = vld [vmem:[%s4 + $0x4] sm:$0xf]
    %v1999 = vld [vmem:[%s4 + $0x8] sm:$0xf]
    %v2000 = vld [vmem:[%s4 + $0xc] sm:$0xf]
    %2002 = vrot.lane.b32.xlu0 %v1996, 32
    %v2003 = vpop.permute.xlu0 %2002
    %v2008 = vunpack.c.l.b16 %v1997
    %v2009 = vunpack.c.l.b16 %v1998
    %v2010 = vunpack.c.l.b16 %v1999
    %v2011 = vunpack.c.l.b16 %v2000
    %v2012 = vpack.c.b16 %v2009, %v2008
    %v2013 = vpack.c.b16 %v2011, %v2010
    %v2017 = vsel %vm169, %v2003, 0
    %2019 = vmatprep.subr.bf16.mxu0 0
    %2020 = vmatpush1.bf16.msra.mxu0 %v2012
    %2021 = vmatprep.subr.bf16.mxu0 0
    %2022 = vmatpush1.bf16.msra.mxu0 %v2013
    %2023 = vmatprep.subr.bf16.mxu0 0
    %2024 = vmatpush1.bf16.msra.mxu0 0
    %2025 = vmatprep.subr.bf16.mxu0 0
    %2026 = vmatpush1.bf16.msra.mxu0 0
    %2027 = vmatprep.subr.bf16.mxu0 0
    %2028 = vmatpush1.bf16.msra.mxu0 0
    %2029 = vmatprep.subr.bf16.mxu0 0
    %2030 = vmatpush1.bf16.msra.mxu0 0
    %2031 = vmatprep.subr.bf16.mxu0 0
    %2032 = vmatpush1.bf16.msra.mxu0 0
    %2033 = vmatprep.subr.bf16.mxu0 0
    %2034 = vmatpush1.bf16.msra.mxu0 0
    %2035 = vmatprep.subr.bf16.mxu0 0
    %2036 = vmatpush1.bf16.msra.mxu0 0
    %2037 = vmatprep.subr.bf16.mxu0 0
    %2038 = vmatpush1.bf16.msra.mxu0 0
    %2039 = vmatprep.subr.bf16.mxu0 0
    %2040 = vmatpush1.bf16.msra.mxu0 0
    %2041 = vmatprep.subr.bf16.mxu0 0
    %2042 = vmatpush1.bf16.msra.mxu0 0
    %2043 = vmatprep.subr.bf16.mxu0 0
    %2044 = vmatpush1.bf16.msra.mxu0 0
    %2045 = vmatprep.subr.bf16.mxu0 0
    %2046 = vmatpush1.bf16.msra.mxu0 0
    %2047 = vmatprep.subr.bf16.mxu0 0
    %2048 = vmatpush1.bf16.msra.mxu0 0
    %2049 = vmatprep.subr.bf16.mxu0 0
    %2050 = vmatpush1.bf16.msra.mxu0 0
    %2051 = vmatprep.mubr.bf16.mxu0 0
    %2052 = vmatmul.mubr.bf16.gmra.mrb[0].mxu0 %v2017
    %v2053 = vpop.f32.mrb[0].mxu0
    %v2054 = vadd.f32 0.0, %v2053
    %v2055 = vpop.f32.mrb[0].mxu0
    %v2056 = vpop.f32.mrb[0].mxu0
    %v2057 = vpop.f32.mrb[0].mxu0
    %2058 = vdwg.mxu0
    %v2059 = vadd.f32 %v1995, %v2054
    %v2060 = vld [vmem:[#allocation3] sm:$0x3]
    %v2061 = vpack.c.bf16 %v1993, %v1993
    %v2062 = vld [vmem:[#allocation11] sm:$0xf]
    %v2063 = vld [vmem:[#allocation11 + $0x4] sm:$0xf]
    %v2064 = vld [vmem:[#allocation11 + $0x8] sm:$0xf]
    %v2065 = vld [vmem:[#allocation11 + $0xc] sm:$0xf]
    %2067 = vrot.lane.b32.xlu0 %v2061, 32
    %v2068 = vpop.permute.xlu0 %2067
    %v2073 = vunpack.c.l.b16 %v2062
    %v2074 = vunpack.c.l.b16 %v2063
    %v2075 = vunpack.c.l.b16 %v2064
    %v2076 = vunpack.c.l.b16 %v2065
    %v2077 = vpack.c.b16 %v2074, %v2073
    %v2078 = vpack.c.b16 %v2076, %v2075
    %v2082 = vsel %vm169, %v2068, 0
    %2084 = vmatprep.subr.bf16.mxu0 0
    %2085 = vmatpush1.bf16.msra.mxu0 %v2077
    %2086 = vmatprep.subr.bf16.mxu0 0
    %2087 = vmatpush1.bf16.msra.mxu0 %v2078
    %2088 = vmatprep.subr.bf16.mxu0 0
    %2089 = vmatpush1.bf16.msra.mxu0 0
    %2090 = vmatprep.subr.bf16.mxu0 0
    %2091 = vmatpush1.bf16.msra.mxu0 0
    %2092 = vmatprep.subr.bf16.mxu0 0
    %2093 = vmatpush1.bf16.msra.mxu0 0
    %2094 = vmatprep.subr.bf16.mxu0 0
    %2095 = vmatpush1.bf16.msra.mxu0 0
    %2096 = vmatprep.subr.bf16.mxu0 0
    %2097 = vmatpush1.bf16.msra.mxu0 0
    %2098 = vmatprep.subr.bf16.mxu0 0
    %2099 = vmatpush1.bf16.msra.mxu0 0
    %2100 = vmatprep.subr.bf16.mxu0 0
    %2101 = vmatpush1.bf16.msra.mxu0 0
    %2102 = vmatprep.subr.bf16.mxu0 0
    %2103 = vmatpush1.bf16.msra.mxu0 0
    %2104 = vmatprep.subr.bf16.mxu0 0
    %2105 = vmatpush1.bf16.msra.mxu0 0
    %2106 = vmatprep.subr.bf16.mxu0 0
    %2107 = vmatpush1.bf16.msra.mxu0 0
    %2108 = vmatprep.subr.bf16.mxu0 0
    %2109 = vmatpush1.bf16.msra.mxu0 0
    %2110 = vmatprep.subr.bf16.mxu0 0
    %2111 = vmatpush1.bf16.msra.mxu0 0
    %2112 = vmatprep.subr.bf16.mxu0 0
    %2113 = vmatpush1.bf16.msra.mxu0 0
    %2114 = vmatprep.subr.bf16.mxu0 0
    %2115 = vmatpush1.bf16.msra.mxu0 0
    %2116 = vmatprep.mubr.bf16.mxu0 0
    %2117 = vmatmul.mubr.bf16.gmra.mrb[0].mxu0 %v2082
    %v2118 = vpop.f32.mrb[0].mxu0
    %v2119 = vadd.f32 0.0, %v2118
    %v2120 = vpop.f32.mrb[0].mxu0
    %v2121 = vpop.f32.mrb[0].mxu0
    %v2122 = vpop.f32.mrb[0].mxu0
    %2123 = vdwg.mxu0
    %v2124 = vadd.f32 %v2060, %v2119
    %v2125 = vmul.f32 %v2059, 0.5
    %v2126 = vtanh.pop %v2125
    %v2127 = vmul.f32 %v2126, 0.5
    %v2128 = vadd.f32 %v2127, 0.5
    %v2129 = vtanh.pop %v2059
    %v2130 = vmul.f32 %v2128, %v1992
    %2132 = vrot.lane.b32.xlu0 %v2129, 64
    %v2133 = vpop.permute.xlu0 %2132
    %v2135 = vmul.f32 %v2128, %v2133
    %2137 = vrot.lane.b32.xlu0 %v2135, 32
    %v2138 = vpop.permute.xlu0 %2137
    %v2140 = vadd.f32 %v2130, %v2138
    %v2141 = vtanh.pop %v2140
    %2143 = vrot.lane.b32.xlu0 %v2141, 64
    %v2144 = vpop.permute.xlu0 %2143
    %v2146 = vmul.f32 %v2128, %v2144
    %v2147 = vmul.f32 %v2124, 0.5
    %v2148 = vtanh.pop %v2147
    %v2149 = vmul.f32 %v2148, 0.5
    %v2150 = vadd.f32 %v2149, 0.5
    %v2151 = vtanh.pop %v2124
    %v2152 = vmul.f32 %v2150, %v1994
    %2154 = vrot.lane.b32.xlu0 %v2151, 64
    %v2155 = vpop.permute.xlu0 %2154
    %v2157 = vmul.f32 %v2150, %v2155
    %2159 = vrot.lane.b32.xlu0 %v2157, 32
    %v2160 = vpop.permute.xlu0 %2159
    %v2162 = vadd.f32 %v2152, %v2160
    %v2163 = vtanh.pop %v2162
    %2165 = vrot.lane.b32.xlu0 %v2163, 64
    %v2166 = vpop.permute.xlu0 %2165
    %v2168 = vmul.f32 %v2150, %v2166
    %v2169 = vsel %vm328, %v2146, 0.0
    %v2170 = vsel %vm322, %v2168, 0.0
    %v2173 = vunpack.c.l.s4 1966171168
    %v2174 = vunpack.c.0.s8 %v2173
    %v2175 = vlaneseq
    %v2176 = vshrl.u32 %v2175, 7
    %v2177 = vsub.s32 %v2174, %v2176
    %v2178 = vrot.slane %v2169, %v2177
    %v2179 = vcombine.high %v2178, %v2178
    %v2181 = vunpack.c.l.s4 1966171168
    %v2182 = vunpack.c.0.s8 %v2181
    %v2183 = vlaneseq
    %v2184 = vshrl.u32 %v2183, 7
    %v2185 = vsub.s32 %v2182, %v2184
    %v2186 = vrot.slane %v2178, %v2185
    %v2188 = vunpack.c.l.s4 1966171168
    %v2189 = vunpack.c.0.s8 %v2188
    %v2190 = vlaneseq
    %v2191 = vshrl.u32 %v2190, 7
    %v2192 = vsub.s32 %v2189, %v2191
    %v2193 = vrot.slane %v2179, %v2192
    %v2194 = vlaneseq
    %v2195 = vshrl.u32 %v2194, 7
    %v2196 = vsub.s32 0, %v2195
    %v2197 = vrot.slane %v2186, %v2196
    %v2198 = vlaneseq
    %v2199 = vshrl.u32 %v2198, 7
    %v2200 = vsub.s32 0, %v2199
    %v2201 = vrot.slane %v2193, %v2200
    %2202 = vrot.lane.b32.xlu0 %v2197, 32
    %v2203 = vpop.permute.xlu0 %2202
    %2204 = vrot.lane.b32.xlu0 %v2201, 32
    %v2205 = vpop.permute.xlu0 %2204
    %2208 = vst.msk [vmem:[#allocation4 + $0x7] sm:$0x1] %vm367, %v2203
    %2209 = vst.msk [vmem:[#allocation4 + $0xf] sm:$0x1] %vm367, %v2205
    %v2212 = vunpack.c.l.s4 1966171168
    %v2213 = vunpack.c.0.s8 %v2212
    %v2214 = vlaneseq
    %v2215 = vshrl.u32 %v2214, 7
    %v2216 = vsub.s32 %v2213, %v2215
    %v2217 = vrot.slane %v2170, %v2216
    %v2218 = vcombine.high %v2217, %v2217
    %v2220 = vunpack.c.l.s4 1966171168
    %v2221 = vunpack.c.0.s8 %v2220
    %v2222 = vlaneseq
    %v2223 = vshrl.u32 %v2222, 7
    %v2224 = vsub.s32 %v2221, %v2223
    %v2225 = vrot.slane %v2217, %v2224
    %v2227 = vunpack.c.l.s4 1966171168
    %v2228 = vunpack.c.0.s8 %v2227
    %v2229 = vlaneseq
    %v2230 = vshrl.u32 %v2229, 7
    %v2231 = vsub.s32 %v2228, %v2230
    %v2232 = vrot.slane %v2218, %v2231
    %v2233 = vlaneseq
    %v2234 = vshrl.u32 %v2233, 7
    %v2235 = vsub.s32 0, %v2234
    %v2236 = vrot.slane %v2225, %v2235
    %v2237 = vlaneseq
    %v2238 = vshrl.u32 %v2237, 7
    %v2239 = vsub.s32 0, %v2238
    %v2240 = vrot.slane %v2232, %v2239
    %2241 = vrot.lane.b32.xlu0 %v2236, 32
    %v2242 = vpop.permute.xlu0 %2241
    %2243 = vrot.lane.b32.xlu0 %v2240, 32
    %v2244 = vpop.permute.xlu0 %2243
    %2247 = vst.msk [vmem:[#allocation5] sm:$0x1] %vm367, %v2242
    %2248 = vst.msk [vmem:[#allocation5 + $0x8] sm:$0x1] %vm367, %v2244
    %v2249 = vsel %vm328, %v2146, %v1991
    %v2250 = vsel %vm322, %v2168, %v1993
    %v2251 = vld [vmem:[#allocation4] sm:$0xff]
    %v2252 = vld [vmem:[#allocation4 + $0x8] sm:$0xff]
    %v2253 = vld [vmem:[#allocation5] sm:$0xff]
    %v2254 = vld [vmem:[#allocation5 + $0x8] sm:$0xff]
    %2257 = vrot.lane.b32.xlu0 %v2253, 32
    %v2258 = vpop.permute.xlu0 %2257
    %2259 = vrot.lane.b32.xlu0 %v2254, 32
    %v2260 = vpop.permute.xlu0 %2259
    %v2263 = vsel %vm169, %v2251, %v2258
    %v2264 = vsel %vm169, %v2252, %v2260
    %vm2265 = vcmask 523264
    %2266 = vst.msk [vmem:[#allocation12] sm:$0xff] %vm2265, %v2263
    %2267 = vst.msk [vmem:[#allocation12 + $0x8] sm:$0xff] %vm2265, %v2264
    %2269 = vrot.lane.b32.xlu0 %v2249, 32
    %v2270 = vpop.permute.xlu0 %2269
    %2273 = vrot.lane.b32.xlu0 %v2250, 64
    %v2274 = vpop.permute.xlu0 %2273
    %v2276 = vsel %vm169, %v2270, %v2274
    %vm2277 = vcmask 517120
    %2278 = vst.msk [vmem:[#allocation13] sm:$0x3] %vm2277, %v2276
    // Predicated region
    $region38: #{tpu_custom_call.1} parent=1 // pred_check
      _
    $region39: #{tpu_custom_call.1} parent=1 // pred_check_branch
      %2280 = sbr.rel (0) target = $region41
    $region40: #{tpu_custom_call.1} parent=1 // pred_region
      %s2282 = ssub.s32 256, 256
      %2283 = vsyncadd [#allocation8], %s2282
      %s2284 = sshll.u32 [#allocation12], 4
      %s2285 = int_to_ptr.vmem [resolvable:$true] %s2284
      %2290 = dma.vmem_to_hbm [thread:$0]  %s2285, 256, %s6, [#allocation8], 128, 128, 8
    $region41: #{tpu_custom_call.1} parent=1 // pred_fallthru
      _
    // Predicated region
    $region42: #{tpu_custom_call.1} parent=1 // pred_check
      _
    $region43: #{tpu_custom_call.1} parent=1 // pred_check_branch
      %2292 = sbr.rel (0) target = $region45
    $region44: #{tpu_custom_call.1} parent=1 // pred_region
      %s2294 = ssub.s32 32, 32
      %2295 = vsyncadd [#allocation14], %s2294
      %s2297 = sshll.u32 [#allocation13], 4
      %s2298 = int_to_ptr.vmem [resolvable:$true] %s2297
      %2300 = dma.vmem_to_hbm [thread:$0]  %s2298, 32, %s7, [#allocation14]
    $region45: #{tpu_custom_call.1} parent=1 // pred_fallthru
      _
    // Predicated region
    $region46: #{tpu_custom_call.1} parent=1 // pred_check
      _
    $region47: #{tpu_custom_call.1} parent=1 // pred_check_branch
      %2302 = sbr.rel (0) target = $region49
    $region48: #{tpu_custom_call.1} parent=1 // pred_region
      %2303 = dma.done [#allocation8], 256
    $region49: #{tpu_custom_call.1} parent=1 // pred_fallthru
      _
    // Predicated region
    $region50: #{tpu_custom_call.1} parent=1 // pred_check
      _
    $region51: #{tpu_custom_call.1} parent=1 // pred_check_branch
      %2305 = sbr.rel (0) target = $region53
    $region52: #{tpu_custom_call.1} parent=1 // pred_region
      %2306 = dma.done [#allocation14], 32
    $region53: #{tpu_custom_call.1} parent=1 // pred_fallthru
      _
    %2307 = vsyncpa [#allocation7], 1
    %2308 = vsyncpa [#allocation10], 1
    %2309 = vsyncpa [#allocation8], 1
    %2310 = vsyncpa [#allocation14], 1

</llo_original>
